<compile_context>
chip_gen: v5e
topology: v5e:2x2
jax: 0.10.0
libtpu: 0.0.40
codegen_flags: <defaults>
</compile_context>

<pallas_src>
import jax
import jax.numpy as jnp
from jax import lax
from jax.experimental import pallas as pl
from jax.experimental.pallas import tpu as pltpu

EPS = 1e-5


def fold_bn(gamma, beta, mean, var):
    scale = gamma / jnp.sqrt(var + EPS)
    bias = beta - mean * scale
    return scale[None, :], bias[None, :]


def _vmem_limit(working_set_bytes):
    # double-buffered working set + headroom, clamped to a budget every
    # generation (v5e/v6e 128 MiB, v7x 64 MiB per TC) can satisfy.
    return int(min(64 << 20, max(32 << 20, working_set_bytes + (8 << 20))))


# ----------------------------------------------------------------------------
# Kernel 1: pointwise (1x1x1) conv + folded-BN bias + ReLU.
# bn1 scale folded into the (bf16) weight columns; activations cast to bf16
# in-VMEM so the MXU runs at bf16 rate; epilogue in f32; output stored bf16.
# ----------------------------------------------------------------------------
def pw_bias_relu_kernel(x_ref, w_ref, b_ref, o_ref):
    a = x_ref[...].astype(jnp.bfloat16)
    acc = jnp.dot(a, w_ref[...], preferred_element_type=jnp.float32)
    o_ref[...] = jnp.maximum(acc + b_ref[...], 0.0).astype(o_ref.dtype)


def pw_bias_relu(x2d, w_bf16, bias_f32, *, tm=1024):
    """relu(x2d @ w + bias), row-tiled; returns bf16 (M, Cout)."""
    M, K = x2d.shape
    Cout = w_bf16.shape[1]
    tm = min(tm, M)
    num_tiles = (M + tm - 1) // tm
    Mp = num_tiles * tm
    if Mp != M:
        x2d = jnp.pad(x2d, ((0, Mp - M), (0, 0)))

    working = 2 * (tm * K * 4 + K * Cout * 2 + Cout * 4 + tm * Cout * 2)
    out = pl.pallas_call(
        pw_bias_relu_kernel,
        out_shape=jax.ShapeDtypeStruct((Mp, Cout), jnp.bfloat16),
        grid_spec=pltpu.PrefetchScalarGridSpec(
            num_scalar_prefetch=0,
            grid=(num_tiles,),
            in_specs=[
                pl.BlockSpec((tm, K), lambda i: (i, 0)),      # activation tile (f32)
                pl.BlockSpec((K, Cout), lambda i: (0, 0)),    # folded weights (bf16)
                pl.BlockSpec((1, Cout), lambda i: (0, 0)),    # folded BN bias (f32)
            ],
            out_specs=pl.BlockSpec((tm, Cout), lambda i: (i, 0)),
        ),
        compiler_params=pltpu.CompilerParams(
            dimension_semantics=("parallel",),
            vmem_limit_bytes=_vmem_limit(working),
        ),
    )(x2d, w_bf16, bias_f32)
    return out[:M]


# ----------------------------------------------------------------------------
# Kernel 2: fused conv2 (3x3x3, pad=1) + bn2 + relu + conv3 (1x1x1) + bn3
#           + residual add + relu.
# Grid = (N, D), both "parallel".  All 3 depth taps are handled inside one
# body: three unpadded bf16 y1 planes (d-1, d, d+1; clamped index maps, depth
# halo via pl.when) are copied into a zero-bordered VMEM scratch, the 27 taps
# are unrolled as static slices + bf16 matmuls accumulated in f32, then the
# bn2-bias+ReLU / conv3 / bn3-bias / residual / ReLU epilogue stores once.
# ----------------------------------------------------------------------------
def conv2_conv3_kernel(xm1_ref, x0_ref, xp1_ref, w2_ref, b2_ref, w3_ref,
                       b3_ref, res_ref, o_ref, pad_ref):
    d = pl.program_id(1)
    last_d = pl.num_programs(1) - 1
    H = x0_ref.shape[2]
    W = x0_ref.shape[3]
    cmid = x0_ref.shape[4]

    # Build halo'd planes in VMEM (borders stay zero == conv2 padding=1).
    pad_ref[...] = jnp.zeros_like(pad_ref)

    @pl.when(d > 0)
    def _():
        pad_ref[0, 1:H + 1, 1:W + 1, :] = xm1_ref[0, 0]

    pad_ref[1, 1:H + 1, 1:W + 1, :] = x0_ref[0, 0]

    @pl.when(d < last_d)
    def _():
        pad_ref[2, 1:H + 1, 1:W + 1, :] = xp1_ref[0, 0]

    # conv2: 27 taps, bf16 matmuls accumulated in f32.
    acc = None
    for kd in range(3):
        plane = pad_ref[kd]                        # (H+2, W+2, cmid) bf16
        for t in range(9):
            kh, kw = divmod(t, 3)
            patch = plane[kh:kh + H, kw:kw + W, :].reshape(H * W, cmid)
            contrib = jnp.dot(patch, w2_ref[kd, t],
                              preferred_element_type=jnp.float32)
            acc = contrib if acc is None else acc + contrib

    # bn2 bias + relu (f32), conv3 (bf16 operands), bn3 bias + skip + relu.
    y2 = jnp.maximum(acc + b2_ref[...], 0.0)
    y3 = jnp.dot(y2.astype(jnp.bfloat16), w3_ref[...],
                 preferred_element_type=jnp.float32)
    y3 = y3 + b3_ref[...] + res_ref[0, 0]
    o_ref[0, 0] = jnp.maximum(y3, 0.0).astype(o_ref.dtype)


def conv2_conv3_fused(y1_5d, w2r, b2, w3m, b3, identity, *, N, D, H, W):
    width = w2r.shape[-1]
    out_ch = w3m.shape[-1]

    plane_blk = (1, 1, H, W, width)
    prev_map = lambda n, d: (n, jnp.maximum(d - 1, 0), 0, 0, 0)
    cur_map = lambda n, d: (n, d, 0, 0, 0)
    next_map = lambda n, d: (n, jnp.minimum(d + 1, D - 1), 0, 0, 0)

    blk_bytes = (
        3 * (H * W * width * 2)          # three bf16 y1 planes
        + 27 * width * width * 2         # conv2 weights (resident)
        + width * 4 + out_ch * 4         # biases
        + width * out_ch * 2             # conv3 weights
        + 2 * (H * W * out_ch * 4)       # residual + output (f32)
    )
    scratch_bytes = 3 * (H + 2) * (W + 2) * width * 2
    working = 2 * blk_bytes + scratch_bytes

    return pl.pallas_call(
        conv2_conv3_kernel,
        out_shape=jax.ShapeDtypeStruct((N, D, H * W, out_ch), jnp.float32),
        grid_spec=pltpu.PrefetchScalarGridSpec(
            num_scalar_prefetch=0,
            grid=(N, D),
            in_specs=[
                pl.BlockSpec(plane_blk, prev_map),                    # y1[d-1]
                pl.BlockSpec(plane_blk, cur_map),                     # y1[d]
                pl.BlockSpec(plane_blk, next_map),                    # y1[d+1]
                pl.BlockSpec((3, 9, width, width),
                             lambda n, d: (0, 0, 0, 0)),              # conv2 w (resident)
                pl.BlockSpec((1, width), lambda n, d: (0, 0)),        # bn2 bias
                pl.BlockSpec((width, out_ch), lambda n, d: (0, 0)),   # conv3 w
                pl.BlockSpec((1, out_ch), lambda n, d: (0, 0)),       # bn3 bias
                pl.BlockSpec((1, 1, H * W, out_ch),
                             lambda n, d: (n, d, 0, 0)),              # residual (f32)
            ],
            out_specs=pl.BlockSpec((1, 1, H * W, out_ch),
                                   lambda n, d: (n, d, 0, 0)),
            scratch_shapes=[pltpu.VMEM((3, H + 2, W + 2, width), jnp.bfloat16)],
        ),
        compiler_params=pltpu.CompilerParams(
            dimension_semantics=("parallel", "parallel"),
            vmem_limit_bytes=_vmem_limit(working),
        ),
    )(y1_5d, y1_5d, y1_5d, w2r, b2, w3m, b3, identity)


# ----------------------------------------------------------------------------
# Bottleneck forward
# ----------------------------------------------------------------------------
@jax.jit
def bottleneck_forward(x_nchw, params):
    # x_nchw: (N, Cin, D, H, W)  (PyTorch convention)
    N, Cin, D, H, W = x_nchw.shape
    x = jnp.transpose(x_nchw, (0, 2, 3, 4, 1))              # NDHWC (f32)
    M = N * D * H * W

    w1, w2, w3 = params["w1"], params["w2"], params["w3"]
    width = w1.shape[0]
    out_ch = w3.shape[0]
    # downsample is None => identity == x, which requires inplanes == out_ch.
    assert Cin == out_ch, (
        "Bottleneck with downsample=None requires inplanes == planes*expansion")

    s1, b1 = fold_bn(*params["bn1"])
    s2, b2 = fold_bn(*params["bn2"])
    s3, b3 = fold_bn(*params["bn3"])

    # conv1 (1x1x1) + bn1 + relu    (bn1 scale folded into bf16 weight columns)
    w1m = (jnp.transpose(w1[:, :, 0, 0, 0], (1, 0)) * s1).astype(jnp.bfloat16)
    y1 = pw_bias_relu(x.reshape(M, Cin), w1m, b1)           # bf16 (M, width)
    y1_5d = y1.reshape(N, D, H, W, width)                   # free reshape

    # conv2 weights -> (kd, kh*kw, cin, cout), bn2 scale folded over cout.
    w2r = (jnp.transpose(w2, (2, 3, 4, 1, 0)) * s2) \
        .reshape(3, 9, width, width).astype(jnp.bfloat16)
    # conv3 weights with bn3 scale folded over cout.
    w3m = (jnp.transpose(w3[:, :, 0, 0, 0], (1, 0)) * s3).astype(jnp.bfloat16)

    identity = x.reshape(N, D, H * W, out_ch)               # f32 skip connection

    out = conv2_conv3_fused(y1_5d, w2r, b2, w3m, b3, identity,
                            N=N, D=D, H=H, W=W)
    out = out.reshape(N, D, H, W, out_ch)
    return jnp.transpose(out, (0, 4, 1, 2, 3))              # back to NCDHW


# ----------------------------------------------------------------------------
# Pure-JAX reference (lax.conv_general_dilated) for validation
# ----------------------------------------------------------------------------
def ref_forward(x_nchw, params):
    xc = jnp.transpose(x_nchw, (0, 2, 3, 4, 1))             # NDHWC

    def conv(x, w_oidhw, pad):
        w = jnp.transpose(w_oidhw, (2, 3, 4, 1, 0))         # DHWIO
        return lax.conv_general_dilated(
            x, w, (1, 1, 1), [(pad, pad)] * 3,
            dimension_numbers=("NDHWC", "DHWIO", "NDHWC"),
            precision=lax.Precision.HIGHEST)

    def bn(x, p):
        g, b, m, v = p
        return g * (x - m) / jnp.sqrt(v + EPS) + b

    out = jax.nn.relu(bn(conv(xc, params["w1"], 0), params["bn1"]))
    out = jax.nn.relu(bn(conv(out, params["w2"], 1), params["bn2"]))
    out = bn(conv(out, params["w3"], 0), params["bn3"])
    out = jax.nn.relu(out + xc)
    return jnp.transpose(out, (0, 4, 1, 2, 3))


# ----------------------------------------------------------------------------
if __name__ == "__main__":
    # Small Bottleneck config: inplanes == planes * expansion so downsample=None.
    N, D, H, W = 2, 8, 8, 8
    inplanes, planes = 16, 4
    width = int(planes * (64 / 64.0)) * 1                   # = 4
    out_ch = planes * 4                                     # = 16 == inplanes

    key = jax.random.PRNGKey(0)
    ks = jax.random.split(key, 16)

    x = jax.random.normal(ks[0], (N, inplanes, D, H, W), jnp.float32)

    def bn_params(k, c):
        k1, k2, k3, k4 = jax.random.split(k, 4)
        gamma = 1.0 + 0.1 * jax.random.normal(k1, (c,), jnp.float32)
        beta = 0.1 * jax.random.normal(k2, (c,), jnp.float32)
        mean = 0.1 * jax.random.normal(k3, (c,), jnp.float32)
        var = 0.5 + jnp.abs(jax.random.normal(k4, (c,), jnp.float32)) * 0.5
        return (gamma, beta, mean, var)

    params = {
        "w1": 0.1 * jax.random.normal(ks[1], (width, inplanes, 1, 1, 1), jnp.float32),
        "w2": 0.1 * jax.random.normal(ks[2], (width, width, 3, 3, 3), jnp.float32),
        "w3": 0.1 * jax.random.normal(ks[3], (out_ch, width, 1, 1, 1), jnp.float32),
        "bn1": bn_params(ks[4], width),
        "bn2": bn_params(ks[5], width),
        "bn3": bn_params(ks[6], out_ch),
    }

    out = jax.block_until_ready(bottleneck_forward(x, params))
    ref = jax.block_until_ready(ref_forward(x, params))

    assert out.shape == (N, out_ch, D, H, W)
    max_err = float(jnp.max(jnp.abs(out - ref)))
    assert jnp.allclose(out, ref, atol=2e-2, rtol=2e-2), max_err

    print("KERNEL_OK")
</pallas_src>

<mosaic_0001>
module attributes {stable_mosaic.version = 11 : i64} {
  func.func @pw_bias_relu_kernel(%arg0: i32, %arg1: memref<1024x16xf32, #tpu.memory_space<vmem>>, %arg2: memref<16x4xbf16, #tpu.memory_space<vmem>>, %arg3: memref<1x4xf32, #tpu.memory_space<vmem>>, %arg4: memref<1024x4xbf16, #tpu.memory_space<vmem>>) attributes {dimension_semantics = [#tpu.dimension_semantics<parallel>], iteration_bounds = array<i64: 1>, scalar_prefetch = 0 : i64, scratch_operands = 0 : i64, tpu.core_type = #tpu.core_type<tc>, window_params = [{transform_indices = @transform_0, window_bounds = array<i64: 1024, 16>}, {pipeline_mode = #tpu.pipeline_mode<synchronous>, transform_indices = @transform_1, window_bounds = array<i64: 16, 4>}, {pipeline_mode = #tpu.pipeline_mode<synchronous>, transform_indices = @transform_2, window_bounds = array<i64: 1, 4>}, {transform_indices = @transform_3, window_bounds = array<i64: 1024, 4>}]} {
    %c0 = arith.constant 0 : index
    %c0_0 = arith.constant 0 : index
    %0 = vector.load %arg1[%c0, %c0_0] : memref<1024x16xf32, #tpu.memory_space<vmem>>, vector<1024x16xf32>
    %1 = arith.truncf %0 : vector<1024x16xf32> to vector<1024x16xbf16>
    %c0_1 = arith.constant 0 : index
    %c0_2 = arith.constant 0 : index
    %2 = vector.load %arg2[%c0_1, %c0_2] : memref<16x4xbf16, #tpu.memory_space<vmem>>, vector<16x4xbf16>
    %cst = arith.constant dense<0.000000e+00> : vector<1024x4xf32>
    %3 = tpu.matmul %1, %2, %cst {dimension_numbers = #tpu.dot_dimension_numbers<[1], [0], [0], [1], [0, 0, 1, 1], [], []>} : vector<1024x16xbf16>, vector<16x4xbf16>, vector<1024x4xf32> -> vector<1024x4xf32>
    %c0_3 = arith.constant 0 : index
    %c0_4 = arith.constant 0 : index
    %4 = vector.load %arg3[%c0_3, %c0_4] : memref<1x4xf32, #tpu.memory_space<vmem>>, vector<1x4xf32>
    %5 = vector.broadcast %4 : vector<1x4xf32> to vector<1024x4xf32>
    %6 = arith.addf %3, %5 : vector<1024x4xf32>
    %cst_5 = arith.constant 0.000000e+00 : f32
    %7 = vector.broadcast %cst_5 : f32 to vector<1024x4xf32>
    %8 = arith.maximumf %6, %7 : vector<1024x4xf32>
    %9 = arith.truncf %8 : vector<1024x4xf32> to vector<1024x4xbf16>
    %c0_6 = arith.constant 0 : index
    %c0_7 = arith.constant 0 : index
    %10 = vector.load %arg4[%c0_6, %c0_7] : memref<1024x4xbf16, #tpu.memory_space<vmem>>, vector<1024x4xbf16>
    tpu.vector_store %arg4[%c0_6, %c0_7], %9 {strides = array<i32>} : memref<1024x4xbf16, #tpu.memory_space<vmem>>, vector<1024x4xbf16>,
    return
  }
  func.func @transform_0(%arg0: i32) -> (i32, i32) {
    %c0_i32 = arith.constant 0 : i32
    %c0_i32_0 = arith.constant 0 : i32
    return %arg0, %c0_i32 : i32, i32
  }
  func.func @transform_1(%arg0: i32) -> (i32, i32) {
    %c0_i32 = arith.constant 0 : i32
    %c0_i32_0 = arith.constant 0 : i32
    %c0_i32_1 = arith.constant 0 : i32
    return %c0_i32, %c0_i32_0 : i32, i32
  }
  func.func @transform_2(%arg0: i32) -> (i32, i32) {
    %c0_i32 = arith.constant 0 : i32
    %c0_i32_0 = arith.constant 0 : i32
    %c0_i32_1 = arith.constant 0 : i32
    return %c0_i32, %c0_i32_0 : i32, i32
  }
  func.func @transform_3(%arg0: i32) -> (i32, i32) {
    %c0_i32 = arith.constant 0 : i32
    %c0_i32_0 = arith.constant 0 : i32
    return %arg0, %c0_i32 : i32, i32
  }
}

module attributes {stable_mosaic.version = 11 : i64} {
  func.func @conv2_conv3_kernel(%arg0: i32, %arg1: i32, %arg2: memref<1x1x8x8x4xbf16, #tpu.memory_space<vmem>>, %arg3: memref<1x1x8x8x4xbf16, #tpu.memory_space<vmem>>, %arg4: memref<1x1x8x8x4xbf16, #tpu.memory_space<vmem>>, %arg5: memref<3x9x4x4xbf16, #tpu.memory_space<vmem>>, %arg6: memref<1x4xf32, #tpu.memory_space<vmem>>, %arg7: memref<4x16xbf16, #tpu.memory_space<vmem>>, %arg8: memref<1x16xf32, #tpu.memory_space<vmem>>, %arg9: memref<1x1x64x16xf32, #tpu.memory_space<vmem>>, %arg10: memref<1x1x64x16xf32, #tpu.memory_space<vmem>>, %arg11: memref<3x10x10x4xbf16, #tpu.memory_space<vmem>>) attributes {dimension_semantics = [#tpu.dimension_semantics<parallel>, #tpu.dimension_semantics<parallel>], iteration_bounds = array<i64: 2, 8>, scalar_prefetch = 0 : i64, scratch_operands = 1 : i64, tpu.core_type = #tpu.core_type<tc>, window_params = [{transform_indices = @transform_0, window_bounds = array<i64: 1, 1, 8, 8, 4>}, {transform_indices = @transform_1, window_bounds = array<i64: 1, 1, 8, 8, 4>}, {transform_indices = @transform_2, window_bounds = array<i64: 1, 1, 8, 8, 4>}, {pipeline_mode = #tpu.pipeline_mode<synchronous>, transform_indices = @transform_3, window_bounds = array<i64: 3, 9, 4, 4>}, {pipeline_mode = #tpu.pipeline_mode<synchronous>, transform_indices = @transform_4, window_bounds = array<i64: 1, 4>}, {pipeline_mode = #tpu.pipeline_mode<synchronous>, transform_indices = @transform_5, window_bounds = array<i64: 4, 16>}, {pipeline_mode = #tpu.pipeline_mode<synchronous>, transform_indices = @transform_6, window_bounds = array<i64: 1, 16>}, {transform_indices = @transform_7, window_bounds = array<i64: 1, 1, 64, 16>}, {transform_indices = @transform_8, window_bounds = array<i64: 1, 1, 64, 16>}]} {
    %cst = arith.constant 0.000000e+00 : bf16
    %0 = vector.broadcast %cst : bf16 to vector<3x10x10x4xbf16>
    %c0 = arith.constant 0 : index
    %c0_0 = arith.constant 0 : index
    %c0_1 = arith.constant 0 : index
    %c0_2 = arith.constant 0 : index
    %1 = vector.load %arg11[%c0, %c0_0, %c0_1, %c0_2] : memref<3x10x10x4xbf16, #tpu.memory_space<vmem>>, vector<3x10x10x4xbf16>
    tpu.vector_store %arg11[%c0, %c0_0, %c0_1, %c0_2], %0 {strides = array<i32>} : memref<3x10x10x4xbf16, #tpu.memory_space<vmem>>, vector<3x10x10x4xbf16>,
    %c0_i32 = arith.constant 0 : i32
    %2 = arith.cmpi sgt, %arg1, %c0_i32 : i32
    %3 = arith.extui %2 : i1 to i32
    %c0_i32_3 = arith.constant 0 : i32
    %4 = arith.cmpi ne, %3, %c0_i32_3 : i32
    scf.if %4 {
      %c0_170 = arith.constant 0 : index
      %c0_171 = arith.constant 0 : index
      %c0_172 = arith.constant 0 : index
      %c0_173 = arith.constant 0 : index
      %c0_174 = arith.constant 0 : index
      %199 = vector.load %arg2[%c0_170, %c0_171, %c0_172, %c0_173, %c0_174] : memref<1x1x8x8x4xbf16, #tpu.memory_space<vmem>>, vector<1x1x8x8x4xbf16>
      %200 = vector.shape_cast %199 : vector<1x1x8x8x4xbf16> to vector<8x8x4xbf16>
      %c0_175 = arith.constant 0 : index
      %c1_176 = arith.constant 1 : index
      %c1_177 = arith.constant 1 : index
      %c0_178 = arith.constant 0 : index
      %201 = vector.load %arg11[%c0_175, %c1_176, %c1_177, %c0_178] : memref<3x10x10x4xbf16, #tpu.memory_space<vmem>>, vector<1x8x8x4xbf16>
      %202 = vector.shape_cast %201 : vector<1x8x8x4xbf16> to vector<8x8x4xbf16>
      %203 = vector.shape_cast %200 : vector<8x8x4xbf16> to vector<1x8x8x4xbf16>
      tpu.vector_store %arg11[%c0_175, %c1_176, %c1_177, %c0_178], %203 {strides = array<i32>} : memref<3x10x10x4xbf16, #tpu.memory_space<vmem>>, vector<1x8x8x4xbf16>,
    } else {
    }
    %c0_4 = arith.constant 0 : index
    %c0_5 = arith.constant 0 : index
    %c0_6 = arith.constant 0 : index
    %c0_7 = arith.constant 0 : index
    %c0_8 = arith.constant 0 : index
    %5 = vector.load %arg3[%c0_4, %c0_5, %c0_6, %c0_7, %c0_8] : memref<1x1x8x8x4xbf16, #tpu.memory_space<vmem>>, vector<1x1x8x8x4xbf16>
    %6 = vector.shape_cast %5 : vector<1x1x8x8x4xbf16> to vector<8x8x4xbf16>
    %c1 = arith.constant 1 : index
    %c1_9 = arith.constant 1 : index
    %c1_10 = arith.constant 1 : index
    %c0_11 = arith.constant 0 : index
    %7 = vector.load %arg11[%c1, %c1_9, %c1_10, %c0_11] : memref<3x10x10x4xbf16, #tpu.memory_space<vmem>>, vector<1x8x8x4xbf16>
    %8 = vector.shape_cast %7 : vector<1x8x8x4xbf16> to vector<8x8x4xbf16>
    %9 = vector.shape_cast %6 : vector<8x8x4xbf16> to vector<1x8x8x4xbf16>
    tpu.vector_store %arg11[%c1, %c1_9, %c1_10, %c0_11], %9 {strides = array<i32>} : memref<3x10x10x4xbf16, #tpu.memory_space<vmem>>, vector<1x8x8x4xbf16>,
    %c7_i32 = arith.constant 7 : i32
    %10 = arith.cmpi slt, %arg1, %c7_i32 : i32
    %11 = arith.extui %10 : i1 to i32
    %c0_i32_12 = arith.constant 0 : i32
    %12 = arith.cmpi ne, %11, %c0_i32_12 : i32
    scf.if %12 {
      %c0_170 = arith.constant 0 : index
      %c0_171 = arith.constant 0 : index
      %c0_172 = arith.constant 0 : index
      %c0_173 = arith.constant 0 : index
      %c0_174 = arith.constant 0 : index
      %199 = vector.load %arg4[%c0_170, %c0_171, %c0_172, %c0_173, %c0_174] : memref<1x1x8x8x4xbf16, #tpu.memory_space<vmem>>, vector<1x1x8x8x4xbf16>
      %200 = vector.shape_cast %199 : vector<1x1x8x8x4xbf16> to vector<8x8x4xbf16>
      %c2_175 = arith.constant 2 : index
      %c1_176 = arith.constant 1 : index
      %c1_177 = arith.constant 1 : index
      %c0_178 = arith.constant 0 : index
      %201 = vector.load %arg11[%c2_175, %c1_176, %c1_177, %c0_178] : memref<3x10x10x4xbf16, #tpu.memory_space<vmem>>, vector<1x8x8x4xbf16>
      %202 = vector.shape_cast %201 : vector<1x8x8x4xbf16> to vector<8x8x4xbf16>
      %203 = vector.shape_cast %200 : vector<8x8x4xbf16> to vector<1x8x8x4xbf16>
      tpu.vector_store %arg11[%c2_175, %c1_176, %c1_177, %c0_178], %203 {strides = array<i32>} : memref<3x10x10x4xbf16, #tpu.memory_space<vmem>>, vector<1x8x8x4xbf16>,
    } else {
    }
    %c0_13 = arith.constant 0 : index
    %c0_14 = arith.constant 0 : index
    %c0_15 = arith.constant 0 : index
    %c0_16 = arith.constant 0 : index
    %13 = vector.load %arg11[%c0_13, %c0_14, %c0_15, %c0_16] : memref<3x10x10x4xbf16, #tpu.memory_space<vmem>>, vector<1x10x10x4xbf16>
    %14 = vector.shape_cast %13 : vector<1x10x10x4xbf16> to vector<10x10x4xbf16>
    %15 = vector.extract_strided_slice %14 {offsets = [0, 0, 0], sizes = [8, 8, 4], strides = [1, 1, 1]} : vector<10x10x4xbf16> to vector<8x8x4xbf16>
    %16 = vector.shape_cast %15 : vector<8x8x4xbf16> to vector<64x4xbf16>
    %c0_17 = arith.constant 0 : index
    %c0_18 = arith.constant 0 : index
    %c0_19 = arith.constant 0 : index
    %c0_20 = arith.constant 0 : index
    %17 = vector.load %arg5[%c0_17, %c0_18, %c0_19, %c0_20] : memref<3x9x4x4xbf16, #tpu.memory_space<vmem>>, vector<1x1x4x4xbf16>
    %18 = vector.shape_cast %17 : vector<1x1x4x4xbf16> to vector<4x4xbf16>
    %cst_21 = arith.constant dense<0.000000e+00> : vector<64x4xf32>
    %19 = tpu.matmul %16, %18, %cst_21 {dimension_numbers = #tpu.dot_dimension_numbers<[1], [0], [0], [1], [0, 0, 1, 1], [], []>} : vector<64x4xbf16>, vector<4x4xbf16>, vector<64x4xf32> -> vector<64x4xf32>
    %20 = vector.extract_strided_slice %14 {offsets = [0, 1, 0], sizes = [8, 8, 4], strides = [1, 1, 1]} : vector<10x10x4xbf16> to vector<8x8x4xbf16>
    %21 = vector.shape_cast %20 : vector<8x8x4xbf16> to vector<64x4xbf16>
    %c0_22 = arith.constant 0 : index
    %c1_23 = arith.constant 1 : index
    %c0_24 = arith.constant 0 : index
    %c0_25 = arith.constant 0 : index
    %22 = vector.load %arg5[%c0_22, %c1_23, %c0_24, %c0_25] : memref<3x9x4x4xbf16, #tpu.memory_space<vmem>>, vector<1x1x4x4xbf16>
    %23 = vector.shape_cast %22 : vector<1x1x4x4xbf16> to vector<4x4xbf16>
    %cst_26 = arith.constant dense<0.000000e+00> : vector<64x4xf32>
    %24 = tpu.matmul %21, %23, %cst_26 {dimension_numbers = #tpu.dot_dimension_numbers<[1], [0], [0], [1], [0, 0, 1, 1], [], []>} : vector<64x4xbf16>, vector<4x4xbf16>, vector<64x4xf32> -> vector<64x4xf32>
    %25 = arith.addf %19, %24 : vector<64x4xf32>
    %26 = vector.extract_strided_slice %14 {offsets = [0, 2, 0], sizes = [8, 8, 4], strides = [1, 1, 1]} : vector<10x10x4xbf16> to vector<8x8x4xbf16>
    %27 = vector.shape_cast %26 : vector<8x8x4xbf16> to vector<64x4xbf16>
    %c0_27 = arith.constant 0 : index
    %c2 = arith.constant 2 : index
    %c0_28 = arith.constant 0 : index
    %c0_29 = arith.constant 0 : index
    %28 = vector.load %arg5[%c0_27, %c2, %c0_28, %c0_29] : memref<3x9x4x4xbf16, #tpu.memory_space<vmem>>, vector<1x1x4x4xbf16>
    %29 = vector.shape_cast %28 : vector<1x1x4x4xbf16> to vector<4x4xbf16>
    %cst_30 = arith.constant dense<0.000000e+00> : vector<64x4xf32>
    %30 = tpu.matmul %27, %29, %cst_30 {dimension_numbers = #tpu.dot_dimension_numbers<[1], [0], [0], [1], [0, 0, 1, 1], [], []>} : vector<64x4xbf16>, vector<4x4xbf16>, vector<64x4xf32> -> vector<64x4xf32>
    %31 = arith.addf %25, %30 : vector<64x4xf32>
    %32 = vector.extract_strided_slice %14 {offsets = [1, 0, 0], sizes = [8, 8, 4], strides = [1, 1, 1]} : vector<10x10x4xbf16> to vector<8x8x4xbf16>
    %33 = vector.shape_cast %32 : vector<8x8x4xbf16> to vector<64x4xbf16>
    %c0_31 = arith.constant 0 : index
    %c3 = arith.constant 3 : index
    %c0_32 = arith.constant 0 : index
    %c0_33 = arith.constant 0 : index
    %34 = vector.load %arg5[%c0_31, %c3, %c0_32, %c0_33] : memref<3x9x4x4xbf16, #tpu.memory_space<vmem>>, vector<1x1x4x4xbf16>
    %35 = vector.shape_cast %34 : vector<1x1x4x4xbf16> to vector<4x4xbf16>
    %cst_34 = arith.constant dense<0.000000e+00> : vector<64x4xf32>
    %36 = tpu.matmul %33, %35, %cst_34 {dimension_numbers = #tpu.dot_dimension_numbers<[1], [0], [0], [1], [0, 0, 1, 1], [], []>} : vector<64x4xbf16>, vector<4x4xbf16>, vector<64x4xf32> -> vector<64x4xf32>
    %37 = arith.addf %31, %36 : vector<64x4xf32>
    %38 = vector.extract_strided_slice %14 {offsets = [1, 1, 0], sizes = [8, 8, 4], strides = [1, 1, 1]} : vector<10x10x4xbf16> to vector<8x8x4xbf16>
    %39 = vector.shape_cast %38 : vector<8x8x4xbf16> to vector<64x4xbf16>
    %c0_35 = arith.constant 0 : index
    %c4 = arith.constant 4 : index
    %c0_36 = arith.constant 0 : index
    %c0_37 = arith.constant 0 : index
    %40 = vector.load %arg5[%c0_35, %c4, %c0_36, %c0_37] : memref<3x9x4x4xbf16, #tpu.memory_space<vmem>>, vector<1x1x4x4xbf16>
    %41 = vector.shape_cast %40 : vector<1x1x4x4xbf16> to vector<4x4xbf16>
    %cst_38 = arith.constant dense<0.000000e+00> : vector<64x4xf32>
    %42 = tpu.matmul %39, %41, %cst_38 {dimension_numbers = #tpu.dot_dimension_numbers<[1], [0], [0], [1], [0, 0, 1, 1], [], []>} : vector<64x4xbf16>, vector<4x4xbf16>, vector<64x4xf32> -> vector<64x4xf32>
    %43 = arith.addf %37, %42 : vector<64x4xf32>
    %44 = vector.extract_strided_slice %14 {offsets = [1, 2, 0], sizes = [8, 8, 4], strides = [1, 1, 1]} : vector<10x10x4xbf16> to vector<8x8x4xbf16>
    %45 = vector.shape_cast %44 : vector<8x8x4xbf16> to vector<64x4xbf16>
    %c0_39 = arith.constant 0 : index
    %c5 = arith.constant 5 : index
    %c0_40 = arith.constant 0 : index
    %c0_41 = arith.constant 0 : index
    %46 = vector.load %arg5[%c0_39, %c5, %c0_40, %c0_41] : memref<3x9x4x4xbf16, #tpu.memory_space<vmem>>, vector<1x1x4x4xbf16>
    %47 = vector.shape_cast %46 : vector<1x1x4x4xbf16> to vector<4x4xbf16>
    %cst_42 = arith.constant dense<0.000000e+00> : vector<64x4xf32>
    %48 = tpu.matmul %45, %47, %cst_42 {dimension_numbers = #tpu.dot_dimension_numbers<[1], [0], [0], [1], [0, 0, 1, 1], [], []>} : vector<64x4xbf16>, vector<4x4xbf16>, vector<64x4xf32> -> vector<64x4xf32>
    %49 = arith.addf %43, %48 : vector<64x4xf32>
    %50 = vector.extract_strided_slice %14 {offsets = [2, 0, 0], sizes = [8, 8, 4], strides = [1, 1, 1]} : vector<10x10x4xbf16> to vector<8x8x4xbf16>
    %51 = vector.shape_cast %50 : vector<8x8x4xbf16> to vector<64x4xbf16>
    %c0_43 = arith.constant 0 : index
    %c6 = arith.constant 6 : index
    %c0_44 = arith.constant 0 : index
    %c0_45 = arith.constant 0 : index
    %52 = vector.load %arg5[%c0_43, %c6, %c0_44, %c0_45] : memref<3x9x4x4xbf16, #tpu.memory_space<vmem>>, vector<1x1x4x4xbf16>
    %53 = vector.shape_cast %52 : vector<1x1x4x4xbf16> to vector<4x4xbf16>
    %cst_46 = arith.constant dense<0.000000e+00> : vector<64x4xf32>
    %54 = tpu.matmul %51, %53, %cst_46 {dimension_numbers = #tpu.dot_dimension_numbers<[1], [0], [0], [1], [0, 0, 1, 1], [], []>} : vector<64x4xbf16>, vector<4x4xbf16>, vector<64x4xf32> -> vector<64x4xf32>
    %55 = arith.addf %49, %54 : vector<64x4xf32>
    %56 = vector.extract_strided_slice %14 {offsets = [2, 1, 0], sizes = [8, 8, 4], strides = [1, 1, 1]} : vector<10x10x4xbf16> to vector<8x8x4xbf16>
    %57 = vector.shape_cast %56 : vector<8x8x4xbf16> to vector<64x4xbf16>
    %c0_47 = arith.constant 0 : index
    %c7 = arith.constant 7 : index
    %c0_48 = arith.constant 0 : index
    %c0_49 = arith.constant 0 : index
    %58 = vector.load %arg5[%c0_47, %c7, %c0_48, %c0_49] : memref<3x9x4x4xbf16, #tpu.memory_space<vmem>>, vector<1x1x4x4xbf16>
    %59 = vector.shape_cast %58 : vector<1x1x4x4xbf16> to vector<4x4xbf16>
    %cst_50 = arith.constant dense<0.000000e+00> : vector<64x4xf32>
    %60 = tpu.matmul %57, %59, %cst_50 {dimension_numbers = #tpu.dot_dimension_numbers<[1], [0], [0], [1], [0, 0, 1, 1], [], []>} : vector<64x4xbf16>, vector<4x4xbf16>, vector<64x4xf32> -> vector<64x4xf32>
    %61 = arith.addf %55, %60 : vector<64x4xf32>
    %62 = vector.extract_strided_slice %14 {offsets = [2, 2, 0], sizes = [8, 8, 4], strides = [1, 1, 1]} : vector<10x10x4xbf16> to vector<8x8x4xbf16>
    %63 = vector.shape_cast %62 : vector<8x8x4xbf16> to vector<64x4xbf16>
    %c0_51 = arith.constant 0 : index
    %c8 = arith.constant 8 : index
    %c0_52 = arith.constant 0 : index
    %c0_53 = arith.constant 0 : index
    %64 = vector.load %arg5[%c0_51, %c8, %c0_52, %c0_53] : memref<3x9x4x4xbf16, #tpu.memory_space<vmem>>, vector<1x1x4x4xbf16>
    %65 = vector.shape_cast %64 : vector<1x1x4x4xbf16> to vector<4x4xbf16>
    %cst_54 = arith.constant dense<0.000000e+00> : vector<64x4xf32>
    %66 = tpu.matmul %63, %65, %cst_54 {dimension_numbers = #tpu.dot_dimension_numbers<[1], [0], [0], [1], [0, 0, 1, 1], [], []>} : vector<64x4xbf16>, vector<4x4xbf16>, vector<64x4xf32> -> vector<64x4xf32>
    %67 = arith.addf %61, %66 : vector<64x4xf32>
    %c1_55 = arith.constant 1 : index
    %c0_56 = arith.constant 0 : index
    %c0_57 = arith.constant 0 : index
    %c0_58 = arith.constant 0 : index
    %68 = vector.load %arg11[%c1_55, %c0_56, %c0_57, %c0_58] : memref<3x10x10x4xbf16, #tpu.memory_space<vmem>>, vector<1x10x10x4xbf16>
    %69 = vector.shape_cast %68 : vector<1x10x10x4xbf16> to vector<10x10x4xbf16>
    %70 = vector.extract_strided_slice %69 {offsets = [0, 0, 0], sizes = [8, 8, 4], strides = [1, 1, 1]} : vector<10x10x4xbf16> to vector<8x8x4xbf16>
    %71 = vector.shape_cast %70 : vector<8x8x4xbf16> to vector<64x4xbf16>
    %c1_59 = arith.constant 1 : index
    %c0_60 = arith.constant 0 : index
    %c0_61 = arith.constant 0 : index
    %c0_62 = arith.constant 0 : index
    %72 = vector.load %arg5[%c1_59, %c0_60, %c0_61, %c0_62] : memref<3x9x4x4xbf16, #tpu.memory_space<vmem>>, vector<1x1x4x4xbf16>
    %73 = vector.shape_cast %72 : vector<1x1x4x4xbf16> to vector<4x4xbf16>
    %cst_63 = arith.constant dense<0.000000e+00> : vector<64x4xf32>
    %74 = tpu.matmul %71, %73, %cst_63 {dimension_numbers = #tpu.dot_dimension_numbers<[1], [0], [0], [1], [0, 0, 1, 1], [], []>} : vector<64x4xbf16>, vector<4x4xbf16>, vector<64x4xf32> -> vector<64x4xf32>
    %75 = arith.addf %67, %74 : vector<64x4xf32>
    %76 = vector.extract_strided_slice %69 {offsets = [0, 1, 0], sizes = [8, 8, 4], strides = [1, 1, 1]} : vector<10x10x4xbf16> to vector<8x8x4xbf16>
    %77 = vector.shape_cast %76 : vector<8x8x4xbf16> to vector<64x4xbf16>
    %c1_64 = arith.constant 1 : index
    %c1_65 = arith.constant 1 : index
    %c0_66 = arith.constant 0 : index
    %c0_67 = arith.constant 0 : index
    %78 = vector.load %arg5[%c1_64, %c1_65, %c0_66, %c0_67] : memref<3x9x4x4xbf16, #tpu.memory_space<vmem>>, vector<1x1x4x4xbf16>
    %79 = vector.shape_cast %78 : vector<1x1x4x4xbf16> to vector<4x4xbf16>
    %cst_68 = arith.constant dense<0.000000e+00> : vector<64x4xf32>
    %80 = tpu.matmul %77, %79, %cst_68 {dimension_numbers = #tpu.dot_dimension_numbers<[1], [0], [0], [1], [0, 0, 1, 1], [], []>} : vector<64x4xbf16>, vector<4x4xbf16>, vector<64x4xf32> -> vector<64x4xf32>
    %81 = arith.addf %75, %80 : vector<64x4xf32>
    %82 = vector.extract_strided_slice %69 {offsets = [0, 2, 0], sizes = [8, 8, 4], strides = [1, 1, 1]} : vector<10x10x4xbf16> to vector<8x8x4xbf16>
    %83 = vector.shape_cast %82 : vector<8x8x4xbf16> to vector<64x4xbf16>
    %c1_69 = arith.constant 1 : index
    %c2_70 = arith.constant 2 : index
    %c0_71 = arith.constant 0 : index
    %c0_72 = arith.constant 0 : index
    %84 = vector.load %arg5[%c1_69, %c2_70, %c0_71, %c0_72] : memref<3x9x4x4xbf16, #tpu.memory_space<vmem>>, vector<1x1x4x4xbf16>
    %85 = vector.shape_cast %84 : vector<1x1x4x4xbf16> to vector<4x4xbf16>
    %cst_73 = arith.constant dense<0.000000e+00> : vector<64x4xf32>
    %86 = tpu.matmul %83, %85, %cst_73 {dimension_numbers = #tpu.dot_dimension_numbers<[1], [0], [0], [1], [0, 0, 1, 1], [], []>} : vector<64x4xbf16>, vector<4x4xbf16>, vector<64x4xf32> -> vector<64x4xf32>
    %87 = arith.addf %81, %86 : vector<64x4xf32>
    %88 = vector.extract_strided_slice %69 {offsets = [1, 0, 0], sizes = [8, 8, 4], strides = [1, 1, 1]} : vector<10x10x4xbf16> to vector<8x8x4xbf16>
    %89 = vector.shape_cast %88 : vector<8x8x4xbf16> to vector<64x4xbf16>
    %c1_74 = arith.constant 1 : index
    %c3_75 = arith.constant 3 : index
    %c0_76 = arith.constant 0 : index
    %c0_77 = arith.constant 0 : index
    %90 = vector.load %arg5[%c1_74, %c3_75, %c0_76, %c0_77] : memref<3x9x4x4xbf16, #tpu.memory_space<vmem>>, vector<1x1x4x4xbf16>
    %91 = vector.shape_cast %90 : vector<1x1x4x4xbf16> to vector<4x4xbf16>
    %cst_78 = arith.constant dense<0.000000e+00> : vector<64x4xf32>
    %92 = tpu.matmul %89, %91, %cst_78 {dimension_numbers = #tpu.dot_dimension_numbers<[1], [0], [0], [1], [0, 0, 1, 1], [], []>} : vector<64x4xbf16>, vector<4x4xbf16>, vector<64x4xf32> -> vector<64x4xf32>
    %93 = arith.addf %87, %92 : vector<64x4xf32>
    %94 = vector.extract_strided_slice %69 {offsets = [1, 1, 0], sizes = [8, 8, 4], strides = [1, 1, 1]} : vector<10x10x4xbf16> to vector<8x8x4xbf16>
    %95 = vector.shape_cast %94 : vector<8x8x4xbf16> to vector<64x4xbf16>
    %c1_79 = arith.constant 1 : index
    %c4_80 = arith.constant 4 : index
    %c0_81 = arith.constant 0 : index
    %c0_82 = arith.constant 0 : index
    %96 = vector.load %arg5[%c1_79, %c4_80, %c0_81, %c0_82] : memref<3x9x4x4xbf16, #tpu.memory_space<vmem>>, vector<1x1x4x4xbf16>
    %97 = vector.shape_cast %96 : vector<1x1x4x4xbf16> to vector<4x4xbf16>
    %cst_83 = arith.constant dense<0.000000e+00> : vector<64x4xf32>
    %98 = tpu.matmul %95, %97, %cst_83 {dimension_numbers = #tpu.dot_dimension_numbers<[1], [0], [0], [1], [0, 0, 1, 1], [], []>} : vector<64x4xbf16>, vector<4x4xbf16>, vector<64x4xf32> -> vector<64x4xf32>
    %99 = arith.addf %93, %98 : vector<64x4xf32>
    %100 = vector.extract_strided_slice %69 {offsets = [1, 2, 0], sizes = [8, 8, 4], strides = [1, 1, 1]} : vector<10x10x4xbf16> to vector<8x8x4xbf16>
    %101 = vector.shape_cast %100 : vector<8x8x4xbf16> to vector<64x4xbf16>
    %c1_84 = arith.constant 1 : index
    %c5_85 = arith.constant 5 : index
    %c0_86 = arith.constant 0 : index
    %c0_87 = arith.constant 0 : index
    %102 = vector.load %arg5[%c1_84, %c5_85, %c0_86, %c0_87] : memref<3x9x4x4xbf16, #tpu.memory_space<vmem>>, vector<1x1x4x4xbf16>
    %103 = vector.shape_cast %102 : vector<1x1x4x4xbf16> to vector<4x4xbf16>
    %cst_88 = arith.constant dense<0.000000e+00> : vector<64x4xf32>
    %104 = tpu.matmul %101, %103, %cst_88 {dimension_numbers = #tpu.dot_dimension_numbers<[1], [0], [0], [1], [0, 0, 1, 1], [], []>} : vector<64x4xbf16>, vector<4x4xbf16>, vector<64x4xf32> -> vector<64x4xf32>
    %105 = arith.addf %99, %104 : vector<64x4xf32>
    %106 = vector.extract_strided_slice %69 {offsets = [2, 0, 0], sizes = [8, 8, 4], strides = [1, 1, 1]} : vector<10x10x4xbf16> to vector<8x8x4xbf16>
    %107 = vector.shape_cast %106 : vector<8x8x4xbf16> to vector<64x4xbf16>
    %c1_89 = arith.constant 1 : index
    %c6_90 = arith.constant 6 : index
    %c0_91 = arith.constant 0 : index
    %c0_92 = arith.constant 0 : index
    %108 = vector.load %arg5[%c1_89, %c6_90, %c0_91, %c0_92] : memref<3x9x4x4xbf16, #tpu.memory_space<vmem>>, vector<1x1x4x4xbf16>
    %109 = vector.shape_cast %108 : vector<1x1x4x4xbf16> to vector<4x4xbf16>
    %cst_93 = arith.constant dense<0.000000e+00> : vector<64x4xf32>
    %110 = tpu.matmul %107, %109, %cst_93 {dimension_numbers = #tpu.dot_dimension_numbers<[1], [0], [0], [1], [0, 0, 1, 1], [], []>} : vector<64x4xbf16>, vector<4x4xbf16>, vector<64x4xf32> -> vector<64x4xf32>
    %111 = arith.addf %105, %110 : vector<64x4xf32>
    %112 = vector.extract_strided_slice %69 {offsets = [2, 1, 0], sizes = [8, 8, 4], strides = [1, 1, 1]} : vector<10x10x4xbf16> to vector<8x8x4xbf16>
    %113 = vector.shape_cast %112 : vector<8x8x4xbf16> to vector<64x4xbf16>
    %c1_94 = arith.constant 1 : index
    %c7_95 = arith.constant 7 : index
    %c0_96 = arith.constant 0 : index
    %c0_97 = arith.constant 0 : index
    %114 = vector.load %arg5[%c1_94, %c7_95, %c0_96, %c0_97] : memref<3x9x4x4xbf16, #tpu.memory_space<vmem>>, vector<1x1x4x4xbf16>
    %115 = vector.shape_cast %114 : vector<1x1x4x4xbf16> to vector<4x4xbf16>
    %cst_98 = arith.constant dense<0.000000e+00> : vector<64x4xf32>
    %116 = tpu.matmul %113, %115, %cst_98 {dimension_numbers = #tpu.dot_dimension_numbers<[1], [0], [0], [1], [0, 0, 1, 1], [], []>} : vector<64x4xbf16>, vector<4x4xbf16>, vector<64x4xf32> -> vector<64x4xf32>
    %117 = arith.addf %111, %116 : vector<64x4xf32>
    %118 = vector.extract_strided_slice %69 {offsets = [2, 2, 0], sizes = [8, 8, 4], strides = [1, 1, 1]} : vector<10x10x4xbf16> to vector<8x8x4xbf16>
    %119 = vector.shape_cast %118 : vector<8x8x4xbf16> to vector<64x4xbf16>
    %c1_99 = arith.constant 1 : index
    %c8_100 = arith.constant 8 : index
    %c0_101 = arith.constant 0 : index
    %c0_102 = arith.constant 0 : index
    %120 = vector.load %arg5[%c1_99, %c8_100, %c0_101, %c0_102] : memref<3x9x4x4xbf16, #tpu.memory_space<vmem>>, vector<1x1x4x4xbf16>
    %121 = vector.shape_cast %120 : vector<1x1x4x4xbf16> to vector<4x4xbf16>
    %cst_103 = arith.constant dense<0.000000e+00> : vector<64x4xf32>
    %122 = tpu.matmul %119, %121, %cst_103 {dimension_numbers = #tpu.dot_dimension_numbers<[1], [0], [0], [1], [0, 0, 1, 1], [], []>} : vector<64x4xbf16>, vector<4x4xbf16>, vector<64x4xf32> -> vector<64x4xf32>
    %123 = arith.addf %117, %122 : vector<64x4xf32>
    %c2_104 = arith.constant 2 : index
    %c0_105 = arith.constant 0 : index
    %c0_106 = arith.constant 0 : index
    %c0_107 = arith.constant 0 : index
    %124 = vector.load %arg11[%c2_104, %c0_105, %c0_106, %c0_107] : memref<3x10x10x4xbf16, #tpu.memory_space<vmem>>, vector<1x10x10x4xbf16>
    %125 = vector.shape_cast %124 : vector<1x10x10x4xbf16> to vector<10x10x4xbf16>
    %126 = vector.extract_strided_slice %125 {offsets = [0, 0, 0], sizes = [8, 8, 4], strides = [1, 1, 1]} : vector<10x10x4xbf16> to vector<8x8x4xbf16>
    %127 = vector.shape_cast %126 : vector<8x8x4xbf16> to vector<64x4xbf16>
    %c2_108 = arith.constant 2 : index
    %c0_109 = arith.constant 0 : index
    %c0_110 = arith.constant 0 : index
    %c0_111 = arith.constant 0 : index
    %128 = vector.load %arg5[%c2_108, %c0_109, %c0_110, %c0_111] : memref<3x9x4x4xbf16, #tpu.memory_space<vmem>>, vector<1x1x4x4xbf16>
    %129 = vector.shape_cast %128 : vector<1x1x4x4xbf16> to vector<4x4xbf16>
    %cst_112 = arith.constant dense<0.000000e+00> : vector<64x4xf32>
    %130 = tpu.matmul %127, %129, %cst_112 {dimension_numbers = #tpu.dot_dimension_numbers<[1], [0], [0], [1], [0, 0, 1, 1], [], []>} : vector<64x4xbf16>, vector<4x4xbf16>, vector<64x4xf32> -> vector<64x4xf32>
    %131 = arith.addf %123, %130 : vector<64x4xf32>
    %132 = vector.extract_strided_slice %125 {offsets = [0, 1, 0], sizes = [8, 8, 4], strides = [1, 1, 1]} : vector<10x10x4xbf16> to vector<8x8x4xbf16>
    %133 = vector.shape_cast %132 : vector<8x8x4xbf16> to vector<64x4xbf16>
    %c2_113 = arith.constant 2 : index
    %c1_114 = arith.constant 1 : index
    %c0_115 = arith.constant 0 : index
    %c0_116 = arith.constant 0 : index
    %134 = vector.load %arg5[%c2_113, %c1_114, %c0_115, %c0_116] : memref<3x9x4x4xbf16, #tpu.memory_space<vmem>>, vector<1x1x4x4xbf16>
    %135 = vector.shape_cast %134 : vector<1x1x4x4xbf16> to vector<4x4xbf16>
    %cst_117 = arith.constant dense<0.000000e+00> : vector<64x4xf32>
    %136 = tpu.matmul %133, %135, %cst_117 {dimension_numbers = #tpu.dot_dimension_numbers<[1], [0], [0], [1], [0, 0, 1, 1], [], []>} : vector<64x4xbf16>, vector<4x4xbf16>, vector<64x4xf32> -> vector<64x4xf32>
    %137 = arith.addf %131, %136 : vector<64x4xf32>
    %138 = vector.extract_strided_slice %125 {offsets = [0, 2, 0], sizes = [8, 8, 4], strides = [1, 1, 1]} : vector<10x10x4xbf16> to vector<8x8x4xbf16>
    %139 = vector.shape_cast %138 : vector<8x8x4xbf16> to vector<64x4xbf16>
    %c2_118 = arith.constant 2 : index
    %c2_119 = arith.constant 2 : index
    %c0_120 = arith.constant 0 : index
    %c0_121 = arith.constant 0 : index
    %140 = vector.load %arg5[%c2_118, %c2_119, %c0_120, %c0_121] : memref<3x9x4x4xbf16, #tpu.memory_space<vmem>>, vector<1x1x4x4xbf16>
    %141 = vector.shape_cast %140 : vector<1x1x4x4xbf16> to vector<4x4xbf16>
    %cst_122 = arith.constant dense<0.000000e+00> : vector<64x4xf32>
    %142 = tpu.matmul %139, %141, %cst_122 {dimension_numbers = #tpu.dot_dimension_numbers<[1], [0], [0], [1], [0, 0, 1, 1], [], []>} : vector<64x4xbf16>, vector<4x4xbf16>, vector<64x4xf32> -> vector<64x4xf32>
    %143 = arith.addf %137, %142 : vector<64x4xf32>
    %144 = vector.extract_strided_slice %125 {offsets = [1, 0, 0], sizes = [8, 8, 4], strides = [1, 1, 1]} : vector<10x10x4xbf16> to vector<8x8x4xbf16>
    %145 = vector.shape_cast %144 : vector<8x8x4xbf16> to vector<64x4xbf16>
    %c2_123 = arith.constant 2 : index
    %c3_124 = arith.constant 3 : index
    %c0_125 = arith.constant 0 : index
    %c0_126 = arith.constant 0 : index
    %146 = vector.load %arg5[%c2_123, %c3_124, %c0_125, %c0_126] : memref<3x9x4x4xbf16, #tpu.memory_space<vmem>>, vector<1x1x4x4xbf16>
    %147 = vector.shape_cast %146 : vector<1x1x4x4xbf16> to vector<4x4xbf16>
    %cst_127 = arith.constant dense<0.000000e+00> : vector<64x4xf32>
    %148 = tpu.matmul %145, %147, %cst_127 {dimension_numbers = #tpu.dot_dimension_numbers<[1], [0], [0], [1], [0, 0, 1, 1], [], []>} : vector<64x4xbf16>, vector<4x4xbf16>, vector<64x4xf32> -> vector<64x4xf32>
    %149 = arith.addf %143, %148 : vector<64x4xf32>
    %150 = vector.extract_strided_slice %125 {offsets = [1, 1, 0], sizes = [8, 8, 4], strides = [1, 1, 1]} : vector<10x10x4xbf16> to vector<8x8x4xbf16>
    %151 = vector.shape_cast %150 : vector<8x8x4xbf16> to vector<64x4xbf16>
    %c2_128 = arith.constant 2 : index
    %c4_129 = arith.constant 4 : index
    %c0_130 = arith.constant 0 : index
    %c0_131 = arith.constant 0 : index
    %152 = vector.load %arg5[%c2_128, %c4_129, %c0_130, %c0_131] : memref<3x9x4x4xbf16, #tpu.memory_space<vmem>>, vector<1x1x4x4xbf16>
    %153 = vector.shape_cast %152 : vector<1x1x4x4xbf16> to vector<4x4xbf16>
    %cst_132 = arith.constant dense<0.000000e+00> : vector<64x4xf32>
    %154 = tpu.matmul %151, %153, %cst_132 {dimension_numbers = #tpu.dot_dimension_numbers<[1], [0], [0], [1], [0, 0, 1, 1], [], []>} : vector<64x4xbf16>, vector<4x4xbf16>, vector<64x4xf32> -> vector<64x4xf32>
    %155 = arith.addf %149, %154 : vector<64x4xf32>
    %156 = vector.extract_strided_slice %125 {offsets = [1, 2, 0], sizes = [8, 8, 4], strides = [1, 1, 1]} : vector<10x10x4xbf16> to vector<8x8x4xbf16>
    %157 = vector.shape_cast %156 : vector<8x8x4xbf16> to vector<64x4xbf16>
    %c2_133 = arith.constant 2 : index
    %c5_134 = arith.constant 5 : index
    %c0_135 = arith.constant 0 : index
    %c0_136 = arith.constant 0 : index
    %158 = vector.load %arg5[%c2_133, %c5_134, %c0_135, %c0_136] : memref<3x9x4x4xbf16, #tpu.memory_space<vmem>>, vector<1x1x4x4xbf16>
    %159 = vector.shape_cast %158 : vector<1x1x4x4xbf16> to vector<4x4xbf16>
    %cst_137 = arith.constant dense<0.000000e+00> : vector<64x4xf32>
    %160 = tpu.matmul %157, %159, %cst_137 {dimension_numbers = #tpu.dot_dimension_numbers<[1], [0], [0], [1], [0, 0, 1, 1], [], []>} : vector<64x4xbf16>, vector<4x4xbf16>, vector<64x4xf32> -> vector<64x4xf32>
    %161 = arith.addf %155, %160 : vector<64x4xf32>
    %162 = vector.extract_strided_slice %125 {offsets = [2, 0, 0], sizes = [8, 8, 4], strides = [1, 1, 1]} : vector<10x10x4xbf16> to vector<8x8x4xbf16>
    %163 = vector.shape_cast %162 : vector<8x8x4xbf16> to vector<64x4xbf16>
    %c2_138 = arith.constant 2 : index
    %c6_139 = arith.constant 6 : index
    %c0_140 = arith.constant 0 : index
    %c0_141 = arith.constant 0 : index
    %164 = vector.load %arg5[%c2_138, %c6_139, %c0_140, %c0_141] : memref<3x9x4x4xbf16, #tpu.memory_space<vmem>>, vector<1x1x4x4xbf16>
    %165 = vector.shape_cast %164 : vector<1x1x4x4xbf16> to vector<4x4xbf16>
    %cst_142 = arith.constant dense<0.000000e+00> : vector<64x4xf32>
    %166 = tpu.matmul %163, %165, %cst_142 {dimension_numbers = #tpu.dot_dimension_numbers<[1], [0], [0], [1], [0, 0, 1, 1], [], []>} : vector<64x4xbf16>, vector<4x4xbf16>, vector<64x4xf32> -> vector<64x4xf32>
    %167 = arith.addf %161, %166 : vector<64x4xf32>
    %168 = vector.extract_strided_slice %125 {offsets = [2, 1, 0], sizes = [8, 8, 4], strides = [1, 1, 1]} : vector<10x10x4xbf16> to vector<8x8x4xbf16>
    %169 = vector.shape_cast %168 : vector<8x8x4xbf16> to vector<64x4xbf16>
    %c2_143 = arith.constant 2 : index
    %c7_144 = arith.constant 7 : index
    %c0_145 = arith.constant 0 : index
    %c0_146 = arith.constant 0 : index
    %170 = vector.load %arg5[%c2_143, %c7_144, %c0_145, %c0_146] : memref<3x9x4x4xbf16, #tpu.memory_space<vmem>>, vector<1x1x4x4xbf16>
    %171 = vector.shape_cast %170 : vector<1x1x4x4xbf16> to vector<4x4xbf16>
    %cst_147 = arith.constant dense<0.000000e+00> : vector<64x4xf32>
    %172 = tpu.matmul %169, %171, %cst_147 {dimension_numbers = #tpu.dot_dimension_numbers<[1], [0], [0], [1], [0, 0, 1, 1], [], []>} : vector<64x4xbf16>, vector<4x4xbf16>, vector<64x4xf32> -> vector<64x4xf32>
    %173 = arith.addf %167, %172 : vector<64x4xf32>
    %174 = vector.extract_strided_slice %125 {offsets = [2, 2, 0], sizes = [8, 8, 4], strides = [1, 1, 1]} : vector<10x10x4xbf16> to vector<8x8x4xbf16>
    %175 = vector.shape_cast %174 : vector<8x8x4xbf16> to vector<64x4xbf16>
    %c2_148 = arith.constant 2 : index
    %c8_149 = arith.constant 8 : index
    %c0_150 = arith.constant 0 : index
    %c0_151 = arith.constant 0 : index
    %176 = vector.load %arg5[%c2_148, %c8_149, %c0_150, %c0_151] : memref<3x9x4x4xbf16, #tpu.memory_space<vmem>>, vector<1x1x4x4xbf16>
    %177 = vector.shape_cast %176 : vector<1x1x4x4xbf16> to vector<4x4xbf16>
    %cst_152 = arith.constant dense<0.000000e+00> : vector<64x4xf32>
    %178 = tpu.matmul %175, %177, %cst_152 {dimension_numbers = #tpu.dot_dimension_numbers<[1], [0], [0], [1], [0, 0, 1, 1], [], []>} : vector<64x4xbf16>, vector<4x4xbf16>, vector<64x4xf32> -> vector<64x4xf32>
    %179 = arith.addf %173, %178 : vector<64x4xf32>
    %c0_153 = arith.constant 0 : index
    %c0_154 = arith.constant 0 : index
    %180 = vector.load %arg6[%c0_153, %c0_154] : memref<1x4xf32, #tpu.memory_space<vmem>>, vector<1x4xf32>
    %181 = vector.broadcast %180 : vector<1x4xf32> to vector<64x4xf32>
    %182 = arith.addf %179, %181 : vector<64x4xf32>
    %cst_155 = arith.constant 0.000000e+00 : f32
    %183 = vector.broadcast %cst_155 : f32 to vector<64x4xf32>
    %184 = arith.maximumf %182, %183 : vector<64x4xf32>
    %185 = arith.truncf %184 : vector<64x4xf32> to vector<64x4xbf16>
    %c0_156 = arith.constant 0 : index
    %c0_157 = arith.constant 0 : index
    %186 = vector.load %arg7[%c0_156, %c0_157] : memref<4x16xbf16, #tpu.memory_space<vmem>>, vector<4x16xbf16>
    %cst_158 = arith.constant dense<0.000000e+00> : vector<64x16xf32>
    %187 = tpu.matmul %185, %186, %cst_158 {dimension_numbers = #tpu.dot_dimension_numbers<[1], [0], [0], [1], [0, 0, 1, 1], [], []>} : vector<64x4xbf16>, vector<4x16xbf16>, vector<64x16xf32> -> vector<64x16xf32>
    %c0_159 = arith.constant 0 : index
    %c0_160 = arith.constant 0 : index
    %188 = vector.load %arg8[%c0_159, %c0_160] : memref<1x16xf32, #tpu.memory_space<vmem>>, vector<1x16xf32>
    %189 = vector.broadcast %188 : vector<1x16xf32> to vector<64x16xf32>
    %190 = arith.addf %187, %189 : vector<64x16xf32>
    %c0_161 = arith.constant 0 : index
    %c0_162 = arith.constant 0 : index
    %c0_163 = arith.constant 0 : index
    %c0_164 = arith.constant 0 : index
    %191 = vector.load %arg9[%c0_161, %c0_162, %c0_163, %c0_164] : memref<1x1x64x16xf32, #tpu.memory_space<vmem>>, vector<1x1x64x16xf32>
    %192 = vector.shape_cast %191 : vector<1x1x64x16xf32> to vector<64x16xf32>
    %193 = arith.addf %190, %192 : vector<64x16xf32>
    %cst_165 = arith.constant 0.000000e+00 : f32
    %194 = vector.broadcast %cst_165 : f32 to vector<64x16xf32>
    %195 = arith.maximumf %193, %194 : vector<64x16xf32>
    %c0_166 = arith.constant 0 : index
    %c0_167 = arith.constant 0 : index
    %c0_168 = arith.constant 0 : index
    %c0_169 = arith.constant 0 : index
    %196 = vector.load %arg10[%c0_166, %c0_167, %c0_168, %c0_169] : memref<1x1x64x16xf32, #tpu.memory_space<vmem>>, vector<1x1x64x16xf32>
    %197 = vector.shape_cast %196 : vector<1x1x64x16xf32> to vector<64x16xf32>
    %198 = vector.shape_cast %195 : vector<64x16xf32> to vector<1x1x64x16xf32>
    tpu.vector_store %arg10[%c0_166, %c0_167, %c0_168, %c0_169], %198 {strides = array<i32>} : memref<1x1x64x16xf32, #tpu.memory_space<vmem>>, vector<1x1x64x16xf32>,
    return
  }
  func.func @transform_0(%arg0: i32, %arg1: i32) -> (i32, i32, i32, i32, i32) {
    %c1_i32 = arith.constant 1 : i32
    %0 = arith.subi %arg1, %c1_i32 : i32
    %c0_i32 = arith.constant 0 : i32
    %1 = arith.maxsi %0, %c0_i32 : i32
    %c0_i32_0 = arith.constant 0 : i32
    %c0_i32_1 = arith.constant 0 : i32
    %c0_i32_2 = arith.constant 0 : i32
    %c0_i32_3 = arith.constant 0 : i32
    return %arg0, %1, %c0_i32_0, %c0_i32_1, %c0_i32_2 : i32, i32, i32, i32, i32
  }
  func.func @transform_1(%arg0: i32, %arg1: i32) -> (i32, i32, i32, i32, i32) {
    %c0_i32 = arith.constant 0 : i32
    %c0_i32_0 = arith.constant 0 : i32
    %c0_i32_1 = arith.constant 0 : i32
    %c0_i32_2 = arith.constant 0 : i32
    return %arg0, %arg1, %c0_i32, %c0_i32_0, %c0_i32_1 : i32, i32, i32, i32, i32
  }
  func.func @transform_2(%arg0: i32, %arg1: i32) -> (i32, i32, i32, i32, i32) {
    %c1_i32 = arith.constant 1 : i32
    %0 = arith.addi %arg1, %c1_i32 : i32
    %c7_i32 = arith.constant 7 : i32
    %1 = arith.minsi %0, %c7_i32 : i32
    %c0_i32 = arith.constant 0 : i32
    %c0_i32_0 = arith.constant 0 : i32
    %c0_i32_1 = arith.constant 0 : i32
    %c0_i32_2 = arith.constant 0 : i32
    return %arg0, %1, %c0_i32, %c0_i32_0, %c0_i32_1 : i32, i32, i32, i32, i32
  }
  func.func @transform_3(%arg0: i32, %arg1: i32) -> (i32, i32, i32, i32) {
    %c0_i32 = arith.constant 0 : i32
    %c0_i32_0 = arith.constant 0 : i32
    %c0_i32_1 = arith.constant 0 : i32
    %c0_i32_2 = arith.constant 0 : i32
    %c0_i32_3 = arith.constant 0 : i32
    return %c0_i32, %c0_i32_0, %c0_i32_1, %c0_i32_2 : i32, i32, i32, i32
  }
  func.func @transform_4(%arg0: i32, %arg1: i32) -> (i32, i32) {
    %c0_i32 = arith.constant 0 : i32
    %c0_i32_0 = arith.constant 0 : i32
    %c0_i32_1 = arith.constant 0 : i32
    return %c0_i32, %c0_i32_0 : i32, i32
  }
  func.func @transform_5(%arg0: i32, %arg1: i32) -> (i32, i32) {
    %c0_i32 = arith.constant 0 : i32
    %c0_i32_0 = arith.constant 0 : i32
    %c0_i32_1 = arith.constant 0 : i32
    return %c0_i32, %c0_i32_0 : i32, i32
  }
  func.func @transform_6(%arg0: i32, %arg1: i32) -> (i32, i32) {
    %c0_i32 = arith.constant 0 : i32
    %c0_i32_0 = arith.constant 0 : i32
    %c0_i32_1 = arith.constant 0 : i32
    return %c0_i32, %c0_i32_0 : i32, i32
  }
  func.func @transform_7(%arg0: i32, %arg1: i32) -> (i32, i32, i32, i32) {
    %c0_i32 = arith.constant 0 : i32
    %c0_i32_0 = arith.constant 0 : i32
    %c0_i32_1 = arith.constant 0 : i32
    return %arg0, %arg1, %c0_i32, %c0_i32_0 : i32, i32, i32, i32
  }
  func.func @transform_8(%arg0: i32, %arg1: i32) -> (i32, i32, i32, i32) {
    %c0_i32 = arith.constant 0 : i32
    %c0_i32_0 = arith.constant 0 : i32
    %c0_i32_1 = arith.constant 0 : i32
    return %arg0, %arg1, %c0_i32, %c0_i32_0 : i32, i32, i32, i32
  }
}

</mosaic_0001>

<llo_original>
// kernel: bottleneck_forward.2
$region0: #{bottleneck_forward.2}
  #allocation0 [shape = 'u32[]', space=smem, size = 0x4, offset = 0x4, fixed_abs, tag = 'smem constant byte address 0x4 - core index']
  #allocation1 [shape = 'u32[72,128]{1,0:T(1,128)}', space=vmem, size = 0x9000, scoped, tag = 'internal scratch']
  %s0 = inlined_call_operand.hbm [shape: f32[1024,16], index: 0, kind: input, shape index: {}]
  %s1 = inlined_call_operand.vmem [shape: bf16[16,4], index: 1, kind: input, shape index: {}]
  %s2 = inlined_call_operand.vmem [shape: f32[1,4], index: 2, kind: input, shape index: {}]
  %s3 = inlined_call_operand.vmem [shape: bf16[1024,4], index: 3, kind: output, shape index: {}]
  %s4 = sld [smem:[#allocation0]]
  $region26: #{bottleneck_forward.2} parent=0
    _
  %s6 = ssub.s32 1, %s4
  %s7 = scalar_select 0, %s6, %s4
  $region1: #{bottleneck_forward.2} parent=0
    #allocation2 [shape = 'u8[524288]{0}', space=vmem, size = 0x80000, scoped, tag = 'input window, operand 0, single buffered']
    #allocation3 [shape = 's32[1]{0}', space=sflag, size = 0x4, scoped, tag = 'scoped memory for bottleneck_forward.2']
    %8 = vsyncpa [#allocation3], 0
    // Predicated region
    $region2: #{bottleneck_forward.2} parent=1 // pred_check
      _
    $region3: #{bottleneck_forward.2} parent=1 // pred_check_branch
      %10 = sbr.rel (0) target = $region5
    $region4: #{bottleneck_forward.2} parent=1 // pred_region
      %12 = vsyncadd [#allocation3], 0
      %s13 = sshll.u32 %s0, 4
      %s14 = int_to_ptr.hbm [resolvable:$true] %s13
      %s15 = sshll.u32 [#allocation2], 4
      %s16 = int_to_ptr.vmem [resolvable:$true] %s15
      %21 = dma.hbm_to_vmem [thread:$0]  %s14, 16384, %s16, [#allocation3], 128, 128, 8
    $region5: #{bottleneck_forward.2} parent=1 // pred_fallthru
      _
    // Predicated region
    $region6: #{bottleneck_forward.2} parent=1 // pred_check
      _
    $region7: #{bottleneck_forward.2} parent=1 // pred_check_branch
      %23 = sbr.rel (0) target = $region9
    $region8: #{bottleneck_forward.2} parent=1 // pred_region
      _
    $region9: #{bottleneck_forward.2} parent=1 // pred_fallthru
      _
    // Predicated region
    $region10: #{bottleneck_forward.2} parent=1 // pred_check
      _
    $region11: #{bottleneck_forward.2} parent=1 // pred_check_branch
      %25 = sbr.rel (0) target = $region13
    $region12: #{bottleneck_forward.2} parent=1 // pred_region
      _
    $region13: #{bottleneck_forward.2} parent=1 // pred_fallthru
      _
    // Predicated region
    $region14: #{bottleneck_forward.2} parent=1 // pred_check
      _
    $region15: #{bottleneck_forward.2} parent=1 // pred_check_branch
      %27 = sbr.rel (0) target = $region17
    $region16: #{bottleneck_forward.2} parent=1 // pred_region
      %29 = dma.done [#allocation3], 16384
    $region17: #{bottleneck_forward.2} parent=1 // pred_fallthru
      _
    %v31 = vld [vmem:[#allocation2] sm:$0xff]
    %v32 = vld [vmem:[#allocation2 + $0x8] sm:$0xff]
    %v33 = vld [vmem:[#allocation2 + $0x10] sm:$0xff]
    %v34 = vld [vmem:[#allocation2 + $0x18] sm:$0xff]
    %v35 = vld [vmem:[#allocation2 + $0x20] sm:$0xff]
    %v36 = vld [vmem:[#allocation2 + $0x28] sm:$0xff]
    %v37 = vld [vmem:[#allocation2 + $0x30] sm:$0xff]
    %v38 = vld [vmem:[#allocation2 + $0x38] sm:$0xff]
    %v39 = vld [vmem:[#allocation2 + $0x40] sm:$0xff]
    %v40 = vld [vmem:[#allocation2 + $0x48] sm:$0xff]
    %v41 = vld [vmem:[#allocation2 + $0x50] sm:$0xff]
    %v42 = vld [vmem:[#allocation2 + $0x58] sm:$0xff]
    %v43 = vld [vmem:[#allocation2 + $0x60] sm:$0xff]
    %v44 = vld [vmem:[#allocation2 + $0x68] sm:$0xff]
    %v45 = vld [vmem:[#allocation2 + $0x70] sm:$0xff]
    %v46 = vld [vmem:[#allocation2 + $0x78] sm:$0xff]
    %v47 = vld [vmem:[#allocation2 + $0x80] sm:$0xff]
    %v48 = vld [vmem:[#allocation2 + $0x88] sm:$0xff]
    %v49 = vld [vmem:[#allocation2 + $0x90] sm:$0xff]
    %v50 = vld [vmem:[#allocation2 + $0x98] sm:$0xff]
    %v51 = vld [vmem:[#allocation2 + $0xa0] sm:$0xff]
    %v52 = vld [vmem:[#allocation2 + $0xa8] sm:$0xff]
    %v53 = vld [vmem:[#allocation2 + $0xb0] sm:$0xff]
    %v54 = vld [vmem:[#allocation2 + $0xb8] sm:$0xff]
    %v55 = vld [vmem:[#allocation2 + $0xc0] sm:$0xff]
    %v56 = vld [vmem:[#allocation2 + $0xc8] sm:$0xff]
    %v57 = vld [vmem:[#allocation2 + $0xd0] sm:$0xff]
    %v58 = vld [vmem:[#allocation2 + $0xd8] sm:$0xff]
    %v59 = vld [vmem:[#allocation2 + $0xe0] sm:$0xff]
    %v60 = vld [vmem:[#allocation2 + $0xe8] sm:$0xff]
    %v61 = vld [vmem:[#allocation2 + $0xf0] sm:$0xff]
    %v62 = vld [vmem:[#allocation2 + $0xf8] sm:$0xff]
    %v63 = vld [vmem:[#allocation2 + $0x100] sm:$0xff]
    %v64 = vld [vmem:[#allocation2 + $0x108] sm:$0xff]
    %v65 = vld [vmem:[#allocation2 + $0x110] sm:$0xff]
    %v66 = vld [vmem:[#allocation2 + $0x118] sm:$0xff]
    %v67 = vld [vmem:[#allocation2 + $0x120] sm:$0xff]
    %v68 = vld [vmem:[#allocation2 + $0x128] sm:$0xff]
    %v69 = vld [vmem:[#allocation2 + $0x130] sm:$0xff]
    %v70 = vld [vmem:[#allocation2 + $0x138] sm:$0xff]
    %v71 = vld [vmem:[#allocation2 + $0x140] sm:$0xff]
    %v72 = vld [vmem:[#allocation2 + $0x148] sm:$0xff]
    %v73 = vld [vmem:[#allocation2 + $0x150] sm:$0xff]
    %v74 = vld [vmem:[#allocation2 + $0x158] sm:$0xff]
    %v75 = vld [vmem:[#allocation2 + $0x160] sm:$0xff]
    %v76 = vld [vmem:[#allocation2 + $0x168] sm:$0xff]
    %v77 = vld [vmem:[#allocation2 + $0x170] sm:$0xff]
    %v78 = vld [vmem:[#allocation2 + $0x178] sm:$0xff]
    %v79 = vld [vmem:[#allocation2 + $0x180] sm:$0xff]
    %v80 = vld [vmem:[#allocation2 + $0x188] sm:$0xff]
    %v81 = vld [vmem:[#allocation2 + $0x190] sm:$0xff]
    %v82 = vld [vmem:[#allocation2 + $0x198] sm:$0xff]
    %v83 = vld [vmem:[#allocation2 + $0x1a0] sm:$0xff]
    %v84 = vld [vmem:[#allocation2 + $0x1a8] sm:$0xff]
    %v85 = vld [vmem:[#allocation2 + $0x1b0] sm:$0xff]
    %v86 = vld [vmem:[#allocation2 + $0x1b8] sm:$0xff]
    %v87 = vld [vmem:[#allocation2 + $0x1c0] sm:$0xff]
    %v88 = vld [vmem:[#allocation2 + $0x1c8] sm:$0xff]
    %v89 = vld [vmem:[#allocation2 + $0x1d0] sm:$0xff]
    %v90 = vld [vmem:[#allocation2 + $0x1d8] sm:$0xff]
    %v91 = vld [vmem:[#allocation2 + $0x1e0] sm:$0xff]
    %v92 = vld [vmem:[#allocation2 + $0x1e8] sm:$0xff]
    %v93 = vld [vmem:[#allocation2 + $0x1f0] sm:$0xff]
    %v94 = vld [vmem:[#allocation2 + $0x1f8] sm:$0xff]
    %v95 = vld [vmem:[#allocation2 + $0x200] sm:$0xff]
    %v96 = vld [vmem:[#allocation2 + $0x208] sm:$0xff]
    %v97 = vld [vmem:[#allocation2 + $0x210] sm:$0xff]
    %v98 = vld [vmem:[#allocation2 + $0x218] sm:$0xff]
    %v99 = vld [vmem:[#allocation2 + $0x220] sm:$0xff]
    %v100 = vld [vmem:[#allocation2 + $0x228] sm:$0xff]
    %v101 = vld [vmem:[#allocation2 + $0x230] sm:$0xff]
    %v102 = vld [vmem:[#allocation2 + $0x238] sm:$0xff]
    %v103 = vld [vmem:[#allocation2 + $0x240] sm:$0xff]
    %v104 = vld [vmem:[#allocation2 + $0x248] sm:$0xff]
    %v105 = vld [vmem:[#allocation2 + $0x250] sm:$0xff]
    %v106 = vld [vmem:[#allocation2 + $0x258] sm:$0xff]
    %v107 = vld [vmem:[#allocation2 + $0x260] sm:$0xff]
    %v108 = vld [vmem:[#allocation2 + $0x268] sm:$0xff]
    %v109 = vld [vmem:[#allocation2 + $0x270] sm:$0xff]
    %v110 = vld [vmem:[#allocation2 + $0x278] sm:$0xff]
    %v111 = vld [vmem:[#allocation2 + $0x280] sm:$0xff]
    %v112 = vld [vmem:[#allocation2 + $0x288] sm:$0xff]
    %v113 = vld [vmem:[#allocation2 + $0x290] sm:$0xff]
    %v114 = vld [vmem:[#allocation2 + $0x298] sm:$0xff]
    %v115 = vld [vmem:[#allocation2 + $0x2a0] sm:$0xff]
    %v116 = vld [vmem:[#allocation2 + $0x2a8] sm:$0xff]
    %v117 = vld [vmem:[#allocation2 + $0x2b0] sm:$0xff]
    %v118 = vld [vmem:[#allocation2 + $0x2b8] sm:$0xff]
    %v119 = vld [vmem:[#allocation2 + $0x2c0] sm:$0xff]
    %v120 = vld [vmem:[#allocation2 + $0x2c8] sm:$0xff]
    %v121 = vld [vmem:[#allocation2 + $0x2d0] sm:$0xff]
    %v122 = vld [vmem:[#allocation2 + $0x2d8] sm:$0xff]
    %v123 = vld [vmem:[#allocation2 + $0x2e0] sm:$0xff]
    %v124 = vld [vmem:[#allocation2 + $0x2e8] sm:$0xff]
    %v125 = vld [vmem:[#allocation2 + $0x2f0] sm:$0xff]
    %v126 = vld [vmem:[#allocation2 + $0x2f8] sm:$0xff]
    %v127 = vld [vmem:[#allocation2 + $0x300] sm:$0xff]
    %v128 = vld [vmem:[#allocation2 + $0x308] sm:$0xff]
    %v129 = vld [vmem:[#allocation2 + $0x310] sm:$0xff]
    %v130 = vld [vmem:[#allocation2 + $0x318] sm:$0xff]
    %v131 = vld [vmem:[#allocation2 + $0x320] sm:$0xff]
    %v132 = vld [vmem:[#allocation2 + $0x328] sm:$0xff]
    %v133 = vld [vmem:[#allocation2 + $0x330] sm:$0xff]
    %v134 = vld [vmem:[#allocation2 + $0x338] sm:$0xff]
    %v135 = vld [vmem:[#allocation2 + $0x340] sm:$0xff]
    %v136 = vld [vmem:[#allocation2 + $0x348] sm:$0xff]
    %v137 = vld [vmem:[#allocation2 + $0x350] sm:$0xff]
    %v138 = vld [vmem:[#allocation2 + $0x358] sm:$0xff]
    %v139 = vld [vmem:[#allocation2 + $0x360] sm:$0xff]
    %v140 = vld [vmem:[#allocation2 + $0x368] sm:$0xff]
    %v141 = vld [vmem:[#allocation2 + $0x370] sm:$0xff]
    %v142 = vld [vmem:[#allocation2 + $0x378] sm:$0xff]
    %v143 = vld [vmem:[#allocation2 + $0x380] sm:$0xff]
    %v144 = vld [vmem:[#allocation2 + $0x388] sm:$0xff]
    %v145 = vld [vmem:[#allocation2 + $0x390] sm:$0xff]
    %v146 = vld [vmem:[#allocation2 + $0x398] sm:$0xff]
    %v147 = vld [vmem:[#allocation2 + $0x3a0] sm:$0xff]
    %v148 = vld [vmem:[#allocation2 + $0x3a8] sm:$0xff]
    %v149 = vld [vmem:[#allocation2 + $0x3b0] sm:$0xff]
    %v150 = vld [vmem:[#allocation2 + $0x3b8] sm:$0xff]
    %v151 = vld [vmem:[#allocation2 + $0x3c0] sm:$0xff]
    %v152 = vld [vmem:[#allocation2 + $0x3c8] sm:$0xff]
    %v153 = vld [vmem:[#allocation2 + $0x3d0] sm:$0xff]
    %v154 = vld [vmem:[#allocation2 + $0x3d8] sm:$0xff]
    %v155 = vld [vmem:[#allocation2 + $0x3e0] sm:$0xff]
    %v156 = vld [vmem:[#allocation2 + $0x3e8] sm:$0xff]
    %v157 = vld [vmem:[#allocation2 + $0x3f0] sm:$0xff]
    %v158 = vld [vmem:[#allocation2 + $0x3f8] sm:$0xff]
    %v159 = vpack.c.bf16 %v32, %v31
    %v160 = vpack.c.bf16 %v34, %v33
    %v161 = vpack.c.bf16 %v36, %v35
    %v162 = vpack.c.bf16 %v38, %v37
    %v163 = vpack.c.bf16 %v40, %v39
    %v164 = vpack.c.bf16 %v42, %v41
    %v165 = vpack.c.bf16 %v44, %v43
    %v166 = vpack.c.bf16 %v46, %v45
    %v167 = vpack.c.bf16 %v48, %v47
    %v168 = vpack.c.bf16 %v50, %v49
    %v169 = vpack.c.bf16 %v52, %v51
    %v170 = vpack.c.bf16 %v54, %v53
    %v171 = vpack.c.bf16 %v56, %v55
    %v172 = vpack.c.bf16 %v58, %v57
    %v173 = vpack.c.bf16 %v60, %v59
    %v174 = vpack.c.bf16 %v62, %v61
    %v175 = vpack.c.bf16 %v64, %v63
    %v176 = vpack.c.bf16 %v66, %v65
    %v177 = vpack.c.bf16 %v68, %v67
    %v178 = vpack.c.bf16 %v70, %v69
    %v179 = vpack.c.bf16 %v72, %v71
    %v180 = vpack.c.bf16 %v74, %v73
    %v181 = vpack.c.bf16 %v76, %v75
    %v182 = vpack.c.bf16 %v78, %v77
    %v183 = vpack.c.bf16 %v80, %v79
    %v184 = vpack.c.bf16 %v82, %v81
    %v185 = vpack.c.bf16 %v84, %v83
    %v186 = vpack.c.bf16 %v86, %v85
    %v187 = vpack.c.bf16 %v88, %v87
    %v188 = vpack.c.bf16 %v90, %v89
    %v189 = vpack.c.bf16 %v92, %v91
    %v190 = vpack.c.bf16 %v94, %v93
    %v191 = vpack.c.bf16 %v96, %v95
    %v192 = vpack.c.bf16 %v98, %v97
    %v193 = vpack.c.bf16 %v100, %v99
    %v194 = vpack.c.bf16 %v102, %v101
    %v195 = vpack.c.bf16 %v104, %v103
    %v196 = vpack.c.bf16 %v106, %v105
    %v197 = vpack.c.bf16 %v108, %v107
    %v198 = vpack.c.bf16 %v110, %v109
    %v199 = vpack.c.bf16 %v112, %v111
    %v200 = vpack.c.bf16 %v114, %v113
    %v201 = vpack.c.bf16 %v116, %v115
    %v202 = vpack.c.bf16 %v118, %v117
    %v203 = vpack.c.bf16 %v120, %v119
    %v204 = vpack.c.bf16 %v122, %v121
    %v205 = vpack.c.bf16 %v124, %v123
    %v206 = vpack.c.bf16 %v126, %v125
    %v207 = vpack.c.bf16 %v128, %v127
    %v208 = vpack.c.bf16 %v130, %v129
    %v209 = vpack.c.bf16 %v132, %v131
    %v210 = vpack.c.bf16 %v134, %v133
    %v211 = vpack.c.bf16 %v136, %v135
    %v212 = vpack.c.bf16 %v138, %v137
    %v213 = vpack.c.bf16 %v140, %v139
    %v214 = vpack.c.bf16 %v142, %v141
    %v215 = vpack.c.bf16 %v144, %v143
    %v216 = vpack.c.bf16 %v146, %v145
    %v217 = vpack.c.bf16 %v148, %v147
    %v218 = vpack.c.bf16 %v150, %v149
    %v219 = vpack.c.bf16 %v152, %v151
    %v220 = vpack.c.bf16 %v154, %v153
    %v221 = vpack.c.bf16 %v156, %v155
    %v222 = vpack.c.bf16 %v158, %v157
    %v223 = vld [vmem:[%s1] sm:$0xf]
    %v224 = vld [vmem:[%s1 + $0x4] sm:$0xf]
    %v225 = vld [vmem:[%s2] sm:$0x1]
    %v227 = vperm.slane %v225, 0
    %v231 = vunpack.c.l.b16 %v223
    %v232 = vunpack.c.l.b16 %v224
    %v233 = vpack.c.b16 %v232, %v231
    %vm235 = vcmask 130048
    %v237 = vsel %vm235, %v159, 0
    %v240 = vsel %vm235, %v160, 0
    %v243 = vsel %vm235, %v161, 0
    %v246 = vsel %vm235, %v162, 0
    %v249 = vsel %vm235, %v163, 0
    %v252 = vsel %vm235, %v164, 0
    %v255 = vsel %vm235, %v165, 0
    %v258 = vsel %vm235, %v166, 0
    %v261 = vsel %vm235, %v167, 0
    %v264 = vsel %vm235, %v168, 0
    %v267 = vsel %vm235, %v169, 0
    %v270 = vsel %vm235, %v170, 0
    %v273 = vsel %vm235, %v171, 0
    %v276 = vsel %vm235, %v172, 0
    %v279 = vsel %vm235, %v173, 0
    %v282 = vsel %vm235, %v174, 0
    %v285 = vsel %vm235, %v175, 0
    %v288 = vsel %vm235, %v176, 0
    %v291 = vsel %vm235, %v177, 0
    %v294 = vsel %vm235, %v178, 0
    %v297 = vsel %vm235, %v179, 0
    %v300 = vsel %vm235, %v180, 0
    %v303 = vsel %vm235, %v181, 0
    %v306 = vsel %vm235, %v182, 0
    %v309 = vsel %vm235, %v183, 0
    %v312 = vsel %vm235, %v184, 0
    %v315 = vsel %vm235, %v185, 0
    %v318 = vsel %vm235, %v186, 0
    %v321 = vsel %vm235, %v187, 0
    %v324 = vsel %vm235, %v188, 0
    %v327 = vsel %vm235, %v189, 0
    %v330 = vsel %vm235, %v190, 0
    %v333 = vsel %vm235, %v191, 0
    %v336 = vsel %vm235, %v192, 0
    %v339 = vsel %vm235, %v193, 0
    %v342 = vsel %vm235, %v194, 0
    %v345 = vsel %vm235, %v195, 0
    %v348 = vsel %vm235, %v196, 0
    %v351 = vsel %vm235, %v197, 0
    %v354 = vsel %vm235, %v198, 0
    %v357 = vsel %vm235, %v199, 0
    %v360 = vsel %vm235, %v200, 0
    %v363 = vsel %vm235, %v201, 0
    %v366 = vsel %vm235, %v202, 0
    %v369 = vsel %vm235, %v203, 0
    %v372 = vsel %vm235, %v204, 0
    %v375 = vsel %vm235, %v205, 0
    %v378 = vsel %vm235, %v206, 0
    %v381 = vsel %vm235, %v207, 0
    %v384 = vsel %vm235, %v208, 0
    %v387 = vsel %vm235, %v209, 0
    %v390 = vsel %vm235, %v210, 0
    %v393 = vsel %vm235, %v211, 0
    %v396 = vsel %vm235, %v212, 0
    %v399 = vsel %vm235, %v213, 0
    %v402 = vsel %vm235, %v214, 0
    %v405 = vsel %vm235, %v215, 0
    %v408 = vsel %vm235, %v216, 0
    %v411 = vsel %vm235, %v217, 0
    %v414 = vsel %vm235, %v218, 0
    %v417 = vsel %vm235, %v219, 0
    %v420 = vsel %vm235, %v220, 0
    %v423 = vsel %vm235, %v221, 0
    %v426 = vsel %vm235, %v222, 0
    %428 = vmatpush.bf16.msra.mxu0 0
    %429 = vmatpush.bf16.msra.mxu0 0
    %430 = vmatpush.bf16.msra.mxu0 0
    %431 = vmatpush.bf16.msra.mxu0 0
    %432 = vmatpush.bf16.msra.mxu0 0
    %433 = vmatpush.bf16.msra.mxu0 0
    %434 = vmatpush.bf16.msra.mxu0 0
    %435 = vmatpush.bf16.msra.mxu0 %v233
    %436 = vmatmul.bf16.gmra.mxu0 %v237
    %v437 = vpop.f32.mrf.mxu0
    %v438 = vadd.f32 %v227, %v437
    %v439 = vpop.f32.mrf.mxu0
    %v440 = vadd.f32 %v227, %v439
    %441 = vmatmul.bf16.gmra.mxu0 %v240
    %v442 = vpop.f32.mrf.mxu0
    %v443 = vadd.f32 %v227, %v442
    %v444 = vpop.f32.mrf.mxu0
    %v445 = vadd.f32 %v227, %v444
    %446 = vmatmul.bf16.gmra.mxu0 %v243
    %v447 = vpop.f32.mrf.mxu0
    %v448 = vadd.f32 %v227, %v447
    %v449 = vpop.f32.mrf.mxu0
    %v450 = vadd.f32 %v227, %v449
    %451 = vmatmul.bf16.gmra.mxu0 %v246
    %v452 = vpop.f32.mrf.mxu0
    %v453 = vadd.f32 %v227, %v452
    %v454 = vpop.f32.mrf.mxu0
    %v455 = vadd.f32 %v227, %v454
    %456 = vmatmul.bf16.gmra.mxu0 %v249
    %v457 = vpop.f32.mrf.mxu0
    %v458 = vadd.f32 %v227, %v457
    %v459 = vpop.f32.mrf.mxu0
    %v460 = vadd.f32 %v227, %v459
    %461 = vmatmul.bf16.gmra.mxu0 %v252
    %v462 = vpop.f32.mrf.mxu0
    %v463 = vadd.f32 %v227, %v462
    %v464 = vpop.f32.mrf.mxu0
    %v465 = vadd.f32 %v227, %v464
    %466 = vmatmul.bf16.gmra.mxu0 %v255
    %v467 = vpop.f32.mrf.mxu0
    %v468 = vadd.f32 %v227, %v467
    %v469 = vpop.f32.mrf.mxu0
    %v470 = vadd.f32 %v227, %v469
    %471 = vmatmul.bf16.gmra.mxu0 %v258
    %v472 = vpop.f32.mrf.mxu0
    %v473 = vadd.f32 %v227, %v472
    %v474 = vpop.f32.mrf.mxu0
    %v475 = vadd.f32 %v227, %v474
    %476 = vmatmul.bf16.gmra.mxu0 %v261
    %v477 = vpop.f32.mrf.mxu0
    %v478 = vadd.f32 %v227, %v477
    %v479 = vpop.f32.mrf.mxu0
    %v480 = vadd.f32 %v227, %v479
    %481 = vmatmul.bf16.gmra.mxu0 %v264
    %v482 = vpop.f32.mrf.mxu0
    %v483 = vadd.f32 %v227, %v482
    %v484 = vpop.f32.mrf.mxu0
    %v485 = vadd.f32 %v227, %v484
    %486 = vmatmul.bf16.gmra.mxu0 %v267
    %v487 = vpop.f32.mrf.mxu0
    %v488 = vadd.f32 %v227, %v487
    %v489 = vpop.f32.mrf.mxu0
    %v490 = vadd.f32 %v227, %v489
    %491 = vmatmul.bf16.gmra.mxu0 %v270
    %v492 = vpop.f32.mrf.mxu0
    %v493 = vadd.f32 %v227, %v492
    %v494 = vpop.f32.mrf.mxu0
    %v495 = vadd.f32 %v227, %v494
    %496 = vmatmul.bf16.gmra.mxu0 %v273
    %v497 = vpop.f32.mrf.mxu0
    %v498 = vadd.f32 %v227, %v497
    %v499 = vpop.f32.mrf.mxu0
    %v500 = vadd.f32 %v227, %v499
    %501 = vmatmul.bf16.gmra.mxu0 %v276
    %v502 = vpop.f32.mrf.mxu0
    %v503 = vadd.f32 %v227, %v502
    %v504 = vpop.f32.mrf.mxu0
    %v505 = vadd.f32 %v227, %v504
    %506 = vmatmul.bf16.gmra.mxu0 %v279
    %v507 = vpop.f32.mrf.mxu0
    %v508 = vadd.f32 %v227, %v507
    %v509 = vpop.f32.mrf.mxu0
    %v510 = vadd.f32 %v227, %v509
    %511 = vmatmul.bf16.gmra.mxu0 %v282
    %v512 = vpop.f32.mrf.mxu0
    %v513 = vadd.f32 %v227, %v512
    %v514 = vpop.f32.mrf.mxu0
    %v515 = vadd.f32 %v227, %v514
    %516 = vmatmul.bf16.gmra.mxu0 %v285
    %v517 = vpop.f32.mrf.mxu0
    %v518 = vadd.f32 %v227, %v517
    %v519 = vpop.f32.mrf.mxu0
    %v520 = vadd.f32 %v227, %v519
    %521 = vmatmul.bf16.gmra.mxu0 %v288
    %v522 = vpop.f32.mrf.mxu0
    %v523 = vadd.f32 %v227, %v522
    %v524 = vpop.f32.mrf.mxu0
    %v525 = vadd.f32 %v227, %v524
    %526 = vmatmul.bf16.gmra.mxu0 %v291
    %v527 = vpop.f32.mrf.mxu0
    %v528 = vadd.f32 %v227, %v527
    %v529 = vpop.f32.mrf.mxu0
    %v530 = vadd.f32 %v227, %v529
    %531 = vmatmul.bf16.gmra.mxu0 %v294
    %v532 = vpop.f32.mrf.mxu0
    %v533 = vadd.f32 %v227, %v532
    %v534 = vpop.f32.mrf.mxu0
    %v535 = vadd.f32 %v227, %v534
    %536 = vmatmul.bf16.gmra.mxu0 %v297
    %v537 = vpop.f32.mrf.mxu0
    %v538 = vadd.f32 %v227, %v537
    %v539 = vpop.f32.mrf.mxu0
    %v540 = vadd.f32 %v227, %v539
    %541 = vmatmul.bf16.gmra.mxu0 %v300
    %v542 = vpop.f32.mrf.mxu0
    %v543 = vadd.f32 %v227, %v542
    %v544 = vpop.f32.mrf.mxu0
    %v545 = vadd.f32 %v227, %v544
    %546 = vmatmul.bf16.gmra.mxu0 %v303
    %v547 = vpop.f32.mrf.mxu0
    %v548 = vadd.f32 %v227, %v547
    %v549 = vpop.f32.mrf.mxu0
    %v550 = vadd.f32 %v227, %v549
    %551 = vmatmul.bf16.gmra.mxu0 %v306
    %v552 = vpop.f32.mrf.mxu0
    %v553 = vadd.f32 %v227, %v552
    %v554 = vpop.f32.mrf.mxu0
    %v555 = vadd.f32 %v227, %v554
    %556 = vmatmul.bf16.gmra.mxu0 %v309
    %v557 = vpop.f32.mrf.mxu0
    %v558 = vadd.f32 %v227, %v557
    %v559 = vpop.f32.mrf.mxu0
    %v560 = vadd.f32 %v227, %v559
    %561 = vmatmul.bf16.gmra.mxu0 %v312
    %v562 = vpop.f32.mrf.mxu0
    %v563 = vadd.f32 %v227, %v562
    %v564 = vpop.f32.mrf.mxu0
    %v565 = vadd.f32 %v227, %v564
    %566 = vmatmul.bf16.gmra.mxu0 %v315
    %v567 = vpop.f32.mrf.mxu0
    %v568 = vadd.f32 %v227, %v567
    %v569 = vpop.f32.mrf.mxu0
    %v570 = vadd.f32 %v227, %v569
    %571 = vmatmul.bf16.gmra.mxu0 %v318
    %v572 = vpop.f32.mrf.mxu0
    %v573 = vadd.f32 %v227, %v572
    %v574 = vpop.f32.mrf.mxu0
    %v575 = vadd.f32 %v227, %v574
    %576 = vmatmul.bf16.gmra.mxu0 %v321
    %v577 = vpop.f32.mrf.mxu0
    %v578 = vadd.f32 %v227, %v577
    %v579 = vpop.f32.mrf.mxu0
    %v580 = vadd.f32 %v227, %v579
    %581 = vmatmul.bf16.gmra.mxu0 %v324
    %v582 = vpop.f32.mrf.mxu0
    %v583 = vadd.f32 %v227, %v582
    %v584 = vpop.f32.mrf.mxu0
    %v585 = vadd.f32 %v227, %v584
    %586 = vmatmul.bf16.gmra.mxu0 %v327
    %v587 = vpop.f32.mrf.mxu0
    %v588 = vadd.f32 %v227, %v587
    %v589 = vpop.f32.mrf.mxu0
    %v590 = vadd.f32 %v227, %v589
    %591 = vmatmul.bf16.gmra.mxu0 %v330
    %v592 = vpop.f32.mrf.mxu0
    %v593 = vadd.f32 %v227, %v592
    %v594 = vpop.f32.mrf.mxu0
    %v595 = vadd.f32 %v227, %v594
    %596 = vmatmul.bf16.gmra.mxu0 %v333
    %v597 = vpop.f32.mrf.mxu0
    %v598 = vadd.f32 %v227, %v597
    %v599 = vpop.f32.mrf.mxu0
    %v600 = vadd.f32 %v227, %v599
    %601 = vmatmul.bf16.gmra.mxu0 %v336
    %v602 = vpop.f32.mrf.mxu0
    %v603 = vadd.f32 %v227, %v602
    %v604 = vpop.f32.mrf.mxu0
    %v605 = vadd.f32 %v227, %v604
    %606 = vmatmul.bf16.gmra.mxu0 %v339
    %v607 = vpop.f32.mrf.mxu0
    %v608 = vadd.f32 %v227, %v607
    %v609 = vpop.f32.mrf.mxu0
    %v610 = vadd.f32 %v227, %v609
    %611 = vmatmul.bf16.gmra.mxu0 %v342
    %v612 = vpop.f32.mrf.mxu0
    %v613 = vadd.f32 %v227, %v612
    %v614 = vpop.f32.mrf.mxu0
    %v615 = vadd.f32 %v227, %v614
    %616 = vmatmul.bf16.gmra.mxu0 %v345
    %v617 = vpop.f32.mrf.mxu0
    %v618 = vadd.f32 %v227, %v617
    %v619 = vpop.f32.mrf.mxu0
    %v620 = vadd.f32 %v227, %v619
    %621 = vmatmul.bf16.gmra.mxu0 %v348
    %v622 = vpop.f32.mrf.mxu0
    %v623 = vadd.f32 %v227, %v622
    %v624 = vpop.f32.mrf.mxu0
    %v625 = vadd.f32 %v227, %v624
    %626 = vmatmul.bf16.gmra.mxu0 %v351
    %v627 = vpop.f32.mrf.mxu0
    %v628 = vadd.f32 %v227, %v627
    %v629 = vpop.f32.mrf.mxu0
    %v630 = vadd.f32 %v227, %v629
    %631 = vmatmul.bf16.gmra.mxu0 %v354
    %v632 = vpop.f32.mrf.mxu0
    %v633 = vadd.f32 %v227, %v632
    %v634 = vpop.f32.mrf.mxu0
    %v635 = vadd.f32 %v227, %v634
    %636 = vmatmul.bf16.gmra.mxu0 %v357
    %v637 = vpop.f32.mrf.mxu0
    %v638 = vadd.f32 %v227, %v637
    %v639 = vpop.f32.mrf.mxu0
    %v640 = vadd.f32 %v227, %v639
    %641 = vmatmul.bf16.gmra.mxu0 %v360
    %v642 = vpop.f32.mrf.mxu0
    %v643 = vadd.f32 %v227, %v642
    %v644 = vpop.f32.mrf.mxu0
    %v645 = vadd.f32 %v227, %v644
    %646 = vmatmul.bf16.gmra.mxu0 %v363
    %v647 = vpop.f32.mrf.mxu0
    %v648 = vadd.f32 %v227, %v647
    %v649 = vpop.f32.mrf.mxu0
    %v650 = vadd.f32 %v227, %v649
    %651 = vmatmul.bf16.gmra.mxu0 %v366
    %v652 = vpop.f32.mrf.mxu0
    %v653 = vadd.f32 %v227, %v652
    %v654 = vpop.f32.mrf.mxu0
    %v655 = vadd.f32 %v227, %v654
    %656 = vmatmul.bf16.gmra.mxu0 %v369
    %v657 = vpop.f32.mrf.mxu0
    %v658 = vadd.f32 %v227, %v657
    %v659 = vpop.f32.mrf.mxu0
    %v660 = vadd.f32 %v227, %v659
    %661 = vmatmul.bf16.gmra.mxu0 %v372
    %v662 = vpop.f32.mrf.mxu0
    %v663 = vadd.f32 %v227, %v662
    %v664 = vpop.f32.mrf.mxu0
    %v665 = vadd.f32 %v227, %v664
    %666 = vmatmul.bf16.gmra.mxu0 %v375
    %v667 = vpop.f32.mrf.mxu0
    %v668 = vadd.f32 %v227, %v667
    %v669 = vpop.f32.mrf.mxu0
    %v670 = vadd.f32 %v227, %v669
    %671 = vmatmul.bf16.gmra.mxu0 %v378
    %v672 = vpop.f32.mrf.mxu0
    %v673 = vadd.f32 %v227, %v672
    %v674 = vpop.f32.mrf.mxu0
    %v675 = vadd.f32 %v227, %v674
    %676 = vmatmul.bf16.gmra.mxu0 %v381
    %v677 = vpop.f32.mrf.mxu0
    %v678 = vadd.f32 %v227, %v677
    %v679 = vpop.f32.mrf.mxu0
    %v680 = vadd.f32 %v227, %v679
    %681 = vmatmul.bf16.gmra.mxu0 %v384
    %v682 = vpop.f32.mrf.mxu0
    %v683 = vadd.f32 %v227, %v682
    %v684 = vpop.f32.mrf.mxu0
    %v685 = vadd.f32 %v227, %v684
    %686 = vmatmul.bf16.gmra.mxu0 %v387
    %v687 = vpop.f32.mrf.mxu0
    %v688 = vadd.f32 %v227, %v687
    %v689 = vpop.f32.mrf.mxu0
    %v690 = vadd.f32 %v227, %v689
    %691 = vmatmul.bf16.gmra.mxu0 %v390
    %v692 = vpop.f32.mrf.mxu0
    %v693 = vadd.f32 %v227, %v692
    %v694 = vpop.f32.mrf.mxu0
    %v695 = vadd.f32 %v227, %v694
    %696 = vmatmul.bf16.gmra.mxu0 %v393
    %v697 = vpop.f32.mrf.mxu0
    %v698 = vadd.f32 %v227, %v697
    %v699 = vpop.f32.mrf.mxu0
    %v700 = vadd.f32 %v227, %v699
    %701 = vmatmul.bf16.gmra.mxu0 %v396
    %v702 = vpop.f32.mrf.mxu0
    %v703 = vadd.f32 %v227, %v702
    %v704 = vpop.f32.mrf.mxu0
    %v705 = vadd.f32 %v227, %v704
    %706 = vmatmul.bf16.gmra.mxu0 %v399
    %v707 = vpop.f32.mrf.mxu0
    %v708 = vadd.f32 %v227, %v707
    %v709 = vpop.f32.mrf.mxu0
    %v710 = vadd.f32 %v227, %v709
    %711 = vmatmul.bf16.gmra.mxu0 %v402
    %v712 = vpop.f32.mrf.mxu0
    %v713 = vadd.f32 %v227, %v712
    %v714 = vpop.f32.mrf.mxu0
    %v715 = vadd.f32 %v227, %v714
    %716 = vmatmul.bf16.gmra.mxu0 %v405
    %v717 = vpop.f32.mrf.mxu0
    %v718 = vadd.f32 %v227, %v717
    %v719 = vpop.f32.mrf.mxu0
    %v720 = vadd.f32 %v227, %v719
    %721 = vmatmul.bf16.gmra.mxu0 %v408
    %v722 = vpop.f32.mrf.mxu0
    %v723 = vadd.f32 %v227, %v722
    %v724 = vpop.f32.mrf.mxu0
    %v725 = vadd.f32 %v227, %v724
    %726 = vmatmul.bf16.gmra.mxu0 %v411
    %v727 = vpop.f32.mrf.mxu0
    %v728 = vadd.f32 %v227, %v727
    %v729 = vpop.f32.mrf.mxu0
    %v730 = vadd.f32 %v227, %v729
    %731 = vmatmul.bf16.gmra.mxu0 %v414
    %v732 = vpop.f32.mrf.mxu0
    %v733 = vadd.f32 %v227, %v732
    %v734 = vpop.f32.mrf.mxu0
    %v735 = vadd.f32 %v227, %v734
    %736 = vmatmul.bf16.gmra.mxu0 %v417
    %v737 = vpop.f32.mrf.mxu0
    %v738 = vadd.f32 %v227, %v737
    %v739 = vpop.f32.mrf.mxu0
    %v740 = vadd.f32 %v227, %v739
    %741 = vmatmul.bf16.gmra.mxu0 %v420
    %v742 = vpop.f32.mrf.mxu0
    %v743 = vadd.f32 %v227, %v742
    %v744 = vpop.f32.mrf.mxu0
    %v745 = vadd.f32 %v227, %v744
    %746 = vmatmul.bf16.gmra.mxu0 %v423
    %v747 = vpop.f32.mrf.mxu0
    %v748 = vadd.f32 %v227, %v747
    %v749 = vpop.f32.mrf.mxu0
    %v750 = vadd.f32 %v227, %v749
    %751 = vmatmul.bf16.gmra.mxu0 %v426
    %v752 = vpop.f32.mrf.mxu0
    %v753 = vadd.f32 %v227, %v752
    %v754 = vpop.f32.mrf.mxu0
    %v755 = vadd.f32 %v227, %v754
    %756 = vdwg.mxu0
    %v757 = vmax.f32 %v438, 0.0
    %v758 = vmax.f32 %v440, 0.0
    %v759 = vmax.f32 %v443, 0.0
    %v760 = vmax.f32 %v445, 0.0
    %v761 = vmax.f32 %v448, 0.0
    %v762 = vmax.f32 %v450, 0.0
    %v763 = vmax.f32 %v453, 0.0
    %v764 = vmax.f32 %v455, 0.0
    %v765 = vmax.f32 %v458, 0.0
    %v766 = vmax.f32 %v460, 0.0
    %v767 = vmax.f32 %v463, 0.0
    %v768 = vmax.f32 %v465, 0.0
    %v769 = vmax.f32 %v468, 0.0
    %v770 = vmax.f32 %v470, 0.0
    %v771 = vmax.f32 %v473, 0.0
    %v772 = vmax.f32 %v475, 0.0
    %v773 = vmax.f32 %v478, 0.0
    %v774 = vmax.f32 %v480, 0.0
    %v775 = vmax.f32 %v483, 0.0
    %v776 = vmax.f32 %v485, 0.0
    %v777 = vmax.f32 %v488, 0.0
    %v778 = vmax.f32 %v490, 0.0
    %v779 = vmax.f32 %v493, 0.0
    %v780 = vmax.f32 %v495, 0.0
    %v781 = vmax.f32 %v498, 0.0
    %v782 = vmax.f32 %v500, 0.0
    %v783 = vmax.f32 %v503, 0.0
    %v784 = vmax.f32 %v505, 0.0
    %v785 = vmax.f32 %v508, 0.0
    %v786 = vmax.f32 %v510, 0.0
    %v787 = vmax.f32 %v513, 0.0
    %v788 = vmax.f32 %v515, 0.0
    %v789 = vmax.f32 %v518, 0.0
    %v790 = vmax.f32 %v520, 0.0
    %v791 = vmax.f32 %v523, 0.0
    %v792 = vmax.f32 %v525, 0.0
    %v793 = vmax.f32 %v528, 0.0
    %v794 = vmax.f32 %v530, 0.0
    %v795 = vmax.f32 %v533, 0.0
    %v796 = vmax.f32 %v535, 0.0
    %v797 = vmax.f32 %v538, 0.0
    %v798 = vmax.f32 %v540, 0.0
    %v799 = vmax.f32 %v543, 0.0
    %v800 = vmax.f32 %v545, 0.0
    %v801 = vmax.f32 %v548, 0.0
    %v802 = vmax.f32 %v550, 0.0
    %v803 = vmax.f32 %v553, 0.0
    %v804 = vmax.f32 %v555, 0.0
    %v805 = vmax.f32 %v558, 0.0
    %v806 = vmax.f32 %v560, 0.0
    %v807 = vmax.f32 %v563, 0.0
    %v808 = vmax.f32 %v565, 0.0
    %v809 = vmax.f32 %v568, 0.0
    %v810 = vmax.f32 %v570, 0.0
    %v811 = vmax.f32 %v573, 0.0
    %v812 = vmax.f32 %v575, 0.0
    %v813 = vmax.f32 %v578, 0.0
    %v814 = vmax.f32 %v580, 0.0
    %v815 = vmax.f32 %v583, 0.0
    %v816 = vmax.f32 %v585, 0.0
    %v817 = vmax.f32 %v588, 0.0
    %v818 = vmax.f32 %v590, 0.0
    %v819 = vmax.f32 %v593, 0.0
    %v820 = vmax.f32 %v595, 0.0
    %v821 = vmax.f32 %v598, 0.0
    %v822 = vmax.f32 %v600, 0.0
    %v823 = vmax.f32 %v603, 0.0
    %v824 = vmax.f32 %v605, 0.0
    %v825 = vmax.f32 %v608, 0.0
    %v826 = vmax.f32 %v610, 0.0
    %v827 = vmax.f32 %v613, 0.0
    %v828 = vmax.f32 %v615, 0.0
    %v829 = vmax.f32 %v618, 0.0
    %v830 = vmax.f32 %v620, 0.0
    %v831 = vmax.f32 %v623, 0.0
    %v832 = vmax.f32 %v625, 0.0
    %v833 = vmax.f32 %v628, 0.0
    %v834 = vmax.f32 %v630, 0.0
    %v835 = vmax.f32 %v633, 0.0
    %v836 = vmax.f32 %v635, 0.0
    %v837 = vmax.f32 %v638, 0.0
    %v838 = vmax.f32 %v640, 0.0
    %v839 = vmax.f32 %v643, 0.0
    %v840 = vmax.f32 %v645, 0.0
    %v841 = vmax.f32 %v648, 0.0
    %v842 = vmax.f32 %v650, 0.0
    %v843 = vmax.f32 %v653, 0.0
    %v844 = vmax.f32 %v655, 0.0
    %v845 = vmax.f32 %v658, 0.0
    %v846 = vmax.f32 %v660, 0.0
    %v847 = vmax.f32 %v663, 0.0
    %v848 = vmax.f32 %v665, 0.0
    %v849 = vmax.f32 %v668, 0.0
    %v850 = vmax.f32 %v670, 0.0
    %v851 = vmax.f32 %v673, 0.0
    %v852 = vmax.f32 %v675, 0.0
    %v853 = vmax.f32 %v678, 0.0
    %v854 = vmax.f32 %v680, 0.0
    %v855 = vmax.f32 %v683, 0.0
    %v856 = vmax.f32 %v685, 0.0
    %v857 = vmax.f32 %v688, 0.0
    %v858 = vmax.f32 %v690, 0.0
    %v859 = vmax.f32 %v693, 0.0
    %v860 = vmax.f32 %v695, 0.0
    %v861 = vmax.f32 %v698, 0.0
    %v862 = vmax.f32 %v700, 0.0
    %v863 = vmax.f32 %v703, 0.0
    %v864 = vmax.f32 %v705, 0.0
    %v865 = vmax.f32 %v708, 0.0
    %v866 = vmax.f32 %v710, 0.0
    %v867 = vmax.f32 %v713, 0.0
    %v868 = vmax.f32 %v715, 0.0
    %v869 = vmax.f32 %v718, 0.0
    %v870 = vmax.f32 %v720, 0.0
    %v871 = vmax.f32 %v723, 0.0
    %v872 = vmax.f32 %v725, 0.0
    %v873 = vmax.f32 %v728, 0.0
    %v874 = vmax.f32 %v730, 0.0
    %v875 = vmax.f32 %v733, 0.0
    %v876 = vmax.f32 %v735, 0.0
    %v877 = vmax.f32 %v738, 0.0
    %v878 = vmax.f32 %v740, 0.0
    %v879 = vmax.f32 %v743, 0.0
    %v880 = vmax.f32 %v745, 0.0
    %v881 = vmax.f32 %v748, 0.0
    %v882 = vmax.f32 %v750, 0.0
    %v883 = vmax.f32 %v753, 0.0
    %v884 = vmax.f32 %v755, 0.0
    %v885 = vpack.c.bf16 %v757, %v757
    %v886 = vpack.c.bf16 %v758, %v758
    %v887 = vpack.c.bf16 %v759, %v759
    %v888 = vpack.c.bf16 %v760, %v760
    %v889 = vpack.c.bf16 %v761, %v761
    %v890 = vpack.c.bf16 %v762, %v762
    %v891 = vpack.c.bf16 %v763, %v763
    %v892 = vpack.c.bf16 %v764, %v764
    %v893 = vpack.c.bf16 %v765, %v765
    %v894 = vpack.c.bf16 %v766, %v766
    %v895 = vpack.c.bf16 %v767, %v767
    %v896 = vpack.c.bf16 %v768, %v768
    %v897 = vpack.c.bf16 %v769, %v769
    %v898 = vpack.c.bf16 %v770, %v770
    %v899 = vpack.c.bf16 %v771, %v771
    %v900 = vpack.c.bf16 %v772, %v772
    %v901 = vpack.c.bf16 %v773, %v773
    %v902 = vpack.c.bf16 %v774, %v774
    %v903 = vpack.c.bf16 %v775, %v775
    %v904 = vpack.c.bf16 %v776, %v776
    %v905 = vpack.c.bf16 %v777, %v777
    %v906 = vpack.c.bf16 %v778, %v778
    %v907 = vpack.c.bf16 %v779, %v779
    %v908 = vpack.c.bf16 %v780, %v780
    %v909 = vpack.c.bf16 %v781, %v781
    %v910 = vpack.c.bf16 %v782, %v782
    %v911 = vpack.c.bf16 %v783, %v783
    %v912 = vpack.c.bf16 %v784, %v784
    %v913 = vpack.c.bf16 %v785, %v785
    %v914 = vpack.c.bf16 %v786, %v786
    %v915 = vpack.c.bf16 %v787, %v787
    %v916 = vpack.c.bf16 %v788, %v788
    %v917 = vpack.c.bf16 %v789, %v789
    %v918 = vpack.c.bf16 %v790, %v790
    %v919 = vpack.c.bf16 %v791, %v791
    %v920 = vpack.c.bf16 %v792, %v792
    %v921 = vpack.c.bf16 %v793, %v793
    %v922 = vpack.c.bf16 %v794, %v794
    %v923 = vpack.c.bf16 %v795, %v795
    %v924 = vpack.c.bf16 %v796, %v796
    %v925 = vpack.c.bf16 %v797, %v797
    %v926 = vpack.c.bf16 %v798, %v798
    %v927 = vpack.c.bf16 %v799, %v799
    %v928 = vpack.c.bf16 %v800, %v800
    %v929 = vpack.c.bf16 %v801, %v801
    %v930 = vpack.c.bf16 %v802, %v802
    %v931 = vpack.c.bf16 %v803, %v803
    %v932 = vpack.c.bf16 %v804, %v804
    %v933 = vpack.c.bf16 %v805, %v805
    %v934 = vpack.c.bf16 %v806, %v806
    %v935 = vpack.c.bf16 %v807, %v807
    %v936 = vpack.c.bf16 %v808, %v808
    %v937 = vpack.c.bf16 %v809, %v809
    %v938 = vpack.c.bf16 %v810, %v810
    %v939 = vpack.c.bf16 %v811, %v811
    %v940 = vpack.c.bf16 %v812, %v812
    %v941 = vpack.c.bf16 %v813, %v813
    %v942 = vpack.c.bf16 %v814, %v814
    %v943 = vpack.c.bf16 %v815, %v815
    %v944 = vpack.c.bf16 %v816, %v816
    %v945 = vpack.c.bf16 %v817, %v817
    %v946 = vpack.c.bf16 %v818, %v818
    %v947 = vpack.c.bf16 %v819, %v819
    %v948 = vpack.c.bf16 %v820, %v820
    %v949 = vpack.c.bf16 %v821, %v821
    %v950 = vpack.c.bf16 %v822, %v822
    %v951 = vpack.c.bf16 %v823, %v823
    %v952 = vpack.c.bf16 %v824, %v824
    %v953 = vpack.c.bf16 %v825, %v825
    %v954 = vpack.c.bf16 %v826, %v826
    %v955 = vpack.c.bf16 %v827, %v827
    %v956 = vpack.c.bf16 %v828, %v828
    %v957 = vpack.c.bf16 %v829, %v829
    %v958 = vpack.c.bf16 %v830, %v830
    %v959 = vpack.c.bf16 %v831, %v831
    %v960 = vpack.c.bf16 %v832, %v832
    %v961 = vpack.c.bf16 %v833, %v833
    %v962 = vpack.c.bf16 %v834, %v834
    %v963 = vpack.c.bf16 %v835, %v835
    %v964 = vpack.c.bf16 %v836, %v836
    %v965 = vpack.c.bf16 %v837, %v837
    %v966 = vpack.c.bf16 %v838, %v838
    %v967 = vpack.c.bf16 %v839, %v839
    %v968 = vpack.c.bf16 %v840, %v840
    %v969 = vpack.c.bf16 %v841, %v841
    %v970 = vpack.c.bf16 %v842, %v842
    %v971 = vpack.c.bf16 %v843, %v843
    %v972 = vpack.c.bf16 %v844, %v844
    %v973 = vpack.c.bf16 %v845, %v845
    %v974 = vpack.c.bf16 %v846, %v846
    %v975 = vpack.c.bf16 %v847, %v847
    %v976 = vpack.c.bf16 %v848, %v848
    %v977 = vpack.c.bf16 %v849, %v849
    %v978 = vpack.c.bf16 %v850, %v850
    %v979 = vpack.c.bf16 %v851, %v851
    %v980 = vpack.c.bf16 %v852, %v852
    %v981 = vpack.c.bf16 %v853, %v853
    %v982 = vpack.c.bf16 %v854, %v854
    %v983 = vpack.c.bf16 %v855, %v855
    %v984 = vpack.c.bf16 %v856, %v856
    %v985 = vpack.c.bf16 %v857, %v857
    %v986 = vpack.c.bf16 %v858, %v858
    %v987 = vpack.c.bf16 %v859, %v859
    %v988 = vpack.c.bf16 %v860, %v860
    %v989 = vpack.c.bf16 %v861, %v861
    %v990 = vpack.c.bf16 %v862, %v862
    %v991 = vpack.c.bf16 %v863, %v863
    %v992 = vpack.c.bf16 %v864, %v864
    %v993 = vpack.c.bf16 %v865, %v865
    %v994 = vpack.c.bf16 %v866, %v866
    %v995 = vpack.c.bf16 %v867, %v867
    %v996 = vpack.c.bf16 %v868, %v868
    %v997 = vpack.c.bf16 %v869, %v869
    %v998 = vpack.c.bf16 %v870, %v870
    %v999 = vpack.c.bf16 %v871, %v871
    %v1000 = vpack.c.bf16 %v872, %v872
    %v1001 = vpack.c.bf16 %v873, %v873
    %v1002 = vpack.c.bf16 %v874, %v874
    %v1003 = vpack.c.bf16 %v875, %v875
    %v1004 = vpack.c.bf16 %v876, %v876
    %v1005 = vpack.c.bf16 %v877, %v877
    %v1006 = vpack.c.bf16 %v878, %v878
    %v1007 = vpack.c.bf16 %v879, %v879
    %v1008 = vpack.c.bf16 %v880, %v880
    %v1009 = vpack.c.bf16 %v881, %v881
    %v1010 = vpack.c.bf16 %v882, %v882
    %v1011 = vpack.c.bf16 %v883, %v883
    %v1012 = vpack.c.bf16 %v884, %v884
    %vm1013 = vcmask 27648
    %1014 = vst.msk [vmem:[%s3] sm:$0xf] %vm1013, %v885
    %1015 = vst.msk [vmem:[%s3 + $0x4] sm:$0xf] %vm1013, %v886
    %1016 = vst.msk [vmem:[%s3 + $0x8] sm:$0xf] %vm1013, %v887
    %1017 = vst.msk [vmem:[%s3 + $0xc] sm:$0xf] %vm1013, %v888
    %1018 = vst.msk [vmem:[%s3 + $0x10] sm:$0xf] %vm1013, %v889
    %1019 = vst.msk [vmem:[%s3 + $0x14] sm:$0xf] %vm1013, %v890
    %1020 = vst.msk [vmem:[%s3 + $0x18] sm:$0xf] %vm1013, %v891
    %1021 = vst.msk [vmem:[%s3 + $0x1c] sm:$0xf] %vm1013, %v892
    %1022 = vst.msk [vmem:[%s3 + $0x20] sm:$0xf] %vm1013, %v893
    %1023 = vst.msk [vmem:[%s3 + $0x24] sm:$0xf] %vm1013, %v894
    %1024 = vst.msk [vmem:[%s3 + $0x28] sm:$0xf] %vm1013, %v895
    %1025 = vst.msk [vmem:[%s3 + $0x2c] sm:$0xf] %vm1013, %v896
    %1026 = vst.msk [vmem:[%s3 + $0x30] sm:$0xf] %vm1013, %v897
    %1027 = vst.msk [vmem:[%s3 + $0x34] sm:$0xf] %vm1013, %v898
    %1028 = vst.msk [vmem:[%s3 + $0x38] sm:$0xf] %vm1013, %v899
    %1029 = vst.msk [vmem:[%s3 + $0x3c] sm:$0xf] %vm1013, %v900
    %1030 = vst.msk [vmem:[%s3 + $0x40] sm:$0xf] %vm1013, %v901
    %1031 = vst.msk [vmem:[%s3 + $0x44] sm:$0xf] %vm1013, %v902
    %1032 = vst.msk [vmem:[%s3 + $0x48] sm:$0xf] %vm1013, %v903
    %1033 = vst.msk [vmem:[%s3 + $0x4c] sm:$0xf] %vm1013, %v904
    %1034 = vst.msk [vmem:[%s3 + $0x50] sm:$0xf] %vm1013, %v905
    %1035 = vst.msk [vmem:[%s3 + $0x54] sm:$0xf] %vm1013, %v906
    %1036 = vst.msk [vmem:[%s3 + $0x58] sm:$0xf] %vm1013, %v907
    %1037 = vst.msk [vmem:[%s3 + $0x5c] sm:$0xf] %vm1013, %v908
    %1038 = vst.msk [vmem:[%s3 + $0x60] sm:$0xf] %vm1013, %v909
    %1039 = vst.msk [vmem:[%s3 + $0x64] sm:$0xf] %vm1013, %v910
    %1040 = vst.msk [vmem:[%s3 + $0x68] sm:$0xf] %vm1013, %v911
    %1041 = vst.msk [vmem:[%s3 + $0x6c] sm:$0xf] %vm1013, %v912
    %1042 = vst.msk [vmem:[%s3 + $0x70] sm:$0xf] %vm1013, %v913
    %1043 = vst.msk [vmem:[%s3 + $0x74] sm:$0xf] %vm1013, %v914
    %1044 = vst.msk [vmem:[%s3 + $0x78] sm:$0xf] %vm1013, %v915
    %1045 = vst.msk [vmem:[%s3 + $0x7c] sm:$0xf] %vm1013, %v916
    %1046 = vst.msk [vmem:[%s3 + $0x80] sm:$0xf] %vm1013, %v917
    %1047 = vst.msk [vmem:[%s3 + $0x84] sm:$0xf] %vm1013, %v918
    %1048 = vst.msk [vmem:[%s3 + $0x88] sm:$0xf] %vm1013, %v919
    %1049 = vst.msk [vmem:[%s3 + $0x8c] sm:$0xf] %vm1013, %v920
    %1050 = vst.msk [vmem:[%s3 + $0x90] sm:$0xf] %vm1013, %v921
    %1051 = vst.msk [vmem:[%s3 + $0x94] sm:$0xf] %vm1013, %v922
    %1052 = vst.msk [vmem:[%s3 + $0x98] sm:$0xf] %vm1013, %v923
    %1053 = vst.msk [vmem:[%s3 + $0x9c] sm:$0xf] %vm1013, %v924
    %1054 = vst.msk [vmem:[%s3 + $0xa0] sm:$0xf] %vm1013, %v925
    %1055 = vst.msk [vmem:[%s3 + $0xa4] sm:$0xf] %vm1013, %v926
    %1056 = vst.msk [vmem:[%s3 + $0xa8] sm:$0xf] %vm1013, %v927
    %1057 = vst.msk [vmem:[%s3 + $0xac] sm:$0xf] %vm1013, %v928
    %1058 = vst.msk [vmem:[%s3 + $0xb0] sm:$0xf] %vm1013, %v929
    %1059 = vst.msk [vmem:[%s3 + $0xb4] sm:$0xf] %vm1013, %v930
    %1060 = vst.msk [vmem:[%s3 + $0xb8] sm:$0xf] %vm1013, %v931
    %1061 = vst.msk [vmem:[%s3 + $0xbc] sm:$0xf] %vm1013, %v932
    %1062 = vst.msk [vmem:[%s3 + $0xc0] sm:$0xf] %vm1013, %v933
    %1063 = vst.msk [vmem:[%s3 + $0xc4] sm:$0xf] %vm1013, %v934
    %1064 = vst.msk [vmem:[%s3 + $0xc8] sm:$0xf] %vm1013, %v935
    %1065 = vst.msk [vmem:[%s3 + $0xcc] sm:$0xf] %vm1013, %v936
    %1066 = vst.msk [vmem:[%s3 + $0xd0] sm:$0xf] %vm1013, %v937
    %1067 = vst.msk [vmem:[%s3 + $0xd4] sm:$0xf] %vm1013, %v938
    %1068 = vst.msk [vmem:[%s3 + $0xd8] sm:$0xf] %vm1013, %v939
    %1069 = vst.msk [vmem:[%s3 + $0xdc] sm:$0xf] %vm1013, %v940
    %1070 = vst.msk [vmem:[%s3 + $0xe0] sm:$0xf] %vm1013, %v941
    %1071 = vst.msk [vmem:[%s3 + $0xe4] sm:$0xf] %vm1013, %v942
    %1072 = vst.msk [vmem:[%s3 + $0xe8] sm:$0xf] %vm1013, %v943
    %1073 = vst.msk [vmem:[%s3 + $0xec] sm:$0xf] %vm1013, %v944
    %1074 = vst.msk [vmem:[%s3 + $0xf0] sm:$0xf] %vm1013, %v945
    %1075 = vst.msk [vmem:[%s3 + $0xf4] sm:$0xf] %vm1013, %v946
    %1076 = vst.msk [vmem:[%s3 + $0xf8] sm:$0xf] %vm1013, %v947
    %1077 = vst.msk [vmem:[%s3 + $0xfc] sm:$0xf] %vm1013, %v948
    %1078 = vst.msk [vmem:[%s3 + $0x100] sm:$0xf] %vm1013, %v949
    %1079 = vst.msk [vmem:[%s3 + $0x104] sm:$0xf] %vm1013, %v950
    %1080 = vst.msk [vmem:[%s3 + $0x108] sm:$0xf] %vm1013, %v951
    %1081 = vst.msk [vmem:[%s3 + $0x10c] sm:$0xf] %vm1013, %v952
    %1082 = vst.msk [vmem:[%s3 + $0x110] sm:$0xf] %vm1013, %v953
    %1083 = vst.msk [vmem:[%s3 + $0x114] sm:$0xf] %vm1013, %v954
    %1084 = vst.msk [vmem:[%s3 + $0x118] sm:$0xf] %vm1013, %v955
    %1085 = vst.msk [vmem:[%s3 + $0x11c] sm:$0xf] %vm1013, %v956
    %1086 = vst.msk [vmem:[%s3 + $0x120] sm:$0xf] %vm1013, %v957
    %1087 = vst.msk [vmem:[%s3 + $0x124] sm:$0xf] %vm1013, %v958
    %1088 = vst.msk [vmem:[%s3 + $0x128] sm:$0xf] %vm1013, %v959
    %1089 = vst.msk [vmem:[%s3 + $0x12c] sm:$0xf] %vm1013, %v960
    %1090 = vst.msk [vmem:[%s3 + $0x130] sm:$0xf] %vm1013, %v961
    %1091 = vst.msk [vmem:[%s3 + $0x134] sm:$0xf] %vm1013, %v962
    %1092 = vst.msk [vmem:[%s3 + $0x138] sm:$0xf] %vm1013, %v963
    %1093 = vst.msk [vmem:[%s3 + $0x13c] sm:$0xf] %vm1013, %v964
    %1094 = vst.msk [vmem:[%s3 + $0x140] sm:$0xf] %vm1013, %v965
    %1095 = vst.msk [vmem:[%s3 + $0x144] sm:$0xf] %vm1013, %v966
    %1096 = vst.msk [vmem:[%s3 + $0x148] sm:$0xf] %vm1013, %v967
    %1097 = vst.msk [vmem:[%s3 + $0x14c] sm:$0xf] %vm1013, %v968
    %1098 = vst.msk [vmem:[%s3 + $0x150] sm:$0xf] %vm1013, %v969
    %1099 = vst.msk [vmem:[%s3 + $0x154] sm:$0xf] %vm1013, %v970
    %1100 = vst.msk [vmem:[%s3 + $0x158] sm:$0xf] %vm1013, %v971
    %1101 = vst.msk [vmem:[%s3 + $0x15c] sm:$0xf] %vm1013, %v972
    %1102 = vst.msk [vmem:[%s3 + $0x160] sm:$0xf] %vm1013, %v973
    %1103 = vst.msk [vmem:[%s3 + $0x164] sm:$0xf] %vm1013, %v974
    %1104 = vst.msk [vmem:[%s3 + $0x168] sm:$0xf] %vm1013, %v975
    %1105 = vst.msk [vmem:[%s3 + $0x16c] sm:$0xf] %vm1013, %v976
    %1106 = vst.msk [vmem:[%s3 + $0x170] sm:$0xf] %vm1013, %v977
    %1107 = vst.msk [vmem:[%s3 + $0x174] sm:$0xf] %vm1013, %v978
    %1108 = vst.msk [vmem:[%s3 + $0x178] sm:$0xf] %vm1013, %v979
    %1109 = vst.msk [vmem:[%s3 + $0x17c] sm:$0xf] %vm1013, %v980
    %1110 = vst.msk [vmem:[%s3 + $0x180] sm:$0xf] %vm1013, %v981
    %1111 = vst.msk [vmem:[%s3 + $0x184] sm:$0xf] %vm1013, %v982
    %1112 = vst.msk [vmem:[%s3 + $0x188] sm:$0xf] %vm1013, %v983
    %1113 = vst.msk [vmem:[%s3 + $0x18c] sm:$0xf] %vm1013, %v984
    %1114 = vst.msk [vmem:[%s3 + $0x190] sm:$0xf] %vm1013, %v985
    %1115 = vst.msk [vmem:[%s3 + $0x194] sm:$0xf] %vm1013, %v986
    %1116 = vst.msk [vmem:[%s3 + $0x198] sm:$0xf] %vm1013, %v987
    %1117 = vst.msk [vmem:[%s3 + $0x19c] sm:$0xf] %vm1013, %v988
    %1118 = vst.msk [vmem:[%s3 + $0x1a0] sm:$0xf] %vm1013, %v989
    %1119 = vst.msk [vmem:[%s3 + $0x1a4] sm:$0xf] %vm1013, %v990
    %1120 = vst.msk [vmem:[%s3 + $0x1a8] sm:$0xf] %vm1013, %v991
    %1121 = vst.msk [vmem:[%s3 + $0x1ac] sm:$0xf] %vm1013, %v992
    %1122 = vst.msk [vmem:[%s3 + $0x1b0] sm:$0xf] %vm1013, %v993
    %1123 = vst.msk [vmem:[%s3 + $0x1b4] sm:$0xf] %vm1013, %v994
    %1124 = vst.msk [vmem:[%s3 + $0x1b8] sm:$0xf] %vm1013, %v995
    %1125 = vst.msk [vmem:[%s3 + $0x1bc] sm:$0xf] %vm1013, %v996
    %1126 = vst.msk [vmem:[%s3 + $0x1c0] sm:$0xf] %vm1013, %v997
    %1127 = vst.msk [vmem:[%s3 + $0x1c4] sm:$0xf] %vm1013, %v998
    %1128 = vst.msk [vmem:[%s3 + $0x1c8] sm:$0xf] %vm1013, %v999
    %1129 = vst.msk [vmem:[%s3 + $0x1cc] sm:$0xf] %vm1013, %v1000
    %1130 = vst.msk [vmem:[%s3 + $0x1d0] sm:$0xf] %vm1013, %v1001
    %1131 = vst.msk [vmem:[%s3 + $0x1d4] sm:$0xf] %vm1013, %v1002
    %1132 = vst.msk [vmem:[%s3 + $0x1d8] sm:$0xf] %vm1013, %v1003
    %1133 = vst.msk [vmem:[%s3 + $0x1dc] sm:$0xf] %vm1013, %v1004
    %1134 = vst.msk [vmem:[%s3 + $0x1e0] sm:$0xf] %vm1013, %v1005
    %1135 = vst.msk [vmem:[%s3 + $0x1e4] sm:$0xf] %vm1013, %v1006
    %1136 = vst.msk [vmem:[%s3 + $0x1e8] sm:$0xf] %vm1013, %v1007
    %1137 = vst.msk [vmem:[%s3 + $0x1ec] sm:$0xf] %vm1013, %v1008
    %1138 = vst.msk [vmem:[%s3 + $0x1f0] sm:$0xf] %vm1013, %v1009
    %1139 = vst.msk [vmem:[%s3 + $0x1f4] sm:$0xf] %vm1013, %v1010
    %1140 = vst.msk [vmem:[%s3 + $0x1f8] sm:$0xf] %vm1013, %v1011
    %1141 = vst.msk [vmem:[%s3 + $0x1fc] sm:$0xf] %vm1013, %v1012
    // Predicated region
    $region18: #{bottleneck_forward.2} parent=1 // pred_check
      _
    $region19: #{bottleneck_forward.2} parent=1 // pred_check_branch
      %1143 = sbr.rel (0) target = $region21
    $region20: #{bottleneck_forward.2} parent=1 // pred_region
      _
    $region21: #{bottleneck_forward.2} parent=1 // pred_fallthru
      _
    // Predicated region
    $region22: #{bottleneck_forward.2} parent=1 // pred_check
      _
    $region23: #{bottleneck_forward.2} parent=1 // pred_check_branch
      %1145 = sbr.rel (0) target = $region25
    $region24: #{bottleneck_forward.2} parent=1 // pred_region
      _
    $region25: #{bottleneck_forward.2} parent=1 // pred_fallthru
      _
    %1146 = vsyncpa [#allocation3], 1

// kernel: bottleneck_forward.3
$region0: #{bottleneck_forward.3}
  #allocation0 [shape = 'u32[]', space=smem, size = 0x4, offset = 0x4, fixed_abs, tag = 'smem constant byte address 0x4 - core index']
  #allocation1 [shape = 'u32[72,128]{1,0:T(1,128)}', space=vmem, size = 0x9000, scoped, tag = 'internal scratch']
  #allocation2 [shape = 'bf16[3,10,10,4]{3,2,1,0:T(8,128)(2,1)}', space=vmem, size = 0x1e000, scoped, tag = 'scratch operand']
  %s0 = inlined_call_operand.vmem [shape: bf16[2,8,8,8,4], index: 0, kind: input, shape index: {}, may-alias: {0,1,2}]
  %s1 = inlined_call_operand.vmem [shape: bf16[2,8,8,8,4], index: 1, kind: input, shape index: {}, may-alias: {0,1,2}]
  %s2 = inlined_call_operand.vmem [shape: bf16[2,8,8,8,4], index: 2, kind: input, shape index: {}, may-alias: {0,1,2}]
  %s3 = inlined_call_operand.vmem [shape: bf16[3,9,4,4], index: 3, kind: input, shape index: {}]
  %s4 = inlined_call_operand.vmem [shape: f32[1,4], index: 4, kind: input, shape index: {}]
  %s5 = inlined_call_operand.vmem [shape: bf16[4,16], index: 5, kind: input, shape index: {}]
  %s6 = inlined_call_operand.vmem [shape: f32[1,16], index: 6, kind: input, shape index: {}]
  %s7 = inlined_call_operand.hbm [shape: f32[2,8,64,16], index: 7, kind: input, shape index: {}]
  %s8 = inlined_call_operand.hbm [shape: f32[2,8,64,16], index: 8, kind: output, shape index: {}]
  %s9 = sld [smem:[#allocation0]]
  $region77: #{bottleneck_forward.3} parent=0
    _
  %s11 = ssub.s32 1, %s9
  %s12 = scalar_select 0, %s11, %s9
  $region1: #{bottleneck_forward.3} parent=0
    #allocation3 [shape = 'u8[65536]{0}', space=vmem, size = 0x10000, scoped, tag = 'input window, operand 7']
    #allocation4 [shape = 's32[2]{0}', space=sflag, size = 0x8, scoped, tag = 'scoped memory for bottleneck_forward.3']
    #allocation5 [shape = 's32[2]{0}', space=sflag, size = 0x8, scoped, tag = 'scoped memory for bottleneck_forward.3']
    #allocation6 [shape = 'u8[65536]{0}', space=vmem, size = 0x10000, scoped, tag = 'output window, operand 0']
    %13 = vsyncpa [#allocation4], 0
    %s14 = scalar_lea.sflag [#allocation4], 1
    %15 = vsyncpa %s14, 0
    %16 = vsyncpa [#allocation5], 0
    %s17 = scalar_lea.sflag [#allocation5], 1
    %18 = vsyncpa %s17, 0
    loop: start=0, step=1, limit=18
    $region2: #{bottleneck_forward.3} parent=1 // loop_pre_header
      _
    $region3: #{bottleneck_forward.3} parent=1 // loop_header
      %s20 = sphi 0, %s24
      %p21 = scmp.ge.s32.totalorder %s20, 18
      %s27 = sphi 0, %s39
      %s28 = sphi 0, %s35
      %s29 = sphi 0, %s27
      %s30 = sphi 0, %s28
      %s31 = sphi 0, %s29
      %s32 = sphi 0, %s30
      %s50 = sphi 0, %s52
      %s53 = sphi 0, %s50
      %s54 = sphi 0, %s53
      %s70 = sphi 0, %s54
      %s78 = sphi 0, %s80
      %s81 = sphi 0, %s78
      %s82 = sphi 0, %s81
      %s98 = sphi 0, %s82
      %s112 = sphi 0, %s114
      %s115 = sphi 0, %s112
      %s116 = sphi 0, %s115
      %s132 = sphi 0, %s116
      %s136 = sphi 0, %s136
      %s138 = sphi 0, %s136
      %s139 = sphi 0, %s138
      %s153 = sphi 0, %s139
      %s157 = sphi 0, %s157
      %s159 = sphi 0, %s157
      %s160 = sphi 0, %s159
      %s174 = sphi 0, %s160
      %s178 = sphi 0, %s178
      %s180 = sphi 0, %s178
      %s181 = sphi 0, %s180
      %s195 = sphi 0, %s181
      %s199 = sphi 0, %s199
      %s201 = sphi 0, %s199
      %s202 = sphi 0, %s201
      %s216 = sphi 0, %s202
      %s224 = sphi 0, %s226
      %s227 = sphi 0, %s224
      %s228 = sphi 0, %s227
      %s244 = sphi 0, %s228
      %s252 = sphi 0, %s254
      %s255 = sphi 0, %s252
      %s256 = sphi 0, %s255
      %s272 = sphi 0, %s256
    $region4: #{bottleneck_forward.3} parent=1 // loop_header_branch
      %23 = sbr.rel (%p21) target = $region8
    $region5: #{bottleneck_forward.3} parent=1 // loop_body
      %s25 = ssub.s32 %s20, 1
      %s26 = ssub.s32 %s20, 2
      %s33 = sadd.s32 1, %s28
      %p34 = scmp.ge.s32.totalorder %s33, 8
      %s35 = scalar_select %p34, 0, %s33
      %s36 = sadd.s32 1, %s27
      %s37 = scalar_select %p34, %s36, %s27
      %p38 = scmp.ge.s32.totalorder %s37, 2
      %s39 = scalar_select %p38, 0, %s37
      %s40 = ssub.s32 %s28, 1
      %p41 = scmp.gt.s32.totalorder %s40, 0
      %s42 = scalar_select %p41, %s40, 0
      %s43 = ssub.s32 %s35, 1
      %p44 = scmp.gt.s32.totalorder %s43, 0
      %s45 = scalar_select %p44, %s43, 0
      %s46 = ssub.s32 %s27, %s39
      %s47 = ssub.s32 %s42, %s45
      %s48 = sor.u32 %s46, %s47
      %p49 = scmp.eq.s32.totalorder %s48, 0
      %s51 = sadd.s32 %s50, 1
      %s52 = scalar_select %p49, %s50, %s51
      %p55 = pneg %p49
      %p56 = scmp.eq.s32.totalorder %s20, 15
      %p57 = por %p55, %p56
      %p58 = scmp.ne.s32.totalorder %s50, %s53
      %p59 = scmp.eq.s32.totalorder %s20, 0
      %p60 = por %p58, %p59
      %p61 = scmp.ne.s32.totalorder %s50, %s53
      %p62 = scmp.eq.s32.totalorder %s25, 15
      %p63 = por %p61, %p62
      %p64 = scmp.ne.s32.totalorder %s53, %s54
      %p65 = scmp.eq.s32.totalorder %s25, 0
      %p66 = por %p64, %p65
      %p67 = scmp.ne.s32.totalorder %s53, %s54
      %p68 = scmp.eq.s32.totalorder %s26, 15
      %p69 = por %p67, %p68
      %p71 = scmp.ne.s32.totalorder %s54, %s70
      %p72 = scmp.eq.s32.totalorder %s26, 0
      %p73 = por %p71, %p72
      %s74 = ssub.s32 %s27, %s39
      %s75 = ssub.s32 %s28, %s35
      %s76 = sor.u32 %s74, %s75
      %p77 = scmp.eq.s32.totalorder %s76, 0
      %s79 = sadd.s32 %s78, 1
      %s80 = scalar_select %p77, %s78, %s79
      %p83 = pneg %p77
      %p84 = scmp.eq.s32.totalorder %s20, 15
      %p85 = por %p83, %p84
      %p86 = scmp.ne.s32.totalorder %s78, %s81
      %p87 = scmp.eq.s32.totalorder %s20, 0
      %p88 = por %p86, %p87
      %p89 = scmp.ne.s32.totalorder %s78, %s81
      %p90 = scmp.eq.s32.totalorder %s25, 15
      %p91 = por %p89, %p90
      %p92 = scmp.ne.s32.totalorder %s81, %s82
      %p93 = scmp.eq.s32.totalorder %s25, 0
      %p94 = por %p92, %p93
      %p95 = scmp.ne.s32.totalorder %s81, %s82
      %p96 = scmp.eq.s32.totalorder %s26, 15
      %p97 = por %p95, %p96
      %p99 = scmp.ne.s32.totalorder %s82, %s98
      %p100 = scmp.eq.s32.totalorder %s26, 0
      %p101 = por %p99, %p100
      %s102 = sadd.s32 %s28, 1
      %p103 = scmp.lt.s32.totalorder %s102, 7
      %s104 = scalar_select %p103, %s102, 7
      %s105 = sadd.s32 %s35, 1
      %p106 = scmp.lt.s32.totalorder %s105, 7
      %s107 = scalar_select %p106, %s105, 7
      %s108 = ssub.s32 %s27, %s39
      %s109 = ssub.s32 %s104, %s107
      %s110 = sor.u32 %s108, %s109
      %p111 = scmp.eq.s32.totalorder %s110, 0
      %s113 = sadd.s32 %s112, 1
      %s114 = scalar_select %p111, %s112, %s113
      %p117 = pneg %p111
      %p118 = scmp.eq.s32.totalorder %s20, 15
      %p119 = por %p117, %p118
      %p120 = scmp.ne.s32.totalorder %s112, %s115
      %p121 = scmp.eq.s32.totalorder %s20, 0
      %p122 = por %p120, %p121
      %p123 = scmp.ne.s32.totalorder %s112, %s115
      %p124 = scmp.eq.s32.totalorder %s25, 15
      %p125 = por %p123, %p124
      %p126 = scmp.ne.s32.totalorder %s115, %s116
      %p127 = scmp.eq.s32.totalorder %s25, 0
      %p128 = por %p126, %p127
      %p129 = scmp.ne.s32.totalorder %s115, %s116
      %p130 = scmp.eq.s32.totalorder %s26, 15
      %p131 = por %p129, %p130
      %p133 = scmp.ne.s32.totalorder %s116, %s132
      %p134 = scmp.eq.s32.totalorder %s26, 0
      %p135 = por %p133, %p134
      %s137 = sadd.s32 %s136, 1
      %p140 = scmp.eq.s32.totalorder %s20, 15
      %p141 = scmp.ne.s32.totalorder %s136, %s138
      %p142 = scmp.eq.s32.totalorder %s20, 0
      %p143 = por %p141, %p142
      %p144 = scmp.ne.s32.totalorder %s136, %s138
      %p145 = scmp.eq.s32.totalorder %s25, 15
      %p146 = por %p144, %p145
      %p147 = scmp.ne.s32.totalorder %s138, %s139
      %p148 = scmp.eq.s32.totalorder %s25, 0
      %p149 = por %p147, %p148
      %p150 = scmp.ne.s32.totalorder %s138, %s139
      %p151 = scmp.eq.s32.totalorder %s26, 15
      %p152 = por %p150, %p151
      %p154 = scmp.ne.s32.totalorder %s139, %s153
      %p155 = scmp.eq.s32.totalorder %s26, 0
      %p156 = por %p154, %p155
      %s158 = sadd.s32 %s157, 1
      %p161 = scmp.eq.s32.totalorder %s20, 15
      %p162 = scmp.ne.s32.totalorder %s157, %s159
      %p163 = scmp.eq.s32.totalorder %s20, 0
      %p164 = por %p162, %p163
      %p165 = scmp.ne.s32.totalorder %s157, %s159
      %p166 = scmp.eq.s32.totalorder %s25, 15
      %p167 = por %p165, %p166
      %p168 = scmp.ne.s32.totalorder %s159, %s160
      %p169 = scmp.eq.s32.totalorder %s25, 0
      %p170 = por %p168, %p169
      %p171 = scmp.ne.s32.totalorder %s159, %s160
      %p172 = scmp.eq.s32.totalorder %s26, 15
      %p173 = por %p171, %p172
      %p175 = scmp.ne.s32.totalorder %s160, %s174
      %p176 = scmp.eq.s32.totalorder %s26, 0
      %p177 = por %p175, %p176
      %s179 = sadd.s32 %s178, 1
      %p182 = scmp.eq.s32.totalorder %s20, 15
      %p183 = scmp.ne.s32.totalorder %s178, %s180
      %p184 = scmp.eq.s32.totalorder %s20, 0
      %p185 = por %p183, %p184
      %p186 = scmp.ne.s32.totalorder %s178, %s180
      %p187 = scmp.eq.s32.totalorder %s25, 15
      %p188 = por %p186, %p187
      %p189 = scmp.ne.s32.totalorder %s180, %s181
      %p190 = scmp.eq.s32.totalorder %s25, 0
      %p191 = por %p189, %p190
      %p192 = scmp.ne.s32.totalorder %s180, %s181
      %p193 = scmp.eq.s32.totalorder %s26, 15
      %p194 = por %p192, %p193
      %p196 = scmp.ne.s32.totalorder %s181, %s195
      %p197 = scmp.eq.s32.totalorder %s26, 0
      %p198 = por %p196, %p197
      %s200 = sadd.s32 %s199, 1
      %p203 = scmp.eq.s32.totalorder %s20, 15
      %p204 = scmp.ne.s32.totalorder %s199, %s201
      %p205 = scmp.eq.s32.totalorder %s20, 0
      %p206 = por %p204, %p205
      %p207 = scmp.ne.s32.totalorder %s199, %s201
      %p208 = scmp.eq.s32.totalorder %s25, 15
      %p209 = por %p207, %p208
      %p210 = scmp.ne.s32.totalorder %s201, %s202
      %p211 = scmp.eq.s32.totalorder %s25, 0
      %p212 = por %p210, %p211
      %p213 = scmp.ne.s32.totalorder %s201, %s202
      %p214 = scmp.eq.s32.totalorder %s26, 15
      %p215 = por %p213, %p214
      %p217 = scmp.ne.s32.totalorder %s202, %s216
      %p218 = scmp.eq.s32.totalorder %s26, 0
      %p219 = por %p217, %p218
      %s220 = ssub.s32 %s27, %s39
      %s221 = ssub.s32 %s28, %s35
      %s222 = sor.u32 %s220, %s221
      %p223 = scmp.eq.s32.totalorder %s222, 0
      %s225 = sadd.s32 %s224, 1
      %s226 = scalar_select %p223, %s224, %s225
      %p229 = pneg %p223
      %p230 = scmp.eq.s32.totalorder %s20, 15
      %p231 = por %p229, %p230
      %p232 = scmp.ne.s32.totalorder %s224, %s227
      %p233 = scmp.eq.s32.totalorder %s20, 0
      %p234 = por %p232, %p233
      %p235 = scmp.ne.s32.totalorder %s224, %s227
      %p236 = scmp.eq.s32.totalorder %s25, 15
      %p237 = por %p235, %p236
      %p238 = scmp.ne.s32.totalorder %s227, %s228
      %p239 = scmp.eq.s32.totalorder %s25, 0
      %p240 = por %p238, %p239
      %p241 = scmp.ne.s32.totalorder %s227, %s228
      %p242 = scmp.eq.s32.totalorder %s26, 15
      %p243 = por %p241, %p242
      %p245 = scmp.ne.s32.totalorder %s228, %s244
      %p246 = scmp.eq.s32.totalorder %s26, 0
      %p247 = por %p245, %p246
      %s248 = ssub.s32 %s27, %s39
      %s249 = ssub.s32 %s28, %s35
      %s250 = sor.u32 %s248, %s249
      %p251 = scmp.eq.s32.totalorder %s250, 0
      %s253 = sadd.s32 %s252, 1
      %s254 = scalar_select %p251, %s252, %s253
      %p257 = pneg %p251
      %p258 = scmp.eq.s32.totalorder %s20, 15
      %p259 = por %p257, %p258
      %p260 = scmp.ne.s32.totalorder %s252, %s255
      %p261 = scmp.eq.s32.totalorder %s20, 0
      %p262 = por %p260, %p261
      %p263 = scmp.ne.s32.totalorder %s252, %s255
      %p264 = scmp.eq.s32.totalorder %s25, 15
      %p265 = por %p263, %p264
      %p266 = scmp.ne.s32.totalorder %s255, %s256
      %p267 = scmp.eq.s32.totalorder %s25, 0
      %p268 = por %p266, %p267
      %p269 = scmp.ne.s32.totalorder %s255, %s256
      %p270 = scmp.eq.s32.totalorder %s26, 15
      %p271 = por %p269, %p270
      %p273 = scmp.ne.s32.totalorder %s256, %s272
      %p274 = scmp.eq.s32.totalorder %s26, 0
      %p275 = por %p273, %p274
      %p276 = scmp.le.s32.totalorder 1, %s20
      %p277 = scmp.lt.s32.totalorder %s20, 17
      %p278 = pnand %p276, %p277
      %p279 = pneg %p278
      // Predicated region
      $region9: #{bottleneck_forward.3} parent=5 // pred_check
        _
      $region10: #{bottleneck_forward.3} parent=5 // pred_check_branch
        %281 = sbr.rel (%p278) target = $region12
      $region11: #{bottleneck_forward.3} parent=5 // pred_region
        %s282 = ssub.s32 %s20, 1
        // Predicated region
        $region13: #{bottleneck_forward.3} parent=11 // pred_check
          %p283 = pneg %p149
        $region14: #{bottleneck_forward.3} parent=11 // pred_check_branch
          %285 = sbr.rel (%p283) target = $region16
        $region15: #{bottleneck_forward.3} parent=11 // pred_region
          _
        $region16: #{bottleneck_forward.3} parent=11 // pred_fallthru
          _
        // Predicated region
        $region17: #{bottleneck_forward.3} parent=11 // pred_check
          %p286 = pneg %p170
        $region18: #{bottleneck_forward.3} parent=11 // pred_check_branch
          %288 = sbr.rel (%p286) target = $region20
        $region19: #{bottleneck_forward.3} parent=11 // pred_region
          _
        $region20: #{bottleneck_forward.3} parent=11 // pred_fallthru
          _
        // Predicated region
        $region21: #{bottleneck_forward.3} parent=11 // pred_check
          %p289 = pneg %p191
        $region22: #{bottleneck_forward.3} parent=11 // pred_check_branch
          %291 = sbr.rel (%p289) target = $region24
        $region23: #{bottleneck_forward.3} parent=11 // pred_region
          _
        $region24: #{bottleneck_forward.3} parent=11 // pred_fallthru
          _
        // Predicated region
        $region25: #{bottleneck_forward.3} parent=11 // pred_check
          %p292 = pneg %p212
        $region26: #{bottleneck_forward.3} parent=11 // pred_check_branch
          %294 = sbr.rel (%p292) target = $region28
        $region27: #{bottleneck_forward.3} parent=11 // pred_region
          _
        $region28: #{bottleneck_forward.3} parent=11 // pred_fallthru
          _
      $region12: #{bottleneck_forward.3} parent=5 // pred_fallthru
        _
      %p295 = scmp.lt.s32.totalorder %s20, 16
      // Predicated region
      $region29: #{bottleneck_forward.3} parent=5 // pred_check
        %p296 = pneg %p295
      $region30: #{bottleneck_forward.3} parent=5 // pred_check_branch
        %298 = sbr.rel (%p296) target = $region32
      $region31: #{bottleneck_forward.3} parent=5 // pred_region
        // Predicated region
        $region33: #{bottleneck_forward.3} parent=31 // pred_check
          %p299 = pneg %p60
        $region34: #{bottleneck_forward.3} parent=31 // pred_check_branch
          %301 = sbr.rel (%p299) target = $region36
        $region35: #{bottleneck_forward.3} parent=31 // pred_region
          %s302 = ssub.s32 %s28, 1
          %p303 = scmp.gt.s32.totalorder %s302, 0
          %s304 = scalar_select %p303, %s302, 0
          %p305 = scmp.lt.s32.totalorder %s27, 1
          %s306 = scalar_select %p305, %s27, 1
          %p307 = scmp.lt.s32.totalorder %s304, 7
          %s308 = scalar_select %p307, %s304, 7
          %s309 = smul.addr %s308, 8
          %s310 = smul.addr %s306, 64
          %s311 = sadd.s32 %s309, %s310
          %s312 = smul.addr %s311, 4
          %s313 = scalar_lea.vmem %s0, %s312
          %s314 = ssub.s32 %s28, 1
          %p315 = scmp.gt.s32.totalorder %s314, 0
          %s316 = scalar_select %p315, %s314, 0
        $region36: #{bottleneck_forward.3} parent=31 // pred_fallthru
          _
        // Predicated region
        $region37: #{bottleneck_forward.3} parent=31 // pred_check
          %p317 = pneg %p88
        $region38: #{bottleneck_forward.3} parent=31 // pred_check_branch
          %319 = sbr.rel (%p317) target = $region40
        $region39: #{bottleneck_forward.3} parent=31 // pred_region
          %p320 = scmp.lt.s32.totalorder %s27, 1
          %s321 = scalar_select %p320, %s27, 1
          %p322 = scmp.lt.s32.totalorder %s28, 7
          %s323 = scalar_select %p322, %s28, 7
          %s324 = smul.addr %s323, 8
          %s325 = smul.addr %s321, 64
          %s326 = sadd.s32 %s324, %s325
          %s327 = smul.addr %s326, 4
          %s328 = scalar_lea.vmem %s1, %s327
        $region40: #{bottleneck_forward.3} parent=31 // pred_fallthru
          _
        // Predicated region
        $region41: #{bottleneck_forward.3} parent=31 // pred_check
          %p329 = pneg %p122
        $region42: #{bottleneck_forward.3} parent=31 // pred_check_branch
          %331 = sbr.rel (%p329) target = $region44
        $region43: #{bottleneck_forward.3} parent=31 // pred_region
          %s332 = sadd.s32 %s28, 1
          %p333 = scmp.lt.s32.totalorder %s332, 7
          %s334 = scalar_select %p333, %s332, 7
          %p335 = scmp.lt.s32.totalorder %s27, 1
          %s336 = scalar_select %p335, %s27, 1
          %p337 = scmp.lt.s32.totalorder %s334, 7
          %s338 = scalar_select %p337, %s334, 7
          %s339 = smul.addr %s338, 8
          %s340 = smul.addr %s336, 64
          %s341 = sadd.s32 %s339, %s340
          %s342 = smul.addr %s341, 4
          %s343 = scalar_lea.vmem %s2, %s342
          %s344 = sadd.s32 %s28, 1
          %p345 = scmp.lt.s32.totalorder %s344, 7
          %s346 = scalar_select %p345, %s344, 7
        $region44: #{bottleneck_forward.3} parent=31 // pred_fallthru
          _
        // Predicated region
        $region45: #{bottleneck_forward.3} parent=31 // pred_check
          %p347 = pneg %p234
        $region46: #{bottleneck_forward.3} parent=31 // pred_check_branch
          %349 = sbr.rel (%p347) target = $region48
        $region47: #{bottleneck_forward.3} parent=31 // pred_region
          %s350 = sand.u32 %s224, 1
          %s351 = scalar_lea.sflag [#allocation4], %s350
          %s352 = sand.u32 %s224, 1
          %s353 = smul.addr %s352, 64
          %s354 = scalar_lea.vmem [#allocation3], %s353
          %356 = vsyncadd %s351, 0
          %s357 = smul.addr %s28, 8
          %s358 = smul.addr %s27, 64
          %s359 = sadd.s32 %s357, %s358
          %s360 = smul.addr %s359, 8
          %s361 = scalar_lea.hbm %s7, %s360
          %s362 = sshll.u32 %s361, 4
          %s363 = int_to_ptr.hbm [resolvable:$true] %s362
          %s364 = sshll.u32 %s354, 4
          %s365 = int_to_ptr.vmem [resolvable:$true] %s364
          %370 = dma.hbm_to_vmem [thread:$0]  %s363, 1024, %s365, %s351, 128, 128, 8
        $region48: #{bottleneck_forward.3} parent=31 // pred_fallthru
          _
      $region32: #{bottleneck_forward.3} parent=5 // pred_fallthru
        _
      %p371 = scmp.le.s32.totalorder 1, %s20
      %p372 = scmp.lt.s32.totalorder %s20, 17
      %p373 = pnand %p371, %p372
      %p374 = pneg %p373
      // Predicated region
      $region49: #{bottleneck_forward.3} parent=5 // pred_check
        _
      $region50: #{bottleneck_forward.3} parent=5 // pred_check_branch
        %376 = sbr.rel (%p373) target = $region52
      $region51: #{bottleneck_forward.3} parent=5 // pred_region
        %s377 = ssub.s32 %s20, 1
        %s378 = sand.u32 %s227, 1
        %s379 = scalar_lea.sflag [#allocation4], %s378
        %s380 = sand.u32 %s227, 1
        %s381 = smul.addr %s380, 64
        %s382 = scalar_lea.vmem [#allocation3], %s381
        // Predicated region
        $region53: #{bottleneck_forward.3} parent=51 // pred_check
          %p383 = pneg %p240
        $region54: #{bottleneck_forward.3} parent=51 // pred_check_branch
          %385 = sbr.rel (%p383) target = $region56
        $region55: #{bottleneck_forward.3} parent=51 // pred_region
          %387 = dma.done %s379, 1024
        $region56: #{bottleneck_forward.3} parent=51 // pred_fallthru
          _
        %s388 = ssub.s32 %s30, 1
        %p389 = scmp.gt.s32.totalorder %s388, 0
        %s390 = scalar_select %p389, %s388, 0
        %p391 = scmp.lt.s32.totalorder %s29, 1
        %s392 = scalar_select %p391, %s29, 1
        %p393 = scmp.lt.s32.totalorder %s390, 7
        %s394 = scalar_select %p393, %s390, 7
        %s395 = smul.addr %s394, 8
        %s396 = smul.addr %s392, 64
        %s397 = sadd.s32 %s395, %s396
        %s398 = smul.addr %s397, 4
        %s399 = scalar_lea.vmem %s0, %s398
        %p400 = pneg %p66
        %p401 = pneg %p63
        %p402 = scmp.lt.s32.totalorder %s29, 1
        %s403 = scalar_select %p402, %s29, 1
        %p404 = scmp.lt.s32.totalorder %s30, 7
        %s405 = scalar_select %p404, %s30, 7
        %s406 = smul.addr %s405, 8
        %s407 = smul.addr %s403, 64
        %s408 = sadd.s32 %s406, %s407
        %s409 = smul.addr %s408, 4
        %s410 = scalar_lea.vmem %s1, %s409
        %p411 = pneg %p94
        %p412 = pneg %p91
        %s413 = sadd.s32 %s30, 1
        %p414 = scmp.lt.s32.totalorder %s413, 7
        %s415 = scalar_select %p414, %s413, 7
        %p416 = scmp.lt.s32.totalorder %s29, 1
        %s417 = scalar_select %p416, %s29, 1
        %p418 = scmp.lt.s32.totalorder %s415, 7
        %s419 = scalar_select %p418, %s415, 7
        %s420 = smul.addr %s419, 8
        %s421 = smul.addr %s417, 64
        %s422 = sadd.s32 %s420, %s421
        %s423 = smul.addr %s422, 4
        %s424 = scalar_lea.vmem %s2, %s423
        %p425 = pneg %p128
        %p426 = pneg %p125
        %p427 = pneg %p149
        %p428 = pneg %p146
        %p429 = pneg %p170
        %p430 = pneg %p167
        %p431 = pneg %p191
        %p432 = pneg %p188
        %p433 = pneg %p212
        %p434 = pneg %p209
        %s435 = sand.u32 %s227, 1
        %s436 = scalar_lea.sflag [#allocation4], %s435
        %s437 = sand.u32 %s227, 1
        %s438 = smul.addr %s437, 64
        %s439 = scalar_lea.vmem [#allocation3], %s438
        %p440 = pneg %p240
        %p441 = pneg %p237
        %p442 = pneg %p268
        %p443 = pneg %p265
        %s444 = sand.u32 %s255, 1
        %s445 = scalar_lea.sflag [#allocation5], %s444
        %s446 = sand.u32 %s255, 1
        %s447 = smul.addr %s446, 64
        %s448 = scalar_lea.vmem [#allocation6], %s447
        %s449 = ssub.s32 %s30, 1
        %p450 = scmp.gt.s32.totalorder %s449, 0
        %s451 = scalar_select %p450, %s449, 0
        %p452 = scmp.lt.s32.totalorder %s29, 1
        %s453 = scalar_select %p452, %s29, 1
        %p454 = scmp.lt.s32.totalorder %s451, 7
        %s455 = scalar_select %p454, %s451, 7
        %s456 = smul.addr %s455, 8
        %s457 = smul.addr %s453, 64
        %s458 = sadd.s32 %s456, %s457
        %s459 = smul.addr %s458, 4
        %s460 = scalar_lea.vmem %s0, %s459
        %s461 = ssub.s32 %s30, 1
        %p462 = scmp.gt.s32.totalorder %s461, 0
        %s463 = scalar_select %p462, %s461, 0
        %p464 = scmp.lt.s32.totalorder %s29, 1
        %s465 = scalar_select %p464, %s29, 1
        %p466 = scmp.lt.s32.totalorder %s30, 7
        %s467 = scalar_select %p466, %s30, 7
        %s468 = smul.addr %s467, 8
        %s469 = smul.addr %s465, 64
        %s470 = sadd.s32 %s468, %s469
        %s471 = smul.addr %s470, 4
        %s472 = scalar_lea.vmem %s1, %s471
        %s473 = sadd.s32 %s30, 1
        %p474 = scmp.lt.s32.totalorder %s473, 7
        %s475 = scalar_select %p474, %s473, 7
        %p476 = scmp.lt.s32.totalorder %s29, 1
        %s477 = scalar_select %p476, %s29, 1
        %p478 = scmp.lt.s32.totalorder %s475, 7
        %s479 = scalar_select %p478, %s475, 7
        %s480 = smul.addr %s479, 8
        %s481 = smul.addr %s477, 64
        %s482 = sadd.s32 %s480, %s481
        %s483 = smul.addr %s482, 4
        %s484 = scalar_lea.vmem %s2, %s483
        %s485 = sadd.s32 %s30, 1
        %p486 = scmp.lt.s32.totalorder %s485, 7
        %s487 = scalar_select %p486, %s485, 7
        %vm489 = vcmask 27648
        %490 = vst.msk [vmem:[#allocation2] sm:$0xf] %vm489, 0
        %vm491 = vcmask 24576
        %492 = vst.msk [vmem:[#allocation2 + $0x4] sm:$0x1] %vm491, 0
        %493 = vst.msk [vmem:[#allocation2 + $0x8] sm:$0xf] %vm489, 0
        %494 = vst.msk [vmem:[#allocation2 + $0xc] sm:$0x1] %vm491, 0
        %495 = vst.msk [vmem:[#allocation2 + $0x10] sm:$0xf] %vm489, 0
        %496 = vst.msk [vmem:[#allocation2 + $0x14] sm:$0x1] %vm491, 0
        %497 = vst.msk [vmem:[#allocation2 + $0x18] sm:$0xf] %vm489, 0
        %498 = vst.msk [vmem:[#allocation2 + $0x1c] sm:$0x1] %vm491, 0
        %499 = vst.msk [vmem:[#allocation2 + $0x20] sm:$0xf] %vm489, 0
        %500 = vst.msk [vmem:[#allocation2 + $0x24] sm:$0x1] %vm491, 0
        %501 = vst.msk [vmem:[#allocation2 + $0x28] sm:$0xf] %vm489, 0
        %502 = vst.msk [vmem:[#allocation2 + $0x2c] sm:$0x1] %vm491, 0
        %503 = vst.msk [vmem:[#allocation2 + $0x30] sm:$0xf] %vm489, 0
        %504 = vst.msk [vmem:[#allocation2 + $0x34] sm:$0x1] %vm491, 0
        %505 = vst.msk [vmem:[#allocation2 + $0x38] sm:$0xf] %vm489, 0
        %506 = vst.msk [vmem:[#allocation2 + $0x3c] sm:$0x1] %vm491, 0
        %507 = vst.msk [vmem:[#allocation2 + $0x40] sm:$0xf] %vm489, 0
        %508 = vst.msk [vmem:[#allocation2 + $0x44] sm:$0x1] %vm491, 0
        %509 = vst.msk [vmem:[#allocation2 + $0x48] sm:$0xf] %vm489, 0
        %510 = vst.msk [vmem:[#allocation2 + $0x4c] sm:$0x1] %vm491, 0
        %511 = vst.msk [vmem:[#allocation2 + $0x50] sm:$0xf] %vm489, 0
        %512 = vst.msk [vmem:[#allocation2 + $0x54] sm:$0x1] %vm491, 0
        %513 = vst.msk [vmem:[#allocation2 + $0x58] sm:$0xf] %vm489, 0
        %514 = vst.msk [vmem:[#allocation2 + $0x5c] sm:$0x1] %vm491, 0
        %515 = vst.msk [vmem:[#allocation2 + $0x60] sm:$0xf] %vm489, 0
        %516 = vst.msk [vmem:[#allocation2 + $0x64] sm:$0x1] %vm491, 0
        %517 = vst.msk [vmem:[#allocation2 + $0x68] sm:$0xf] %vm489, 0
        %518 = vst.msk [vmem:[#allocation2 + $0x6c] sm:$0x1] %vm491, 0
        %519 = vst.msk [vmem:[#allocation2 + $0x70] sm:$0xf] %vm489, 0
        %520 = vst.msk [vmem:[#allocation2 + $0x74] sm:$0x1] %vm491, 0
        %521 = vst.msk [vmem:[#allocation2 + $0x78] sm:$0xf] %vm489, 0
        %522 = vst.msk [vmem:[#allocation2 + $0x7c] sm:$0x1] %vm491, 0
        %523 = vst.msk [vmem:[#allocation2 + $0x80] sm:$0xf] %vm489, 0
        %524 = vst.msk [vmem:[#allocation2 + $0x84] sm:$0x1] %vm491, 0
        %525 = vst.msk [vmem:[#allocation2 + $0x88] sm:$0xf] %vm489, 0
        %526 = vst.msk [vmem:[#allocation2 + $0x8c] sm:$0x1] %vm491, 0
        %527 = vst.msk [vmem:[#allocation2 + $0x90] sm:$0xf] %vm489, 0
        %528 = vst.msk [vmem:[#allocation2 + $0x94] sm:$0x1] %vm491, 0
        %529 = vst.msk [vmem:[#allocation2 + $0x98] sm:$0xf] %vm489, 0
        %530 = vst.msk [vmem:[#allocation2 + $0x9c] sm:$0x1] %vm491, 0
        %531 = vst.msk [vmem:[#allocation2 + $0xa0] sm:$0xf] %vm489, 0
        %532 = vst.msk [vmem:[#allocation2 + $0xa4] sm:$0x1] %vm491, 0
        %533 = vst.msk [vmem:[#allocation2 + $0xa8] sm:$0xf] %vm489, 0
        %534 = vst.msk [vmem:[#allocation2 + $0xac] sm:$0x1] %vm491, 0
        %535 = vst.msk [vmem:[#allocation2 + $0xb0] sm:$0xf] %vm489, 0
        %536 = vst.msk [vmem:[#allocation2 + $0xb4] sm:$0x1] %vm491, 0
        %537 = vst.msk [vmem:[#allocation2 + $0xb8] sm:$0xf] %vm489, 0
        %538 = vst.msk [vmem:[#allocation2 + $0xbc] sm:$0x1] %vm491, 0
        %539 = vst.msk [vmem:[#allocation2 + $0xc0] sm:$0xf] %vm489, 0
        %540 = vst.msk [vmem:[#allocation2 + $0xc4] sm:$0x1] %vm491, 0
        %541 = vst.msk [vmem:[#allocation2 + $0xc8] sm:$0xf] %vm489, 0
        %542 = vst.msk [vmem:[#allocation2 + $0xcc] sm:$0x1] %vm491, 0
        %543 = vst.msk [vmem:[#allocation2 + $0xd0] sm:$0xf] %vm489, 0
        %544 = vst.msk [vmem:[#allocation2 + $0xd4] sm:$0x1] %vm491, 0
        %545 = vst.msk [vmem:[#allocation2 + $0xd8] sm:$0xf] %vm489, 0
        %546 = vst.msk [vmem:[#allocation2 + $0xdc] sm:$0x1] %vm491, 0
        %547 = vst.msk [vmem:[#allocation2 + $0xe0] sm:$0xf] %vm489, 0
        %548 = vst.msk [vmem:[#allocation2 + $0xe4] sm:$0x1] %vm491, 0
        %549 = vst.msk [vmem:[#allocation2 + $0xe8] sm:$0xf] %vm489, 0
        %550 = vst.msk [vmem:[#allocation2 + $0xec] sm:$0x1] %vm491, 0
        %p551 = scmp.gt.s32.totalorder %s30, 0
        // Predicated region
        $region57: #{bottleneck_forward.3} parent=51 // pred_check
          %p552 = pneg %p551
        $region58: #{bottleneck_forward.3} parent=51 // pred_check_branch
          %554 = sbr.rel (%p552) target = $region60
        $region59: #{bottleneck_forward.3} parent=51 // pred_region
          %v555 = vld [vmem:[%s460] sm:$0xf]
          %v556 = vld [vmem:[%s460 + $0x4] sm:$0xf]
          %v557 = vld [vmem:[%s460 + $0x8] sm:$0xf]
          %v558 = vld [vmem:[%s460 + $0xc] sm:$0xf]
          %v559 = vld [vmem:[%s460 + $0x10] sm:$0xf]
          %v560 = vld [vmem:[%s460 + $0x14] sm:$0xf]
          %v561 = vld [vmem:[%s460 + $0x18] sm:$0xf]
          %v562 = vld [vmem:[%s460 + $0x1c] sm:$0xf]
          %v564 = vshrl.u32 %v555, 16
          %v566 = vrot.slane %v564, 7
          %v567 = vshll.u32 %v555, 16
          %v569 = vor.u32 %v566, %v567
          %v570 = vrot.slane %v566, 4
          %v572 = vshrl.u32 %v556, 16
          %v574 = vrot.slane %v572, 7
          %v575 = vshll.u32 %v556, 16
          %v577 = vor.u32 %v574, %v575
          %v578 = vrot.slane %v574, 4
          %v580 = vshrl.u32 %v557, 16
          %v582 = vrot.slane %v580, 7
          %v583 = vshll.u32 %v557, 16
          %v585 = vor.u32 %v582, %v583
          %v586 = vrot.slane %v582, 4
          %v588 = vshrl.u32 %v558, 16
          %v590 = vrot.slane %v588, 7
          %v591 = vshll.u32 %v558, 16
          %v593 = vor.u32 %v590, %v591
          %v594 = vrot.slane %v590, 4
          %v596 = vshrl.u32 %v559, 16
          %v598 = vrot.slane %v596, 7
          %v599 = vshll.u32 %v559, 16
          %v601 = vor.u32 %v598, %v599
          %v602 = vrot.slane %v598, 4
          %v604 = vshrl.u32 %v560, 16
          %v606 = vrot.slane %v604, 7
          %v607 = vshll.u32 %v560, 16
          %v609 = vor.u32 %v606, %v607
          %v610 = vrot.slane %v606, 4
          %v612 = vshrl.u32 %v561, 16
          %v614 = vrot.slane %v612, 7
          %v615 = vshll.u32 %v561, 16
          %v617 = vor.u32 %v614, %v615
          %v618 = vrot.slane %v614, 4
          %v620 = vshrl.u32 %v562, 16
          %v622 = vrot.slane %v620, 7
          %v623 = vshll.u32 %v562, 16
          %v625 = vor.u32 %v622, %v623
          %v626 = vrot.slane %v622, 4
          %s643 = scalar_lea.vmem [#allocation2], 8
          %vm644 = vcmask 27648
          %vm645 = vsmask.f32 7938
          %vm646 = vmand %vm644, %vm645
          %v647 = vld [vmem:[%s643] sm:$0xf]
          %v648 = vsel %vm646, %v569, %v647
          %649 = vst [vmem:[%s643] sm:$0xf] %v648
          %vm650 = vcmask 24576
          %vm651 = vsmask.f32 256
          %vm652 = vmand %vm650, %vm651
          %v653 = vld [vmem:[%s643 + $0x4] sm:$0x1]
          %v654 = vsel %vm652, %v570, %v653
          %655 = vst [vmem:[%s643 + $0x4] sm:$0x1] %v654
          %v656 = vld [vmem:[%s643 + $0x8] sm:$0xf]
          %v657 = vsel %vm646, %v577, %v656
          %658 = vst [vmem:[%s643 + $0x8] sm:$0xf] %v657
          %v659 = vld [vmem:[%s643 + $0xc] sm:$0x1]
          %v660 = vsel %vm652, %v578, %v659
          %661 = vst [vmem:[%s643 + $0xc] sm:$0x1] %v660
          %v662 = vld [vmem:[%s643 + $0x10] sm:$0xf]
          %v663 = vsel %vm646, %v585, %v662
          %664 = vst [vmem:[%s643 + $0x10] sm:$0xf] %v663
          %v665 = vld [vmem:[%s643 + $0x14] sm:$0x1]
          %v666 = vsel %vm652, %v586, %v665
          %667 = vst [vmem:[%s643 + $0x14] sm:$0x1] %v666
          %v668 = vld [vmem:[%s643 + $0x18] sm:$0xf]
          %v669 = vsel %vm646, %v593, %v668
          %670 = vst [vmem:[%s643 + $0x18] sm:$0xf] %v669
          %v671 = vld [vmem:[%s643 + $0x1c] sm:$0x1]
          %v672 = vsel %vm652, %v594, %v671
          %673 = vst [vmem:[%s643 + $0x1c] sm:$0x1] %v672
          %v674 = vld [vmem:[%s643 + $0x20] sm:$0xf]
          %v675 = vsel %vm646, %v601, %v674
          %676 = vst [vmem:[%s643 + $0x20] sm:$0xf] %v675
          %v677 = vld [vmem:[%s643 + $0x24] sm:$0x1]
          %v678 = vsel %vm652, %v602, %v677
          %679 = vst [vmem:[%s643 + $0x24] sm:$0x1] %v678
          %v680 = vld [vmem:[%s643 + $0x28] sm:$0xf]
          %v681 = vsel %vm646, %v609, %v680
          %682 = vst [vmem:[%s643 + $0x28] sm:$0xf] %v681
          %v683 = vld [vmem:[%s643 + $0x2c] sm:$0x1]
          %v684 = vsel %vm652, %v610, %v683
          %685 = vst [vmem:[%s643 + $0x2c] sm:$0x1] %v684
          %v686 = vld [vmem:[%s643 + $0x30] sm:$0xf]
          %v687 = vsel %vm646, %v617, %v686
          %688 = vst [vmem:[%s643 + $0x30] sm:$0xf] %v687
          %v689 = vld [vmem:[%s643 + $0x34] sm:$0x1]
          %v690 = vsel %vm652, %v618, %v689
          %691 = vst [vmem:[%s643 + $0x34] sm:$0x1] %v690
          %v692 = vld [vmem:[%s643 + $0x38] sm:$0xf]
          %v693 = vsel %vm646, %v625, %v692
          %694 = vst [vmem:[%s643 + $0x38] sm:$0xf] %v693
          %v695 = vld [vmem:[%s643 + $0x3c] sm:$0x1]
          %v696 = vsel %vm652, %v626, %v695
          %697 = vst [vmem:[%s643 + $0x3c] sm:$0x1] %v696
        $region60: #{bottleneck_forward.3} parent=51 // pred_fallthru
          _
        %v698 = vld [vmem:[%s472] sm:$0xf]
        %v699 = vld [vmem:[%s472 + $0x4] sm:$0xf]
        %v700 = vld [vmem:[%s472 + $0x8] sm:$0xf]
        %v701 = vld [vmem:[%s472 + $0xc] sm:$0xf]
        %v702 = vld [vmem:[%s472 + $0x10] sm:$0xf]
        %v703 = vld [vmem:[%s472 + $0x14] sm:$0xf]
        %v704 = vld [vmem:[%s472 + $0x18] sm:$0xf]
        %v705 = vld [vmem:[%s472 + $0x1c] sm:$0xf]
        %v707 = vshrl.u32 %v698, 16
        %v709 = vrot.slane %v707, 7
        %v710 = vshll.u32 %v698, 16
        %v712 = vor.u32 %v709, %v710
        %v713 = vrot.slane %v709, 4
        %v715 = vshrl.u32 %v699, 16
        %v717 = vrot.slane %v715, 7
        %v718 = vshll.u32 %v699, 16
        %v720 = vor.u32 %v717, %v718
        %v721 = vrot.slane %v717, 4
        %v723 = vshrl.u32 %v700, 16
        %v725 = vrot.slane %v723, 7
        %v726 = vshll.u32 %v700, 16
        %v728 = vor.u32 %v725, %v726
        %v729 = vrot.slane %v725, 4
        %v731 = vshrl.u32 %v701, 16
        %v733 = vrot.slane %v731, 7
        %v734 = vshll.u32 %v701, 16
        %v736 = vor.u32 %v733, %v734
        %v737 = vrot.slane %v733, 4
        %v739 = vshrl.u32 %v702, 16
        %v741 = vrot.slane %v739, 7
        %v742 = vshll.u32 %v702, 16
        %v744 = vor.u32 %v741, %v742
        %v745 = vrot.slane %v741, 4
        %v747 = vshrl.u32 %v703, 16
        %v749 = vrot.slane %v747, 7
        %v750 = vshll.u32 %v703, 16
        %v752 = vor.u32 %v749, %v750
        %v753 = vrot.slane %v749, 4
        %v755 = vshrl.u32 %v704, 16
        %v757 = vrot.slane %v755, 7
        %v758 = vshll.u32 %v704, 16
        %v760 = vor.u32 %v757, %v758
        %v761 = vrot.slane %v757, 4
        %v763 = vshrl.u32 %v705, 16
        %v765 = vrot.slane %v763, 7
        %v766 = vshll.u32 %v705, 16
        %v768 = vor.u32 %v765, %v766
        %v769 = vrot.slane %v765, 4
        %s786 = scalar_lea.vmem [#allocation2], 88
        %vm787 = vcmask 27648
        %vm788 = vsmask.f32 7938
        %vm789 = vmand %vm787, %vm788
        %v790 = vld [vmem:[%s786] sm:$0xf]
        %v791 = vsel %vm789, %v712, %v790
        %792 = vst [vmem:[%s786] sm:$0xf] %v791
        %vm793 = vcmask 24576
        %vm794 = vsmask.f32 256
        %vm795 = vmand %vm793, %vm794
        %v796 = vld [vmem:[%s786 + $0x4] sm:$0x1]
        %v797 = vsel %vm795, %v713, %v796
        %798 = vst [vmem:[%s786 + $0x4] sm:$0x1] %v797
        %v799 = vld [vmem:[%s786 + $0x8] sm:$0xf]
        %v800 = vsel %vm789, %v720, %v799
        %801 = vst [vmem:[%s786 + $0x8] sm:$0xf] %v800
        %v802 = vld [vmem:[%s786 + $0xc] sm:$0x1]
        %v803 = vsel %vm795, %v721, %v802
        %804 = vst [vmem:[%s786 + $0xc] sm:$0x1] %v803
        %v805 = vld [vmem:[%s786 + $0x10] sm:$0xf]
        %v806 = vsel %vm789, %v728, %v805
        %807 = vst [vmem:[%s786 + $0x10] sm:$0xf] %v806
        %v808 = vld [vmem:[%s786 + $0x14] sm:$0x1]
        %v809 = vsel %vm795, %v729, %v808
        %810 = vst [vmem:[%s786 + $0x14] sm:$0x1] %v809
        %v811 = vld [vmem:[%s786 + $0x18] sm:$0xf]
        %v812 = vsel %vm789, %v736, %v811
        %813 = vst [vmem:[%s786 + $0x18] sm:$0xf] %v812
        %v814 = vld [vmem:[%s786 + $0x1c] sm:$0x1]
        %v815 = vsel %vm795, %v737, %v814
        %816 = vst [vmem:[%s786 + $0x1c] sm:$0x1] %v815
        %v817 = vld [vmem:[%s786 + $0x20] sm:$0xf]
        %v818 = vsel %vm789, %v744, %v817
        %819 = vst [vmem:[%s786 + $0x20] sm:$0xf] %v818
        %v820 = vld [vmem:[%s786 + $0x24] sm:$0x1]
        %v821 = vsel %vm795, %v745, %v820
        %822 = vst [vmem:[%s786 + $0x24] sm:$0x1] %v821
        %v823 = vld [vmem:[%s786 + $0x28] sm:$0xf]
        %v824 = vsel %vm789, %v752, %v823
        %825 = vst [vmem:[%s786 + $0x28] sm:$0xf] %v824
        %v826 = vld [vmem:[%s786 + $0x2c] sm:$0x1]
        %v827 = vsel %vm795, %v753, %v826
        %828 = vst [vmem:[%s786 + $0x2c] sm:$0x1] %v827
        %v829 = vld [vmem:[%s786 + $0x30] sm:$0xf]
        %v830 = vsel %vm789, %v760, %v829
        %831 = vst [vmem:[%s786 + $0x30] sm:$0xf] %v830
        %v832 = vld [vmem:[%s786 + $0x34] sm:$0x1]
        %v833 = vsel %vm795, %v761, %v832
        %834 = vst [vmem:[%s786 + $0x34] sm:$0x1] %v833
        %v835 = vld [vmem:[%s786 + $0x38] sm:$0xf]
        %v836 = vsel %vm789, %v768, %v835
        %837 = vst [vmem:[%s786 + $0x38] sm:$0xf] %v836
        %v838 = vld [vmem:[%s786 + $0x3c] sm:$0x1]
        %v839 = vsel %vm795, %v769, %v838
        %840 = vst [vmem:[%s786 + $0x3c] sm:$0x1] %v839
        %p841 = scmp.lt.s32.totalorder %s30, 7
        // Predicated region
        $region61: #{bottleneck_forward.3} parent=51 // pred_check
          %p842 = pneg %p841
        $region62: #{bottleneck_forward.3} parent=51 // pred_check_branch
          %844 = sbr.rel (%p842) target = $region64
        $region63: #{bottleneck_forward.3} parent=51 // pred_region
          %v845 = vld [vmem:[%s484] sm:$0xf]
          %v846 = vld [vmem:[%s484 + $0x4] sm:$0xf]
          %v847 = vld [vmem:[%s484 + $0x8] sm:$0xf]
          %v848 = vld [vmem:[%s484 + $0xc] sm:$0xf]
          %v849 = vld [vmem:[%s484 + $0x10] sm:$0xf]
          %v850 = vld [vmem:[%s484 + $0x14] sm:$0xf]
          %v851 = vld [vmem:[%s484 + $0x18] sm:$0xf]
          %v852 = vld [vmem:[%s484 + $0x1c] sm:$0xf]
          %v854 = vshrl.u32 %v845, 16
          %v856 = vrot.slane %v854, 7
          %v857 = vshll.u32 %v845, 16
          %v859 = vor.u32 %v856, %v857
          %v860 = vrot.slane %v856, 4
          %v862 = vshrl.u32 %v846, 16
          %v864 = vrot.slane %v862, 7
          %v865 = vshll.u32 %v846, 16
          %v867 = vor.u32 %v864, %v865
          %v868 = vrot.slane %v864, 4
          %v870 = vshrl.u32 %v847, 16
          %v872 = vrot.slane %v870, 7
          %v873 = vshll.u32 %v847, 16
          %v875 = vor.u32 %v872, %v873
          %v876 = vrot.slane %v872, 4
          %v878 = vshrl.u32 %v848, 16
          %v880 = vrot.slane %v878, 7
          %v881 = vshll.u32 %v848, 16
          %v883 = vor.u32 %v880, %v881
          %v884 = vrot.slane %v880, 4
          %v886 = vshrl.u32 %v849, 16
          %v888 = vrot.slane %v886, 7
          %v889 = vshll.u32 %v849, 16
          %v891 = vor.u32 %v888, %v889
          %v892 = vrot.slane %v888, 4
          %v894 = vshrl.u32 %v850, 16
          %v896 = vrot.slane %v894, 7
          %v897 = vshll.u32 %v850, 16
          %v899 = vor.u32 %v896, %v897
          %v900 = vrot.slane %v896, 4
          %v902 = vshrl.u32 %v851, 16
          %v904 = vrot.slane %v902, 7
          %v905 = vshll.u32 %v851, 16
          %v907 = vor.u32 %v904, %v905
          %v908 = vrot.slane %v904, 4
          %v910 = vshrl.u32 %v852, 16
          %v912 = vrot.slane %v910, 7
          %v913 = vshll.u32 %v852, 16
          %v915 = vor.u32 %v912, %v913
          %v916 = vrot.slane %v912, 4
          %s933 = scalar_lea.vmem [#allocation2], 168
          %v934 = vld [vmem:[%s933] sm:$0xf]
          %v935 = vsel %vm789, %v859, %v934
          %936 = vst [vmem:[%s933] sm:$0xf] %v935
          %v937 = vld [vmem:[%s933 + $0x4] sm:$0x1]
          %v938 = vsel %vm795, %v860, %v937
          %939 = vst [vmem:[%s933 + $0x4] sm:$0x1] %v938
          %v940 = vld [vmem:[%s933 + $0x8] sm:$0xf]
          %v941 = vsel %vm789, %v867, %v940
          %942 = vst [vmem:[%s933 + $0x8] sm:$0xf] %v941
          %v943 = vld [vmem:[%s933 + $0xc] sm:$0x1]
          %v944 = vsel %vm795, %v868, %v943
          %945 = vst [vmem:[%s933 + $0xc] sm:$0x1] %v944
          %v946 = vld [vmem:[%s933 + $0x10] sm:$0xf]
          %v947 = vsel %vm789, %v875, %v946
          %948 = vst [vmem:[%s933 + $0x10] sm:$0xf] %v947
          %v949 = vld [vmem:[%s933 + $0x14] sm:$0x1]
          %v950 = vsel %vm795, %v876, %v949
          %951 = vst [vmem:[%s933 + $0x14] sm:$0x1] %v950
          %v952 = vld [vmem:[%s933 + $0x18] sm:$0xf]
          %v953 = vsel %vm789, %v883, %v952
          %954 = vst [vmem:[%s933 + $0x18] sm:$0xf] %v953
          %v955 = vld [vmem:[%s933 + $0x1c] sm:$0x1]
          %v956 = vsel %vm795, %v884, %v955
          %957 = vst [vmem:[%s933 + $0x1c] sm:$0x1] %v956
          %v958 = vld [vmem:[%s933 + $0x20] sm:$0xf]
          %v959 = vsel %vm789, %v891, %v958
          %960 = vst [vmem:[%s933 + $0x20] sm:$0xf] %v959
          %v961 = vld [vmem:[%s933 + $0x24] sm:$0x1]
          %v962 = vsel %vm795, %v892, %v961
          %963 = vst [vmem:[%s933 + $0x24] sm:$0x1] %v962
          %v964 = vld [vmem:[%s933 + $0x28] sm:$0xf]
          %v965 = vsel %vm789, %v899, %v964
          %966 = vst [vmem:[%s933 + $0x28] sm:$0xf] %v965
          %v967 = vld [vmem:[%s933 + $0x2c] sm:$0x1]
          %v968 = vsel %vm795, %v900, %v967
          %969 = vst [vmem:[%s933 + $0x2c] sm:$0x1] %v968
          %v970 = vld [vmem:[%s933 + $0x30] sm:$0xf]
          %v971 = vsel %vm789, %v907, %v970
          %972 = vst [vmem:[%s933 + $0x30] sm:$0xf] %v971
          %v973 = vld [vmem:[%s933 + $0x34] sm:$0x1]
          %v974 = vsel %vm795, %v908, %v973
          %975 = vst [vmem:[%s933 + $0x34] sm:$0x1] %v974
          %v976 = vld [vmem:[%s933 + $0x38] sm:$0xf]
          %v977 = vsel %vm789, %v915, %v976
          %978 = vst [vmem:[%s933 + $0x38] sm:$0xf] %v977
          %v979 = vld [vmem:[%s933 + $0x3c] sm:$0x1]
          %v980 = vsel %vm795, %v916, %v979
          %981 = vst [vmem:[%s933 + $0x3c] sm:$0x1] %v980
        $region64: #{bottleneck_forward.3} parent=51 // pred_fallthru
          _
        %v982 = vld [vmem:[#allocation2] sm:$0xf]
        %v983 = vld [vmem:[#allocation2 + $0x4] sm:$0x1]
        %v984 = vld [vmem:[#allocation2 + $0x8] sm:$0xf]
        %v985 = vld [vmem:[#allocation2 + $0xc] sm:$0x1]
        %v986 = vld [vmem:[#allocation2 + $0x10] sm:$0xf]
        %v987 = vld [vmem:[#allocation2 + $0x14] sm:$0x1]
        %v988 = vld [vmem:[#allocation2 + $0x18] sm:$0xf]
        %v989 = vld [vmem:[#allocation2 + $0x1c] sm:$0x1]
        %v990 = vld [vmem:[#allocation2 + $0x20] sm:$0xf]
        %v991 = vld [vmem:[#allocation2 + $0x24] sm:$0x1]
        %v992 = vld [vmem:[#allocation2 + $0x28] sm:$0xf]
        %v993 = vld [vmem:[#allocation2 + $0x2c] sm:$0x1]
        %v994 = vld [vmem:[#allocation2 + $0x30] sm:$0xf]
        %v995 = vld [vmem:[#allocation2 + $0x34] sm:$0x1]
        %v996 = vld [vmem:[#allocation2 + $0x38] sm:$0xf]
        %v997 = vld [vmem:[#allocation2 + $0x3c] sm:$0x1]
        %v998 = vld [vmem:[#allocation2 + $0x40] sm:$0xf]
        %v999 = vld [vmem:[#allocation2 + $0x44] sm:$0x1]
        %v1000 = vld [vmem:[#allocation2 + $0x48] sm:$0xf]
        %v1001 = vld [vmem:[#allocation2 + $0x4c] sm:$0x1]
        %v1002 = vld [vmem:[%s3] sm:$0x3]
        %vm1003 = vsmask.f32 3328
        %vm1004 = vsmask.f32 7440
        %vm1005 = vmor %vm1003, %vm1004
        %v1007 = vshrl.u32 %v982, 16
        %v1009 = vrot.slane %v1007, 4
        %v1010 = vshll.u32 %v982, 16
        %v1012 = vrot.slane %v1010, 5
        %v1013 = vor.u32 %v1009, %v1012
        %v1014 = vrot.slane %v1013, 4
        %v1016 = vshll.u32 %v983, 16
        %v1018 = vrot.slane %v1016, 5
        %v1019 = vsel %vm1005, %v1014, %v1018
        %v1021 = vshrl.u32 %v984, 16
        %v1023 = vrot.slane %v1021, 4
        %v1024 = vshll.u32 %v984, 16
        %v1026 = vrot.slane %v1024, 5
        %v1027 = vor.u32 %v1023, %v1026
        %v1028 = vrot.slane %v1027, 4
        %v1030 = vshll.u32 %v985, 16
        %v1032 = vrot.slane %v1030, 5
        %v1033 = vsel %vm1005, %v1028, %v1032
        %v1035 = vshrl.u32 %v986, 16
        %v1037 = vrot.slane %v1035, 4
        %v1038 = vshll.u32 %v986, 16
        %v1040 = vrot.slane %v1038, 5
        %v1041 = vor.u32 %v1037, %v1040
        %v1042 = vrot.slane %v1041, 4
        %v1044 = vshll.u32 %v987, 16
        %v1046 = vrot.slane %v1044, 5
        %v1047 = vsel %vm1005, %v1042, %v1046
        %v1049 = vshrl.u32 %v988, 16
        %v1051 = vrot.slane %v1049, 4
        %v1052 = vshll.u32 %v988, 16
        %v1054 = vrot.slane %v1052, 5
        %v1055 = vor.u32 %v1051, %v1054
        %v1056 = vrot.slane %v1055, 4
        %v1058 = vshll.u32 %v989, 16
        %v1060 = vrot.slane %v1058, 5
        %v1061 = vsel %vm1005, %v1056, %v1060
        %v1063 = vshrl.u32 %v990, 16
        %v1065 = vrot.slane %v1063, 4
        %v1066 = vshll.u32 %v990, 16
        %v1068 = vrot.slane %v1066, 5
        %v1069 = vor.u32 %v1065, %v1068
        %v1070 = vrot.slane %v1069, 4
        %v1072 = vshll.u32 %v991, 16
        %v1074 = vrot.slane %v1072, 5
        %v1075 = vsel %vm1005, %v1070, %v1074
        %v1077 = vshrl.u32 %v992, 16
        %v1079 = vrot.slane %v1077, 4
        %v1080 = vshll.u32 %v992, 16
        %v1082 = vrot.slane %v1080, 5
        %v1083 = vor.u32 %v1079, %v1082
        %v1084 = vrot.slane %v1083, 4
        %v1086 = vshll.u32 %v993, 16
        %v1088 = vrot.slane %v1086, 5
        %v1089 = vsel %vm1005, %v1084, %v1088
        %v1091 = vshrl.u32 %v994, 16
        %v1093 = vrot.slane %v1091, 4
        %v1094 = vshll.u32 %v994, 16
        %v1096 = vrot.slane %v1094, 5
        %v1097 = vor.u32 %v1093, %v1096
        %v1098 = vrot.slane %v1097, 4
        %v1100 = vshll.u32 %v995, 16
        %v1102 = vrot.slane %v1100, 5
        %v1103 = vsel %vm1005, %v1098, %v1102
        %v1105 = vshrl.u32 %v996, 16
        %v1107 = vrot.slane %v1105, 4
        %v1108 = vshll.u32 %v996, 16
        %v1110 = vrot.slane %v1108, 5
        %v1111 = vor.u32 %v1107, %v1110
        %v1112 = vrot.slane %v1111, 4
        %v1114 = vshll.u32 %v997, 16
        %v1116 = vrot.slane %v1114, 5
        %v1117 = vsel %vm1005, %v1112, %v1116
        %s1118 = scalar_lea.vmem %s3, 2
        %v1119 = vld [vmem:[%s1118] sm:$0x3]
        %v1120 = vunpack.c.l.b16 %v1019
        %v1121 = vunpack.c.l.b16 %v1033
        %v1122 = vunpack.c.l.b16 %v1047
        %v1123 = vunpack.c.l.b16 %v1061
        %v1124 = vunpack.c.l.b16 %v1075
        %v1125 = vunpack.c.l.b16 %v1089
        %v1126 = vunpack.c.l.b16 %v1103
        %v1127 = vunpack.c.l.b16 %v1117
        %v1128 = vpack.c.b16 %v1121, %v1120
        %v1129 = vpack.c.b16 %v1123, %v1122
        %v1130 = vpack.c.b16 %v1125, %v1124
        %v1131 = vpack.c.b16 %v1127, %v1126
        %vm1132 = vcmask 31744
        %v1134 = vsel %vm1132, %v1128, 0
        %v1137 = vsel %vm1132, %v1129, 0
        %v1140 = vsel %vm1132, %v1130, 0
        %v1143 = vsel %vm1132, %v1131, 0
        %vm1145 = vcmask 1041408
        %v1147 = vsel %vm1145, %v1119, 0
        %1149 = vmatpush.bf16.msra.mxu0 0
        %1150 = vmatpush.bf16.msra.mxu0 0
        %1151 = vmatpush.bf16.msra.mxu0 0
        %1152 = vmatpush.bf16.msra.mxu0 0
        %1153 = vmatpush.bf16.msra.mxu0 0
        %1154 = vmatpush.bf16.msra.mxu0 0
        %1155 = vmatpush.bf16.msra.mxu0 0
        %1156 = vmatpush.bf16.msra.mxu0 %v1147
        %1157 = vmatmul.bf16.gmra.mxu0 %v1134
        %v1158 = vpop.f32.mrf.mxu0
        %v1159 = vadd.f32 0.0, %v1158
        %v1160 = vpop.f32.mrf.mxu0
        %v1161 = vadd.f32 0.0, %v1160
        %1162 = vmatmul.bf16.gmra.mxu0 %v1137
        %v1163 = vpop.f32.mrf.mxu0
        %v1164 = vadd.f32 0.0, %v1163
        %v1165 = vpop.f32.mrf.mxu0
        %v1166 = vadd.f32 0.0, %v1165
        %1167 = vmatmul.bf16.gmra.mxu0 %v1140
        %v1168 = vpop.f32.mrf.mxu0
        %v1169 = vadd.f32 0.0, %v1168
        %v1170 = vpop.f32.mrf.mxu0
        %v1171 = vadd.f32 0.0, %v1170
        %1172 = vmatmul.bf16.gmra.mxu0 %v1143
        %v1173 = vpop.f32.mrf.mxu0
        %v1174 = vadd.f32 0.0, %v1173
        %v1175 = vpop.f32.mrf.mxu0
        %v1176 = vadd.f32 0.0, %v1175
        %1177 = vdwg.mxu0
        %v1186 = vunpack.c.l.b16 %v982
        %v1187 = vunpack.c.l.b16 %v984
        %v1188 = vunpack.c.l.b16 %v986
        %v1189 = vunpack.c.l.b16 %v988
        %v1190 = vunpack.c.l.b16 %v990
        %v1191 = vunpack.c.l.b16 %v992
        %v1192 = vunpack.c.l.b16 %v994
        %v1193 = vunpack.c.l.b16 %v996
        %v1194 = vpack.c.b16 %v1187, %v1186
        %v1195 = vpack.c.b16 %v1189, %v1188
        %v1196 = vpack.c.b16 %v1191, %v1190
        %v1197 = vpack.c.b16 %v1193, %v1192
        %v1199 = vsel %vm1132, %v1194, 0
        %v1202 = vsel %vm1132, %v1195, 0
        %v1205 = vsel %vm1132, %v1196, 0
        %v1208 = vsel %vm1132, %v1197, 0
        %v1211 = vsel %vm1145, %v1002, 0
        %1213 = vmatpush.bf16.msra.mxu0 0
        %1214 = vmatpush.bf16.msra.mxu0 0
        %1215 = vmatpush.bf16.msra.mxu0 0
        %1216 = vmatpush.bf16.msra.mxu0 0
        %1217 = vmatpush.bf16.msra.mxu0 0
        %1218 = vmatpush.bf16.msra.mxu0 0
        %1219 = vmatpush.bf16.msra.mxu0 0
        %1220 = vmatpush.bf16.msra.mxu0 %v1211
        %1221 = vmatmul.bf16.gmra.mxu0 %v1199
        %v1222 = vpop.f32.mrf.mxu0
        %v1223 = vadd.f32 %v1159, %v1222
        %v1224 = vpop.f32.mrf.mxu0
        %v1225 = vadd.f32 %v1161, %v1224
        %1226 = vmatmul.bf16.gmra.mxu0 %v1202
        %v1227 = vpop.f32.mrf.mxu0
        %v1228 = vadd.f32 %v1164, %v1227
        %v1229 = vpop.f32.mrf.mxu0
        %v1230 = vadd.f32 %v1166, %v1229
        %1231 = vmatmul.bf16.gmra.mxu0 %v1205
        %v1232 = vpop.f32.mrf.mxu0
        %v1233 = vadd.f32 %v1169, %v1232
        %v1234 = vpop.f32.mrf.mxu0
        %v1235 = vadd.f32 %v1171, %v1234
        %1236 = vmatmul.bf16.gmra.mxu0 %v1208
        %v1237 = vpop.f32.mrf.mxu0
        %v1238 = vadd.f32 %v1174, %v1237
        %v1239 = vpop.f32.mrf.mxu0
        %v1240 = vadd.f32 %v1176, %v1239
        %1241 = vdwg.mxu0
        %vm1250 = vcmask 1042432
        %vm1251 = vcmask 1046532
        %vm1252 = vmor %vm1250, %vm1251
        %v1253 = vrot.slane %v982, 5
        %v1254 = vrot.slane %v1253, 4
        %v1255 = vrot.slane %v983, 5
        %v1256 = vsel %vm1252, %v1254, %v1255
        %v1257 = vrot.slane %v984, 5
        %v1258 = vrot.slane %v1257, 4
        %v1259 = vrot.slane %v985, 5
        %v1260 = vsel %vm1252, %v1258, %v1259
        %v1261 = vrot.slane %v986, 5
        %v1262 = vrot.slane %v1261, 4
        %v1263 = vrot.slane %v987, 5
        %v1264 = vsel %vm1252, %v1262, %v1263
        %v1265 = vrot.slane %v988, 5
        %v1266 = vrot.slane %v1265, 4
        %v1267 = vrot.slane %v989, 5
        %v1268 = vsel %vm1252, %v1266, %v1267
        %v1269 = vrot.slane %v990, 5
        %v1270 = vrot.slane %v1269, 4
        %v1271 = vrot.slane %v991, 5
        %v1272 = vsel %vm1252, %v1270, %v1271
        %v1273 = vrot.slane %v992, 5
        %v1274 = vrot.slane %v1273, 4
        %v1275 = vrot.slane %v993, 5
        %v1276 = vsel %vm1252, %v1274, %v1275
        %v1277 = vrot.slane %v994, 5
        %v1278 = vrot.slane %v1277, 4
        %v1279 = vrot.slane %v995, 5
        %v1280 = vsel %vm1252, %v1278, %v1279
        %v1281 = vrot.slane %v996, 5
        %v1282 = vrot.slane %v1281, 4
        %v1283 = vrot.slane %v997, 5
        %v1284 = vsel %vm1252, %v1282, %v1283
        %s1285 = scalar_lea.vmem %s3, 4
        %v1286 = vld [vmem:[%s1285] sm:$0x3]
        %v1287 = vunpack.c.l.b16 %v1256
        %v1288 = vunpack.c.l.b16 %v1260
        %v1289 = vunpack.c.l.b16 %v1264
        %v1290 = vunpack.c.l.b16 %v1268
        %v1291 = vunpack.c.l.b16 %v1272
        %v1292 = vunpack.c.l.b16 %v1276
        %v1293 = vunpack.c.l.b16 %v1280
        %v1294 = vunpack.c.l.b16 %v1284
        %v1295 = vpack.c.b16 %v1288, %v1287
        %v1296 = vpack.c.b16 %v1290, %v1289
        %v1297 = vpack.c.b16 %v1292, %v1291
        %v1298 = vpack.c.b16 %v1294, %v1293
        %v1300 = vsel %vm1132, %v1295, 0
        %v1303 = vsel %vm1132, %v1296, 0
        %v1306 = vsel %vm1132, %v1297, 0
        %v1309 = vsel %vm1132, %v1298, 0
        %v1312 = vsel %vm1145, %v1286, 0
        %1314 = vmatpush.bf16.msra.mxu0 0
        %1315 = vmatpush.bf16.msra.mxu0 0
        %1316 = vmatpush.bf16.msra.mxu0 0
        %1317 = vmatpush.bf16.msra.mxu0 0
        %1318 = vmatpush.bf16.msra.mxu0 0
        %1319 = vmatpush.bf16.msra.mxu0 0
        %1320 = vmatpush.bf16.msra.mxu0 0
        %1321 = vmatpush.bf16.msra.mxu0 %v1312
        %1322 = vmatmul.bf16.gmra.mxu0 %v1300
        %v1323 = vpop.f32.mrf.mxu0
        %v1324 = vadd.f32 0.0, %v1323
        %v1325 = vpop.f32.mrf.mxu0
        %v1326 = vadd.f32 0.0, %v1325
        %1327 = vmatmul.bf16.gmra.mxu0 %v1303
        %v1328 = vpop.f32.mrf.mxu0
        %v1329 = vadd.f32 0.0, %v1328
        %v1330 = vpop.f32.mrf.mxu0
        %v1331 = vadd.f32 0.0, %v1330
        %1332 = vmatmul.bf16.gmra.mxu0 %v1306
        %v1333 = vpop.f32.mrf.mxu0
        %v1334 = vadd.f32 0.0, %v1333
        %v1335 = vpop.f32.mrf.mxu0
        %v1336 = vadd.f32 0.0, %v1335
        %1337 = vmatmul.bf16.gmra.mxu0 %v1309
        %v1338 = vpop.f32.mrf.mxu0
        %v1339 = vadd.f32 0.0, %v1338
        %v1340 = vpop.f32.mrf.mxu0
        %v1341 = vadd.f32 0.0, %v1340
        %1342 = vdwg.mxu0
        %v1343 = vadd.f32 %v1223, %v1324
        %v1344 = vadd.f32 %v1225, %v1326
        %v1345 = vadd.f32 %v1228, %v1329
        %v1346 = vadd.f32 %v1230, %v1331
        %v1347 = vadd.f32 %v1233, %v1334
        %v1348 = vadd.f32 %v1235, %v1336
        %v1349 = vadd.f32 %v1238, %v1339
        %v1350 = vadd.f32 %v1240, %v1341
        %s1351 = scalar_lea.vmem %s3, 6
        %v1352 = vld [vmem:[%s1351] sm:$0x3]
        %v1354 = vunpack.c.l.b16 %v998
        %v1355 = vpack.c.b16 %v1188, %v1187
        %v1356 = vpack.c.b16 %v1190, %v1189
        %v1357 = vpack.c.b16 %v1192, %v1191
        %v1358 = vpack.c.b16 %v1354, %v1193
        %v1360 = vsel %vm1132, %v1355, 0
        %v1363 = vsel %vm1132, %v1356, 0
        %v1366 = vsel %vm1132, %v1357, 0
        %v1369 = vsel %vm1132, %v1358, 0
        %v1372 = vsel %vm1145, %v1352, 0
        %1374 = vmatpush.bf16.msra.mxu0 0
        %1375 = vmatpush.bf16.msra.mxu0 0
        %1376 = vmatpush.bf16.msra.mxu0 0
        %1377 = vmatpush.bf16.msra.mxu0 0
        %1378 = vmatpush.bf16.msra.mxu0 0
        %1379 = vmatpush.bf16.msra.mxu0 0
        %1380 = vmatpush.bf16.msra.mxu0 0
        %1381 = vmatpush.bf16.msra.mxu0 %v1372
        %1382 = vmatmul.bf16.gmra.mxu0 %v1360
        %v1383 = vpop.f32.mrf.mxu0
        %v1384 = vadd.f32 0.0, %v1383
        %v1385 = vpop.f32.mrf.mxu0
        %v1386 = vadd.f32 0.0, %v1385
        %1387 = vmatmul.bf16.gmra.mxu0 %v1363
        %v1388 = vpop.f32.mrf.mxu0
        %v1389 = vadd.f32 0.0, %v1388
        %v1390 = vpop.f32.mrf.mxu0
        %v1391 = vadd.f32 0.0, %v1390
        %1392 = vmatmul.bf16.gmra.mxu0 %v1366
        %v1393 = vpop.f32.mrf.mxu0
        %v1394 = vadd.f32 0.0, %v1393
        %v1395 = vpop.f32.mrf.mxu0
        %v1396 = vadd.f32 0.0, %v1395
        %1397 = vmatmul.bf16.gmra.mxu0 %v1369
        %v1398 = vpop.f32.mrf.mxu0
        %v1399 = vadd.f32 0.0, %v1398
        %v1400 = vpop.f32.mrf.mxu0
        %v1401 = vadd.f32 0.0, %v1400
        %1402 = vdwg.mxu0
        %v1403 = vadd.f32 %v1343, %v1384
        %v1404 = vadd.f32 %v1344, %v1386
        %v1405 = vadd.f32 %v1345, %v1389
        %v1406 = vadd.f32 %v1346, %v1391
        %v1407 = vadd.f32 %v1347, %v1394
        %v1408 = vadd.f32 %v1348, %v1396
        %v1409 = vadd.f32 %v1349, %v1399
        %v1410 = vadd.f32 %v1350, %v1401
        %v1412 = vshrl.u32 %v998, 16
        %v1414 = vrot.slane %v1412, 4
        %v1415 = vshll.u32 %v998, 16
        %v1417 = vrot.slane %v1415, 5
        %v1418 = vor.u32 %v1414, %v1417
        %v1419 = vrot.slane %v1418, 4
        %v1421 = vshll.u32 %v999, 16
        %v1423 = vrot.slane %v1421, 5
        %v1424 = vsel %vm1005, %v1419, %v1423
        %s1425 = scalar_lea.vmem %s3, 8
        %v1426 = vld [vmem:[%s1425] sm:$0x3]
        %v1427 = vunpack.c.l.b16 %v1424
        %v1428 = vpack.c.b16 %v1122, %v1121
        %v1429 = vpack.c.b16 %v1124, %v1123
        %v1430 = vpack.c.b16 %v1126, %v1125
        %v1431 = vpack.c.b16 %v1427, %v1127
        %v1433 = vsel %vm1132, %v1428, 0
        %v1436 = vsel %vm1132, %v1429, 0
        %v1439 = vsel %vm1132, %v1430, 0
        %v1442 = vsel %vm1132, %v1431, 0
        %v1445 = vsel %vm1145, %v1426, 0
        %1447 = vmatpush.bf16.msra.mxu0 0
        %1448 = vmatpush.bf16.msra.mxu0 0
        %1449 = vmatpush.bf16.msra.mxu0 0
        %1450 = vmatpush.bf16.msra.mxu0 0
        %1451 = vmatpush.bf16.msra.mxu0 0
        %1452 = vmatpush.bf16.msra.mxu0 0
        %1453 = vmatpush.bf16.msra.mxu0 0
        %1454 = vmatpush.bf16.msra.mxu0 %v1445
        %1455 = vmatmul.bf16.gmra.mxu0 %v1433
        %v1456 = vpop.f32.mrf.mxu0
        %v1457 = vadd.f32 0.0, %v1456
        %v1458 = vpop.f32.mrf.mxu0
        %v1459 = vadd.f32 0.0, %v1458
        %1460 = vmatmul.bf16.gmra.mxu0 %v1436
        %v1461 = vpop.f32.mrf.mxu0
        %v1462 = vadd.f32 0.0, %v1461
        %v1463 = vpop.f32.mrf.mxu0
        %v1464 = vadd.f32 0.0, %v1463
        %1465 = vmatmul.bf16.gmra.mxu0 %v1439
        %v1466 = vpop.f32.mrf.mxu0
        %v1467 = vadd.f32 0.0, %v1466
        %v1468 = vpop.f32.mrf.mxu0
        %v1469 = vadd.f32 0.0, %v1468
        %1470 = vmatmul.bf16.gmra.mxu0 %v1442
        %v1471 = vpop.f32.mrf.mxu0
        %v1472 = vadd.f32 0.0, %v1471
        %v1473 = vpop.f32.mrf.mxu0
        %v1474 = vadd.f32 0.0, %v1473
        %1475 = vdwg.mxu0
        %v1476 = vadd.f32 %v1403, %v1457
        %v1477 = vadd.f32 %v1404, %v1459
        %v1478 = vadd.f32 %v1405, %v1462
        %v1479 = vadd.f32 %v1406, %v1464
        %v1480 = vadd.f32 %v1407, %v1467
        %v1481 = vadd.f32 %v1408, %v1469
        %v1482 = vadd.f32 %v1409, %v1472
        %v1483 = vadd.f32 %v1410, %v1474
        %v1485 = vrot.slane %v998, 5
        %v1486 = vrot.slane %v1485, 4
        %v1487 = vrot.slane %v999, 5
        %v1488 = vsel %vm1252, %v1486, %v1487
        %s1489 = scalar_lea.vmem %s3, 10
        %v1490 = vld [vmem:[%s1489] sm:$0x3]
        %v1491 = vunpack.c.l.b16 %v1488
        %v1492 = vpack.c.b16 %v1289, %v1288
        %v1493 = vpack.c.b16 %v1291, %v1290
        %v1494 = vpack.c.b16 %v1293, %v1292
        %v1495 = vpack.c.b16 %v1491, %v1294
        %v1497 = vsel %vm1132, %v1492, 0
        %v1500 = vsel %vm1132, %v1493, 0
        %v1503 = vsel %vm1132, %v1494, 0
        %v1506 = vsel %vm1132, %v1495, 0
        %v1509 = vsel %vm1145, %v1490, 0
        %1511 = vmatpush.bf16.msra.mxu0 0
        %1512 = vmatpush.bf16.msra.mxu0 0
        %1513 = vmatpush.bf16.msra.mxu0 0
        %1514 = vmatpush.bf16.msra.mxu0 0
        %1515 = vmatpush.bf16.msra.mxu0 0
        %1516 = vmatpush.bf16.msra.mxu0 0
        %1517 = vmatpush.bf16.msra.mxu0 0
        %1518 = vmatpush.bf16.msra.mxu0 %v1509
        %1519 = vmatmul.bf16.gmra.mxu0 %v1497
        %v1520 = vpop.f32.mrf.mxu0
        %v1521 = vadd.f32 0.0, %v1520
        %v1522 = vpop.f32.mrf.mxu0
        %v1523 = vadd.f32 0.0, %v1522
        %1524 = vmatmul.bf16.gmra.mxu0 %v1500
        %v1525 = vpop.f32.mrf.mxu0
        %v1526 = vadd.f32 0.0, %v1525
        %v1527 = vpop.f32.mrf.mxu0
        %v1528 = vadd.f32 0.0, %v1527
        %1529 = vmatmul.bf16.gmra.mxu0 %v1503
        %v1530 = vpop.f32.mrf.mxu0
        %v1531 = vadd.f32 0.0, %v1530
        %v1532 = vpop.f32.mrf.mxu0
        %v1533 = vadd.f32 0.0, %v1532
        %1534 = vmatmul.bf16.gmra.mxu0 %v1506
        %v1535 = vpop.f32.mrf.mxu0
        %v1536 = vadd.f32 0.0, %v1535
        %v1537 = vpop.f32.mrf.mxu0
        %v1538 = vadd.f32 0.0, %v1537
        %1539 = vdwg.mxu0
        %v1540 = vadd.f32 %v1476, %v1521
        %v1541 = vadd.f32 %v1477, %v1523
        %v1542 = vadd.f32 %v1478, %v1526
        %v1543 = vadd.f32 %v1479, %v1528
        %v1544 = vadd.f32 %v1480, %v1531
        %v1545 = vadd.f32 %v1481, %v1533
        %v1546 = vadd.f32 %v1482, %v1536
        %v1547 = vadd.f32 %v1483, %v1538
        %s1548 = scalar_lea.vmem %s3, 12
        %v1549 = vld [vmem:[%s1548] sm:$0x3]
        %v1551 = vunpack.c.l.b16 %v1000
        %v1552 = vpack.c.b16 %v1551, %v1354
        %v1554 = vsel %vm1132, %v1552, 0
        %v1557 = vsel %vm1145, %v1549, 0
        %1559 = vmatpush.bf16.msra.mxu0 0
        %1560 = vmatpush.bf16.msra.mxu0 0
        %1561 = vmatpush.bf16.msra.mxu0 0
        %1562 = vmatpush.bf16.msra.mxu0 0
        %1563 = vmatpush.bf16.msra.mxu0 0
        %1564 = vmatpush.bf16.msra.mxu0 0
        %1565 = vmatpush.bf16.msra.mxu0 0
        %1566 = vmatpush.bf16.msra.mxu0 %v1557
        %1567 = vmatmul.bf16.gmra.mxu0 %v1202
        %v1568 = vpop.f32.mrf.mxu0
        %v1569 = vadd.f32 0.0, %v1568
        %v1570 = vpop.f32.mrf.mxu0
        %v1571 = vadd.f32 0.0, %v1570
        %1572 = vmatmul.bf16.gmra.mxu0 %v1205
        %v1573 = vpop.f32.mrf.mxu0
        %v1574 = vadd.f32 0.0, %v1573
        %v1575 = vpop.f32.mrf.mxu0
        %v1576 = vadd.f32 0.0, %v1575
        %1577 = vmatmul.bf16.gmra.mxu0 %v1208
        %v1578 = vpop.f32.mrf.mxu0
        %v1579 = vadd.f32 0.0, %v1578
        %v1580 = vpop.f32.mrf.mxu0
        %v1581 = vadd.f32 0.0, %v1580
        %1582 = vmatmul.bf16.gmra.mxu0 %v1554
        %v1583 = vpop.f32.mrf.mxu0
        %v1584 = vadd.f32 0.0, %v1583
        %v1585 = vpop.f32.mrf.mxu0
        %v1586 = vadd.f32 0.0, %v1585
        %1587 = vdwg.mxu0
        %v1588 = vadd.f32 %v1540, %v1569
        %v1589 = vadd.f32 %v1541, %v1571
        %v1590 = vadd.f32 %v1542, %v1574
        %v1591 = vadd.f32 %v1543, %v1576
        %v1592 = vadd.f32 %v1544, %v1579
        %v1593 = vadd.f32 %v1545, %v1581
        %v1594 = vadd.f32 %v1546, %v1584
        %v1595 = vadd.f32 %v1547, %v1586
        %v1597 = vshrl.u32 %v1000, 16
        %v1599 = vrot.slane %v1597, 4
        %v1600 = vshll.u32 %v1000, 16
        %v1602 = vrot.slane %v1600, 5
        %v1603 = vor.u32 %v1599, %v1602
        %v1604 = vrot.slane %v1603, 4
        %v1606 = vshll.u32 %v1001, 16
        %v1608 = vrot.slane %v1606, 5
        %v1609 = vsel %vm1005, %v1604, %v1608
        %s1610 = scalar_lea.vmem %s3, 14
        %v1611 = vld [vmem:[%s1610] sm:$0x3]
        %v1612 = vunpack.c.l.b16 %v1609
        %v1613 = vpack.c.b16 %v1612, %v1427
        %v1615 = vsel %vm1132, %v1613, 0
        %v1618 = vsel %vm1145, %v1611, 0
        %1620 = vmatpush.bf16.msra.mxu0 0
        %1621 = vmatpush.bf16.msra.mxu0 0
        %1622 = vmatpush.bf16.msra.mxu0 0
        %1623 = vmatpush.bf16.msra.mxu0 0
        %1624 = vmatpush.bf16.msra.mxu0 0
        %1625 = vmatpush.bf16.msra.mxu0 0
        %1626 = vmatpush.bf16.msra.mxu0 0
        %1627 = vmatpush.bf16.msra.mxu0 %v1618
        %1628 = vmatmul.bf16.gmra.mxu0 %v1137
        %v1629 = vpop.f32.mrf.mxu0
        %v1630 = vadd.f32 0.0, %v1629
        %v1631 = vpop.f32.mrf.mxu0
        %v1632 = vadd.f32 0.0, %v1631
        %1633 = vmatmul.bf16.gmra.mxu0 %v1140
        %v1634 = vpop.f32.mrf.mxu0
        %v1635 = vadd.f32 0.0, %v1634
        %v1636 = vpop.f32.mrf.mxu0
        %v1637 = vadd.f32 0.0, %v1636
        %1638 = vmatmul.bf16.gmra.mxu0 %v1143
        %v1639 = vpop.f32.mrf.mxu0
        %v1640 = vadd.f32 0.0, %v1639
        %v1641 = vpop.f32.mrf.mxu0
        %v1642 = vadd.f32 0.0, %v1641
        %1643 = vmatmul.bf16.gmra.mxu0 %v1615
        %v1644 = vpop.f32.mrf.mxu0
        %v1645 = vadd.f32 0.0, %v1644
        %v1646 = vpop.f32.mrf.mxu0
        %v1647 = vadd.f32 0.0, %v1646
        %1648 = vdwg.mxu0
        %v1649 = vadd.f32 %v1588, %v1630
        %v1650 = vadd.f32 %v1589, %v1632
        %v1651 = vadd.f32 %v1590, %v1635
        %v1652 = vadd.f32 %v1591, %v1637
        %v1653 = vadd.f32 %v1592, %v1640
        %v1654 = vadd.f32 %v1593, %v1642
        %v1655 = vadd.f32 %v1594, %v1645
        %v1656 = vadd.f32 %v1595, %v1647
        %v1658 = vrot.slane %v1000, 5
        %v1659 = vrot.slane %v1658, 4
        %v1660 = vrot.slane %v1001, 5
        %v1661 = vsel %vm1252, %v1659, %v1660
        %s1662 = scalar_lea.vmem %s3, 16
        %v1663 = vld [vmem:[%s1662] sm:$0x3]
        %v1664 = vunpack.c.l.b16 %v1661
        %v1665 = vpack.c.b16 %v1664, %v1491
        %v1667 = vsel %vm1132, %v1665, 0
        %v1670 = vsel %vm1145, %v1663, 0
        %1672 = vmatpush.bf16.msra.mxu0 0
        %1673 = vmatpush.bf16.msra.mxu0 0
        %1674 = vmatpush.bf16.msra.mxu0 0
        %1675 = vmatpush.bf16.msra.mxu0 0
        %1676 = vmatpush.bf16.msra.mxu0 0
        %1677 = vmatpush.bf16.msra.mxu0 0
        %1678 = vmatpush.bf16.msra.mxu0 0
        %1679 = vmatpush.bf16.msra.mxu0 %v1670
        %1680 = vmatmul.bf16.gmra.mxu0 %v1303
        %v1681 = vpop.f32.mrf.mxu0
        %v1682 = vadd.f32 0.0, %v1681
        %v1683 = vpop.f32.mrf.mxu0
        %v1684 = vadd.f32 0.0, %v1683
        %1685 = vmatmul.bf16.gmra.mxu0 %v1306
        %v1686 = vpop.f32.mrf.mxu0
        %v1687 = vadd.f32 0.0, %v1686
        %v1688 = vpop.f32.mrf.mxu0
        %v1689 = vadd.f32 0.0, %v1688
        %1690 = vmatmul.bf16.gmra.mxu0 %v1309
        %v1691 = vpop.f32.mrf.mxu0
        %v1692 = vadd.f32 0.0, %v1691
        %v1693 = vpop.f32.mrf.mxu0
        %v1694 = vadd.f32 0.0, %v1693
        %1695 = vmatmul.bf16.gmra.mxu0 %v1667
        %v1696 = vpop.f32.mrf.mxu0
        %v1697 = vadd.f32 0.0, %v1696
        %v1698 = vpop.f32.mrf.mxu0
        %v1699 = vadd.f32 0.0, %v1698
        %1700 = vdwg.mxu0
        %v1701 = vadd.f32 %v1649, %v1682
        %v1702 = vadd.f32 %v1650, %v1684
        %v1703 = vadd.f32 %v1651, %v1687
        %v1704 = vadd.f32 %v1652, %v1689
        %v1705 = vadd.f32 %v1653, %v1692
        %v1706 = vadd.f32 %v1654, %v1694
        %v1707 = vadd.f32 %v1655, %v1697
        %v1708 = vadd.f32 %v1656, %v1699
        %s1709 = scalar_lea.vmem [#allocation2], 80
        %v1710 = vld [vmem:[%s1709] sm:$0xf]
        %v1711 = vld [vmem:[%s1709 + $0x4] sm:$0x1]
        %v1712 = vld [vmem:[%s1709 + $0x8] sm:$0xf]
        %v1713 = vld [vmem:[%s1709 + $0xc] sm:$0x1]
        %v1714 = vld [vmem:[%s1709 + $0x10] sm:$0xf]
        %v1715 = vld [vmem:[%s1709 + $0x14] sm:$0x1]
        %v1716 = vld [vmem:[%s1709 + $0x18] sm:$0xf]
        %v1717 = vld [vmem:[%s1709 + $0x1c] sm:$0x1]
        %v1718 = vld [vmem:[%s1709 + $0x20] sm:$0xf]
        %v1719 = vld [vmem:[%s1709 + $0x24] sm:$0x1]
        %v1720 = vld [vmem:[%s1709 + $0x28] sm:$0xf]
        %v1721 = vld [vmem:[%s1709 + $0x2c] sm:$0x1]
        %v1722 = vld [vmem:[%s1709 + $0x30] sm:$0xf]
        %v1723 = vld [vmem:[%s1709 + $0x34] sm:$0x1]
        %v1724 = vld [vmem:[%s1709 + $0x38] sm:$0xf]
        %v1725 = vld [vmem:[%s1709 + $0x3c] sm:$0x1]
        %v1726 = vld [vmem:[%s1709 + $0x40] sm:$0xf]
        %v1727 = vld [vmem:[%s1709 + $0x44] sm:$0x1]
        %v1728 = vld [vmem:[%s1709 + $0x48] sm:$0xf]
        %v1729 = vld [vmem:[%s1709 + $0x4c] sm:$0x1]
        %s1730 = scalar_lea.vmem %s3, 18
        %v1731 = vld [vmem:[%s1730] sm:$0x3]
        %v1740 = vunpack.c.l.b16 %v1710
        %v1741 = vunpack.c.l.b16 %v1712
        %v1742 = vunpack.c.l.b16 %v1714
        %v1743 = vunpack.c.l.b16 %v1716
        %v1744 = vunpack.c.l.b16 %v1718
        %v1745 = vunpack.c.l.b16 %v1720
        %v1746 = vunpack.c.l.b16 %v1722
        %v1747 = vunpack.c.l.b16 %v1724
        %v1748 = vpack.c.b16 %v1741, %v1740
        %v1749 = vpack.c.b16 %v1743, %v1742
        %v1750 = vpack.c.b16 %v1745, %v1744
        %v1751 = vpack.c.b16 %v1747, %v1746
        %v1753 = vsel %vm1132, %v1748, 0
        %v1756 = vsel %vm1132, %v1749, 0
        %v1759 = vsel %vm1132, %v1750, 0
        %v1762 = vsel %vm1132, %v1751, 0
        %v1765 = vsel %vm1145, %v1731, 0
        %1767 = vmatpush.bf16.msra.mxu0 0
        %1768 = vmatpush.bf16.msra.mxu0 0
        %1769 = vmatpush.bf16.msra.mxu0 0
        %1770 = vmatpush.bf16.msra.mxu0 0
        %1771 = vmatpush.bf16.msra.mxu0 0
        %1772 = vmatpush.bf16.msra.mxu0 0
        %1773 = vmatpush.bf16.msra.mxu0 0
        %1774 = vmatpush.bf16.msra.mxu0 %v1765
        %1775 = vmatmul.bf16.gmra.mxu0 %v1753
        %v1776 = vpop.f32.mrf.mxu0
        %v1777 = vadd.f32 0.0, %v1776
        %v1778 = vpop.f32.mrf.mxu0
        %v1779 = vadd.f32 0.0, %v1778
        %1780 = vmatmul.bf16.gmra.mxu0 %v1756
        %v1781 = vpop.f32.mrf.mxu0
        %v1782 = vadd.f32 0.0, %v1781
        %v1783 = vpop.f32.mrf.mxu0
        %v1784 = vadd.f32 0.0, %v1783
        %1785 = vmatmul.bf16.gmra.mxu0 %v1759
        %v1786 = vpop.f32.mrf.mxu0
        %v1787 = vadd.f32 0.0, %v1786
        %v1788 = vpop.f32.mrf.mxu0
        %v1789 = vadd.f32 0.0, %v1788
        %1790 = vmatmul.bf16.gmra.mxu0 %v1762
        %v1791 = vpop.f32.mrf.mxu0
        %v1792 = vadd.f32 0.0, %v1791
        %v1793 = vpop.f32.mrf.mxu0
        %v1794 = vadd.f32 0.0, %v1793
        %1795 = vdwg.mxu0
        %v1796 = vadd.f32 %v1701, %v1777
        %v1797 = vadd.f32 %v1702, %v1779
        %v1798 = vadd.f32 %v1703, %v1782
        %v1799 = vadd.f32 %v1704, %v1784
        %v1800 = vadd.f32 %v1705, %v1787
        %v1801 = vadd.f32 %v1706, %v1789
        %v1802 = vadd.f32 %v1707, %v1792
        %v1803 = vadd.f32 %v1708, %v1794
        %v1805 = vshrl.u32 %v1710, 16
        %v1807 = vrot.slane %v1805, 4
        %v1808 = vshll.u32 %v1710, 16
        %v1810 = vrot.slane %v1808, 5
        %v1811 = vor.u32 %v1807, %v1810
        %v1812 = vrot.slane %v1811, 4
        %v1814 = vshll.u32 %v1711, 16
        %v1816 = vrot.slane %v1814, 5
        %v1817 = vsel %vm1005, %v1812, %v1816
        %v1819 = vshrl.u32 %v1712, 16
        %v1821 = vrot.slane %v1819, 4
        %v1822 = vshll.u32 %v1712, 16
        %v1824 = vrot.slane %v1822, 5
        %v1825 = vor.u32 %v1821, %v1824
        %v1826 = vrot.slane %v1825, 4
        %v1828 = vshll.u32 %v1713, 16
        %v1830 = vrot.slane %v1828, 5
        %v1831 = vsel %vm1005, %v1826, %v1830
        %v1833 = vshrl.u32 %v1714, 16
        %v1835 = vrot.slane %v1833, 4
        %v1836 = vshll.u32 %v1714, 16
        %v1838 = vrot.slane %v1836, 5
        %v1839 = vor.u32 %v1835, %v1838
        %v1840 = vrot.slane %v1839, 4
        %v1842 = vshll.u32 %v1715, 16
        %v1844 = vrot.slane %v1842, 5
        %v1845 = vsel %vm1005, %v1840, %v1844
        %v1847 = vshrl.u32 %v1716, 16
        %v1849 = vrot.slane %v1847, 4
        %v1850 = vshll.u32 %v1716, 16
        %v1852 = vrot.slane %v1850, 5
        %v1853 = vor.u32 %v1849, %v1852
        %v1854 = vrot.slane %v1853, 4
        %v1856 = vshll.u32 %v1717, 16
        %v1858 = vrot.slane %v1856, 5
        %v1859 = vsel %vm1005, %v1854, %v1858
        %v1861 = vshrl.u32 %v1718, 16
        %v1863 = vrot.slane %v1861, 4
        %v1864 = vshll.u32 %v1718, 16
        %v1866 = vrot.slane %v1864, 5
        %v1867 = vor.u32 %v1863, %v1866
        %v1868 = vrot.slane %v1867, 4
        %v1870 = vshll.u32 %v1719, 16
        %v1872 = vrot.slane %v1870, 5
        %v1873 = vsel %vm1005, %v1868, %v1872
        %v1875 = vshrl.u32 %v1720, 16
        %v1877 = vrot.slane %v1875, 4
        %v1878 = vshll.u32 %v1720, 16
        %v1880 = vrot.slane %v1878, 5
        %v1881 = vor.u32 %v1877, %v1880
        %v1882 = vrot.slane %v1881, 4
        %v1884 = vshll.u32 %v1721, 16
        %v1886 = vrot.slane %v1884, 5
        %v1887 = vsel %vm1005, %v1882, %v1886
        %v1889 = vshrl.u32 %v1722, 16
        %v1891 = vrot.slane %v1889, 4
        %v1892 = vshll.u32 %v1722, 16
        %v1894 = vrot.slane %v1892, 5
        %v1895 = vor.u32 %v1891, %v1894
        %v1896 = vrot.slane %v1895, 4
        %v1898 = vshll.u32 %v1723, 16
        %v1900 = vrot.slane %v1898, 5
        %v1901 = vsel %vm1005, %v1896, %v1900
        %v1903 = vshrl.u32 %v1724, 16
        %v1905 = vrot.slane %v1903, 4
        %v1906 = vshll.u32 %v1724, 16
        %v1908 = vrot.slane %v1906, 5
        %v1909 = vor.u32 %v1905, %v1908
        %v1910 = vrot.slane %v1909, 4
        %v1912 = vshll.u32 %v1725, 16
        %v1914 = vrot.slane %v1912, 5
        %v1915 = vsel %vm1005, %v1910, %v1914
        %s1916 = scalar_lea.vmem %s3, 20
        %v1917 = vld [vmem:[%s1916] sm:$0x3]
        %v1918 = vunpack.c.l.b16 %v1817
        %v1919 = vunpack.c.l.b16 %v1831
        %v1920 = vunpack.c.l.b16 %v1845
        %v1921 = vunpack.c.l.b16 %v1859
        %v1922 = vunpack.c.l.b16 %v1873
        %v1923 = vunpack.c.l.b16 %v1887
        %v1924 = vunpack.c.l.b16 %v1901
        %v1925 = vunpack.c.l.b16 %v1915
        %v1926 = vpack.c.b16 %v1919, %v1918
        %v1927 = vpack.c.b16 %v1921, %v1920
        %v1928 = vpack.c.b16 %v1923, %v1922
        %v1929 = vpack.c.b16 %v1925, %v1924
        %v1931 = vsel %vm1132, %v1926, 0
        %v1934 = vsel %vm1132, %v1927, 0
        %v1937 = vsel %vm1132, %v1928, 0
        %v1940 = vsel %vm1132, %v1929, 0
        %v1943 = vsel %vm1145, %v1917, 0
        %1945 = vmatpush.bf16.msra.mxu0 0
        %1946 = vmatpush.bf16.msra.mxu0 0
        %1947 = vmatpush.bf16.msra.mxu0 0
        %1948 = vmatpush.bf16.msra.mxu0 0
        %1949 = vmatpush.bf16.msra.mxu0 0
        %1950 = vmatpush.bf16.msra.mxu0 0
        %1951 = vmatpush.bf16.msra.mxu0 0
        %1952 = vmatpush.bf16.msra.mxu0 %v1943
        %1953 = vmatmul.bf16.gmra.mxu0 %v1931
        %v1954 = vpop.f32.mrf.mxu0
        %v1955 = vadd.f32 0.0, %v1954
        %v1956 = vpop.f32.mrf.mxu0
        %v1957 = vadd.f32 0.0, %v1956
        %1958 = vmatmul.bf16.gmra.mxu0 %v1934
        %v1959 = vpop.f32.mrf.mxu0
        %v1960 = vadd.f32 0.0, %v1959
        %v1961 = vpop.f32.mrf.mxu0
        %v1962 = vadd.f32 0.0, %v1961
        %1963 = vmatmul.bf16.gmra.mxu0 %v1937
        %v1964 = vpop.f32.mrf.mxu0
        %v1965 = vadd.f32 0.0, %v1964
        %v1966 = vpop.f32.mrf.mxu0
        %v1967 = vadd.f32 0.0, %v1966
        %1968 = vmatmul.bf16.gmra.mxu0 %v1940
        %v1969 = vpop.f32.mrf.mxu0
        %v1970 = vadd.f32 0.0, %v1969
        %v1971 = vpop.f32.mrf.mxu0
        %v1972 = vadd.f32 0.0, %v1971
        %1973 = vdwg.mxu0
        %v1974 = vadd.f32 %v1796, %v1955
        %v1975 = vadd.f32 %v1797, %v1957
        %v1976 = vadd.f32 %v1798, %v1960
        %v1977 = vadd.f32 %v1799, %v1962
        %v1978 = vadd.f32 %v1800, %v1965
        %v1979 = vadd.f32 %v1801, %v1967
        %v1980 = vadd.f32 %v1802, %v1970
        %v1981 = vadd.f32 %v1803, %v1972
        %v1990 = vrot.slane %v1710, 5
        %v1991 = vrot.slane %v1990, 4
        %v1992 = vrot.slane %v1711, 5
        %v1993 = vsel %vm1252, %v1991, %v1992
        %v1994 = vrot.slane %v1712, 5
        %v1995 = vrot.slane %v1994, 4
        %v1996 = vrot.slane %v1713, 5
        %v1997 = vsel %vm1252, %v1995, %v1996
        %v1998 = vrot.slane %v1714, 5
        %v1999 = vrot.slane %v1998, 4
        %v2000 = vrot.slane %v1715, 5
        %v2001 = vsel %vm1252, %v1999, %v2000
        %v2002 = vrot.slane %v1716, 5
        %v2003 = vrot.slane %v2002, 4
        %v2004 = vrot.slane %v1717, 5
        %v2005 = vsel %vm1252, %v2003, %v2004
        %v2006 = vrot.slane %v1718, 5
        %v2007 = vrot.slane %v2006, 4
        %v2008 = vrot.slane %v1719, 5
        %v2009 = vsel %vm1252, %v2007, %v2008
        %v2010 = vrot.slane %v1720, 5
        %v2011 = vrot.slane %v2010, 4
        %v2012 = vrot.slane %v1721, 5
        %v2013 = vsel %vm1252, %v2011, %v2012
        %v2014 = vrot.slane %v1722, 5
        %v2015 = vrot.slane %v2014, 4
        %v2016 = vrot.slane %v1723, 5
        %v2017 = vsel %vm1252, %v2015, %v2016
        %v2018 = vrot.slane %v1724, 5
        %v2019 = vrot.slane %v2018, 4
        %v2020 = vrot.slane %v1725, 5
        %v2021 = vsel %vm1252, %v2019, %v2020
        %s2022 = scalar_lea.vmem %s3, 22
        %v2023 = vld [vmem:[%s2022] sm:$0x3]
        %v2024 = vunpack.c.l.b16 %v1993
        %v2025 = vunpack.c.l.b16 %v1997
        %v2026 = vunpack.c.l.b16 %v2001
        %v2027 = vunpack.c.l.b16 %v2005
        %v2028 = vunpack.c.l.b16 %v2009
        %v2029 = vunpack.c.l.b16 %v2013
        %v2030 = vunpack.c.l.b16 %v2017
        %v2031 = vunpack.c.l.b16 %v2021
        %v2032 = vpack.c.b16 %v2025, %v2024
        %v2033 = vpack.c.b16 %v2027, %v2026
        %v2034 = vpack.c.b16 %v2029, %v2028
        %v2035 = vpack.c.b16 %v2031, %v2030
        %v2037 = vsel %vm1132, %v2032, 0
        %v2040 = vsel %vm1132, %v2033, 0
        %v2043 = vsel %vm1132, %v2034, 0
        %v2046 = vsel %vm1132, %v2035, 0
        %v2049 = vsel %vm1145, %v2023, 0
        %2051 = vmatpush.bf16.msra.mxu0 0
        %2052 = vmatpush.bf16.msra.mxu0 0
        %2053 = vmatpush.bf16.msra.mxu0 0
        %2054 = vmatpush.bf16.msra.mxu0 0
        %2055 = vmatpush.bf16.msra.mxu0 0
        %2056 = vmatpush.bf16.msra.mxu0 0
        %2057 = vmatpush.bf16.msra.mxu0 0
        %2058 = vmatpush.bf16.msra.mxu0 %v2049
        %2059 = vmatmul.bf16.gmra.mxu0 %v2037
        %v2060 = vpop.f32.mrf.mxu0
        %v2061 = vadd.f32 0.0, %v2060
        %v2062 = vpop.f32.mrf.mxu0
        %v2063 = vadd.f32 0.0, %v2062
        %2064 = vmatmul.bf16.gmra.mxu0 %v2040
        %v2065 = vpop.f32.mrf.mxu0
        %v2066 = vadd.f32 0.0, %v2065
        %v2067 = vpop.f32.mrf.mxu0
        %v2068 = vadd.f32 0.0, %v2067
        %2069 = vmatmul.bf16.gmra.mxu0 %v2043
        %v2070 = vpop.f32.mrf.mxu0
        %v2071 = vadd.f32 0.0, %v2070
        %v2072 = vpop.f32.mrf.mxu0
        %v2073 = vadd.f32 0.0, %v2072
        %2074 = vmatmul.bf16.gmra.mxu0 %v2046
        %v2075 = vpop.f32.mrf.mxu0
        %v2076 = vadd.f32 0.0, %v2075
        %v2077 = vpop.f32.mrf.mxu0
        %v2078 = vadd.f32 0.0, %v2077
        %2079 = vdwg.mxu0
        %v2080 = vadd.f32 %v1974, %v2061
        %v2081 = vadd.f32 %v1975, %v2063
        %v2082 = vadd.f32 %v1976, %v2066
        %v2083 = vadd.f32 %v1977, %v2068
        %v2084 = vadd.f32 %v1978, %v2071
        %v2085 = vadd.f32 %v1979, %v2073
        %v2086 = vadd.f32 %v1980, %v2076
        %v2087 = vadd.f32 %v1981, %v2078
        %s2088 = scalar_lea.vmem %s3, 24
        %v2089 = vld [vmem:[%s2088] sm:$0x3]
        %v2091 = vunpack.c.l.b16 %v1726
        %v2092 = vpack.c.b16 %v1742, %v1741
        %v2093 = vpack.c.b16 %v1744, %v1743
        %v2094 = vpack.c.b16 %v1746, %v1745
        %v2095 = vpack.c.b16 %v2091, %v1747
        %v2097 = vsel %vm1132, %v2092, 0
        %v2100 = vsel %vm1132, %v2093, 0
        %v2103 = vsel %vm1132, %v2094, 0
        %v2106 = vsel %vm1132, %v2095, 0
        %v2109 = vsel %vm1145, %v2089, 0
        %2111 = vmatpush.bf16.msra.mxu0 0
        %2112 = vmatpush.bf16.msra.mxu0 0
        %2113 = vmatpush.bf16.msra.mxu0 0
        %2114 = vmatpush.bf16.msra.mxu0 0
        %2115 = vmatpush.bf16.msra.mxu0 0
        %2116 = vmatpush.bf16.msra.mxu0 0
        %2117 = vmatpush.bf16.msra.mxu0 0
        %2118 = vmatpush.bf16.msra.mxu0 %v2109
        %2119 = vmatmul.bf16.gmra.mxu0 %v2097
        %v2120 = vpop.f32.mrf.mxu0
        %v2121 = vadd.f32 0.0, %v2120
        %v2122 = vpop.f32.mrf.mxu0
        %v2123 = vadd.f32 0.0, %v2122
        %2124 = vmatmul.bf16.gmra.mxu0 %v2100
        %v2125 = vpop.f32.mrf.mxu0
        %v2126 = vadd.f32 0.0, %v2125
        %v2127 = vpop.f32.mrf.mxu0
        %v2128 = vadd.f32 0.0, %v2127
        %2129 = vmatmul.bf16.gmra.mxu0 %v2103
        %v2130 = vpop.f32.mrf.mxu0
        %v2131 = vadd.f32 0.0, %v2130
        %v2132 = vpop.f32.mrf.mxu0
        %v2133 = vadd.f32 0.0, %v2132
        %2134 = vmatmul.bf16.gmra.mxu0 %v2106
        %v2135 = vpop.f32.mrf.mxu0
        %v2136 = vadd.f32 0.0, %v2135
        %v2137 = vpop.f32.mrf.mxu0
        %v2138 = vadd.f32 0.0, %v2137
        %2139 = vdwg.mxu0
        %v2140 = vadd.f32 %v2080, %v2121
        %v2141 = vadd.f32 %v2081, %v2123
        %v2142 = vadd.f32 %v2082, %v2126
        %v2143 = vadd.f32 %v2083, %v2128
        %v2144 = vadd.f32 %v2084, %v2131
        %v2145 = vadd.f32 %v2085, %v2133
        %v2146 = vadd.f32 %v2086, %v2136
        %v2147 = vadd.f32 %v2087, %v2138
        %v2149 = vshrl.u32 %v1726, 16
        %v2151 = vrot.slane %v2149, 4
        %v2152 = vshll.u32 %v1726, 16
        %v2154 = vrot.slane %v2152, 5
        %v2155 = vor.u32 %v2151, %v2154
        %v2156 = vrot.slane %v2155, 4
        %v2158 = vshll.u32 %v1727, 16
        %v2160 = vrot.slane %v2158, 5
        %v2161 = vsel %vm1005, %v2156, %v2160
        %s2162 = scalar_lea.vmem %s3, 26
        %v2163 = vld [vmem:[%s2162] sm:$0x3]
        %v2164 = vunpack.c.l.b16 %v2161
        %v2165 = vpack.c.b16 %v1920, %v1919
        %v2166 = vpack.c.b16 %v1922, %v1921
        %v2167 = vpack.c.b16 %v1924, %v1923
        %v2168 = vpack.c.b16 %v2164, %v1925
        %v2170 = vsel %vm1132, %v2165, 0
        %v2173 = vsel %vm1132, %v2166, 0
        %v2176 = vsel %vm1132, %v2167, 0
        %v2179 = vsel %vm1132, %v2168, 0
        %v2182 = vsel %vm1145, %v2163, 0
        %2184 = vmatpush.bf16.msra.mxu0 0
        %2185 = vmatpush.bf16.msra.mxu0 0
        %2186 = vmatpush.bf16.msra.mxu0 0
        %2187 = vmatpush.bf16.msra.mxu0 0
        %2188 = vmatpush.bf16.msra.mxu0 0
        %2189 = vmatpush.bf16.msra.mxu0 0
        %2190 = vmatpush.bf16.msra.mxu0 0
        %2191 = vmatpush.bf16.msra.mxu0 %v2182
        %2192 = vmatmul.bf16.gmra.mxu0 %v2170
        %v2193 = vpop.f32.mrf.mxu0
        %v2194 = vadd.f32 0.0, %v2193
        %v2195 = vpop.f32.mrf.mxu0
        %v2196 = vadd.f32 0.0, %v2195
        %2197 = vmatmul.bf16.gmra.mxu0 %v2173
        %v2198 = vpop.f32.mrf.mxu0
        %v2199 = vadd.f32 0.0, %v2198
        %v2200 = vpop.f32.mrf.mxu0
        %v2201 = vadd.f32 0.0, %v2200
        %2202 = vmatmul.bf16.gmra.mxu0 %v2176
        %v2203 = vpop.f32.mrf.mxu0
        %v2204 = vadd.f32 0.0, %v2203
        %v2205 = vpop.f32.mrf.mxu0
        %v2206 = vadd.f32 0.0, %v2205
        %2207 = vmatmul.bf16.gmra.mxu0 %v2179
        %v2208 = vpop.f32.mrf.mxu0
        %v2209 = vadd.f32 0.0, %v2208
        %v2210 = vpop.f32.mrf.mxu0
        %v2211 = vadd.f32 0.0, %v2210
        %2212 = vdwg.mxu0
        %v2213 = vadd.f32 %v2140, %v2194
        %v2214 = vadd.f32 %v2141, %v2196
        %v2215 = vadd.f32 %v2142, %v2199
        %v2216 = vadd.f32 %v2143, %v2201
        %v2217 = vadd.f32 %v2144, %v2204
        %v2218 = vadd.f32 %v2145, %v2206
        %v2219 = vadd.f32 %v2146, %v2209
        %v2220 = vadd.f32 %v2147, %v2211
        %v2222 = vrot.slane %v1726, 5
        %v2223 = vrot.slane %v2222, 4
        %v2224 = vrot.slane %v1727, 5
        %v2225 = vsel %vm1252, %v2223, %v2224
        %s2226 = scalar_lea.vmem %s3, 28
        %v2227 = vld [vmem:[%s2226] sm:$0x3]
        %v2228 = vunpack.c.l.b16 %v2225
        %v2229 = vpack.c.b16 %v2026, %v2025
        %v2230 = vpack.c.b16 %v2028, %v2027
        %v2231 = vpack.c.b16 %v2030, %v2029
        %v2232 = vpack.c.b16 %v2228, %v2031
        %v2234 = vsel %vm1132, %v2229, 0
        %v2237 = vsel %vm1132, %v2230, 0
        %v2240 = vsel %vm1132, %v2231, 0
        %v2243 = vsel %vm1132, %v2232, 0
        %v2246 = vsel %vm1145, %v2227, 0
        %2248 = vmatpush.bf16.msra.mxu0 0
        %2249 = vmatpush.bf16.msra.mxu0 0
        %2250 = vmatpush.bf16.msra.mxu0 0
        %2251 = vmatpush.bf16.msra.mxu0 0
        %2252 = vmatpush.bf16.msra.mxu0 0
        %2253 = vmatpush.bf16.msra.mxu0 0
        %2254 = vmatpush.bf16.msra.mxu0 0
        %2255 = vmatpush.bf16.msra.mxu0 %v2246
        %2256 = vmatmul.bf16.gmra.mxu0 %v2234
        %v2257 = vpop.f32.mrf.mxu0
        %v2258 = vadd.f32 0.0, %v2257
        %v2259 = vpop.f32.mrf.mxu0
        %v2260 = vadd.f32 0.0, %v2259
        %2261 = vmatmul.bf16.gmra.mxu0 %v2237
        %v2262 = vpop.f32.mrf.mxu0
        %v2263 = vadd.f32 0.0, %v2262
        %v2264 = vpop.f32.mrf.mxu0
        %v2265 = vadd.f32 0.0, %v2264
        %2266 = vmatmul.bf16.gmra.mxu0 %v2240
        %v2267 = vpop.f32.mrf.mxu0
        %v2268 = vadd.f32 0.0, %v2267
        %v2269 = vpop.f32.mrf.mxu0
        %v2270 = vadd.f32 0.0, %v2269
        %2271 = vmatmul.bf16.gmra.mxu0 %v2243
        %v2272 = vpop.f32.mrf.mxu0
        %v2273 = vadd.f32 0.0, %v2272
        %v2274 = vpop.f32.mrf.mxu0
        %v2275 = vadd.f32 0.0, %v2274
        %2276 = vdwg.mxu0
        %v2277 = vadd.f32 %v2213, %v2258
        %v2278 = vadd.f32 %v2214, %v2260
        %v2279 = vadd.f32 %v2215, %v2263
        %v2280 = vadd.f32 %v2216, %v2265
        %v2281 = vadd.f32 %v2217, %v2268
        %v2282 = vadd.f32 %v2218, %v2270
        %v2283 = vadd.f32 %v2219, %v2273
        %v2284 = vadd.f32 %v2220, %v2275
        %s2285 = scalar_lea.vmem %s3, 30
        %v2286 = vld [vmem:[%s2285] sm:$0x3]
        %v2288 = vunpack.c.l.b16 %v1728
        %v2289 = vpack.c.b16 %v2288, %v2091
        %v2291 = vsel %vm1132, %v2289, 0
        %v2294 = vsel %vm1145, %v2286, 0
        %2296 = vmatpush.bf16.msra.mxu0 0
        %2297 = vmatpush.bf16.msra.mxu0 0
        %2298 = vmatpush.bf16.msra.mxu0 0
        %2299 = vmatpush.bf16.msra.mxu0 0
        %2300 = vmatpush.bf16.msra.mxu0 0
        %2301 = vmatpush.bf16.msra.mxu0 0
        %2302 = vmatpush.bf16.msra.mxu0 0
        %2303 = vmatpush.bf16.msra.mxu0 %v2294
        %2304 = vmatmul.bf16.gmra.mxu0 %v1756
        %v2305 = vpop.f32.mrf.mxu0
        %v2306 = vadd.f32 0.0, %v2305
        %v2307 = vpop.f32.mrf.mxu0
        %v2308 = vadd.f32 0.0, %v2307
        %2309 = vmatmul.bf16.gmra.mxu0 %v1759
        %v2310 = vpop.f32.mrf.mxu0
        %v2311 = vadd.f32 0.0, %v2310
        %v2312 = vpop.f32.mrf.mxu0
        %v2313 = vadd.f32 0.0, %v2312
        %2314 = vmatmul.bf16.gmra.mxu0 %v1762
        %v2315 = vpop.f32.mrf.mxu0
        %v2316 = vadd.f32 0.0, %v2315
        %v2317 = vpop.f32.mrf.mxu0
        %v2318 = vadd.f32 0.0, %v2317
        %2319 = vmatmul.bf16.gmra.mxu0 %v2291
        %v2320 = vpop.f32.mrf.mxu0
        %v2321 = vadd.f32 0.0, %v2320
        %v2322 = vpop.f32.mrf.mxu0
        %v2323 = vadd.f32 0.0, %v2322
        %2324 = vdwg.mxu0
        %v2325 = vadd.f32 %v2277, %v2306
        %v2326 = vadd.f32 %v2278, %v2308
        %v2327 = vadd.f32 %v2279, %v2311
        %v2328 = vadd.f32 %v2280, %v2313
        %v2329 = vadd.f32 %v2281, %v2316
        %v2330 = vadd.f32 %v2282, %v2318
        %v2331 = vadd.f32 %v2283, %v2321
        %v2332 = vadd.f32 %v2284, %v2323
        %v2334 = vshrl.u32 %v1728, 16
        %v2336 = vrot.slane %v2334, 4
        %v2337 = vshll.u32 %v1728, 16
        %v2339 = vrot.slane %v2337, 5
        %v2340 = vor.u32 %v2336, %v2339
        %v2341 = vrot.slane %v2340, 4
        %v2343 = vshll.u32 %v1729, 16
        %v2345 = vrot.slane %v2343, 5
        %v2346 = vsel %vm1005, %v2341, %v2345
        %s2347 = scalar_lea.vmem %s3, 32
        %v2348 = vld [vmem:[%s2347] sm:$0x3]
        %v2349 = vunpack.c.l.b16 %v2346
        %v2350 = vpack.c.b16 %v2349, %v2164
        %v2352 = vsel %vm1132, %v2350, 0
        %v2355 = vsel %vm1145, %v2348, 0
        %2357 = vmatpush.bf16.msra.mxu0 0
        %2358 = vmatpush.bf16.msra.mxu0 0
        %2359 = vmatpush.bf16.msra.mxu0 0
        %2360 = vmatpush.bf16.msra.mxu0 0
        %2361 = vmatpush.bf16.msra.mxu0 0
        %2362 = vmatpush.bf16.msra.mxu0 0
        %2363 = vmatpush.bf16.msra.mxu0 0
        %2364 = vmatpush.bf16.msra.mxu0 %v2355
        %2365 = vmatmul.bf16.gmra.mxu0 %v1934
        %v2366 = vpop.f32.mrf.mxu0
        %v2367 = vadd.f32 0.0, %v2366
        %v2368 = vpop.f32.mrf.mxu0
        %v2369 = vadd.f32 0.0, %v2368
        %2370 = vmatmul.bf16.gmra.mxu0 %v1937
        %v2371 = vpop.f32.mrf.mxu0
        %v2372 = vadd.f32 0.0, %v2371
        %v2373 = vpop.f32.mrf.mxu0
        %v2374 = vadd.f32 0.0, %v2373
        %2375 = vmatmul.bf16.gmra.mxu0 %v1940
        %v2376 = vpop.f32.mrf.mxu0
        %v2377 = vadd.f32 0.0, %v2376
        %v2378 = vpop.f32.mrf.mxu0
        %v2379 = vadd.f32 0.0, %v2378
        %2380 = vmatmul.bf16.gmra.mxu0 %v2352
        %v2381 = vpop.f32.mrf.mxu0
        %v2382 = vadd.f32 0.0, %v2381
        %v2383 = vpop.f32.mrf.mxu0
        %v2384 = vadd.f32 0.0, %v2383
        %2385 = vdwg.mxu0
        %v2386 = vadd.f32 %v2325, %v2367
        %v2387 = vadd.f32 %v2326, %v2369
        %v2388 = vadd.f32 %v2327, %v2372
        %v2389 = vadd.f32 %v2328, %v2374
        %v2390 = vadd.f32 %v2329, %v2377
        %v2391 = vadd.f32 %v2330, %v2379
        %v2392 = vadd.f32 %v2331, %v2382
        %v2393 = vadd.f32 %v2332, %v2384
        %v2395 = vrot.slane %v1728, 5
        %v2396 = vrot.slane %v2395, 4
        %v2397 = vrot.slane %v1729, 5
        %v2398 = vsel %vm1252, %v2396, %v2397
        %s2399 = scalar_lea.vmem %s3, 34
        %v2400 = vld [vmem:[%s2399] sm:$0x3]
        %v2401 = vunpack.c.l.b16 %v2398
        %v2402 = vpack.c.b16 %v2401, %v2228
        %v2404 = vsel %vm1132, %v2402, 0
        %v2407 = vsel %vm1145, %v2400, 0
        %2409 = vmatpush.bf16.msra.mxu0 0
        %2410 = vmatpush.bf16.msra.mxu0 0
        %2411 = vmatpush.bf16.msra.mxu0 0
        %2412 = vmatpush.bf16.msra.mxu0 0
        %2413 = vmatpush.bf16.msra.mxu0 0
        %2414 = vmatpush.bf16.msra.mxu0 0
        %2415 = vmatpush.bf16.msra.mxu0 0
        %2416 = vmatpush.bf16.msra.mxu0 %v2407
        %2417 = vmatmul.bf16.gmra.mxu0 %v2040
        %v2418 = vpop.f32.mrf.mxu0
        %v2419 = vadd.f32 0.0, %v2418
        %v2420 = vpop.f32.mrf.mxu0
        %v2421 = vadd.f32 0.0, %v2420
        %2422 = vmatmul.bf16.gmra.mxu0 %v2043
        %v2423 = vpop.f32.mrf.mxu0
        %v2424 = vadd.f32 0.0, %v2423
        %v2425 = vpop.f32.mrf.mxu0
        %v2426 = vadd.f32 0.0, %v2425
        %2427 = vmatmul.bf16.gmra.mxu0 %v2046
        %v2428 = vpop.f32.mrf.mxu0
        %v2429 = vadd.f32 0.0, %v2428
        %v2430 = vpop.f32.mrf.mxu0
        %v2431 = vadd.f32 0.0, %v2430
        %2432 = vmatmul.bf16.gmra.mxu0 %v2404
        %v2433 = vpop.f32.mrf.mxu0
        %v2434 = vadd.f32 0.0, %v2433
        %v2435 = vpop.f32.mrf.mxu0
        %v2436 = vadd.f32 0.0, %v2435
        %2437 = vdwg.mxu0
        %v2438 = vadd.f32 %v2386, %v2419
        %v2439 = vadd.f32 %v2387, %v2421
        %v2440 = vadd.f32 %v2388, %v2424
        %v2441 = vadd.f32 %v2389, %v2426
        %v2442 = vadd.f32 %v2390, %v2429
        %v2443 = vadd.f32 %v2391, %v2431
        %v2444 = vadd.f32 %v2392, %v2434
        %v2445 = vadd.f32 %v2393, %v2436
        %s2446 = scalar_lea.vmem [#allocation2], 160
        %v2447 = vld [vmem:[%s2446] sm:$0xf]
        %v2448 = vld [vmem:[%s2446 + $0x4] sm:$0x1]
        %v2449 = vld [vmem:[%s2446 + $0x8] sm:$0xf]
        %v2450 = vld [vmem:[%s2446 + $0xc] sm:$0x1]
        %v2451 = vld [vmem:[%s2446 + $0x10] sm:$0xf]
        %v2452 = vld [vmem:[%s2446 + $0x14] sm:$0x1]
        %v2453 = vld [vmem:[%s2446 + $0x18] sm:$0xf]
        %v2454 = vld [vmem:[%s2446 + $0x1c] sm:$0x1]
        %v2455 = vld [vmem:[%s2446 + $0x20] sm:$0xf]
        %v2456 = vld [vmem:[%s2446 + $0x24] sm:$0x1]
        %v2457 = vld [vmem:[%s2446 + $0x28] sm:$0xf]
        %v2458 = vld [vmem:[%s2446 + $0x2c] sm:$0x1]
        %v2459 = vld [vmem:[%s2446 + $0x30] sm:$0xf]
        %v2460 = vld [vmem:[%s2446 + $0x34] sm:$0x1]
        %v2461 = vld [vmem:[%s2446 + $0x38] sm:$0xf]
        %v2462 = vld [vmem:[%s2446 + $0x3c] sm:$0x1]
        %v2463 = vld [vmem:[%s2446 + $0x40] sm:$0xf]
        %v2464 = vld [vmem:[%s2446 + $0x44] sm:$0x1]
        %v2465 = vld [vmem:[%s2446 + $0x48] sm:$0xf]
        %v2466 = vld [vmem:[%s2446 + $0x4c] sm:$0x1]
        %s2467 = scalar_lea.vmem %s3, 36
        %v2468 = vld [vmem:[%s2467] sm:$0x3]
        %v2477 = vunpack.c.l.b16 %v2447
        %v2478 = vunpack.c.l.b16 %v2449
        %v2479 = vunpack.c.l.b16 %v2451
        %v2480 = vunpack.c.l.b16 %v2453
        %v2481 = vunpack.c.l.b16 %v2455
        %v2482 = vunpack.c.l.b16 %v2457
        %v2483 = vunpack.c.l.b16 %v2459
        %v2484 = vunpack.c.l.b16 %v2461
        %v2485 = vpack.c.b16 %v2478, %v2477
        %v2486 = vpack.c.b16 %v2480, %v2479
        %v2487 = vpack.c.b16 %v2482, %v2481
        %v2488 = vpack.c.b16 %v2484, %v2483
        %v2490 = vsel %vm1132, %v2485, 0
        %v2493 = vsel %vm1132, %v2486, 0
        %v2496 = vsel %vm1132, %v2487, 0
        %v2499 = vsel %vm1132, %v2488, 0
        %v2502 = vsel %vm1145, %v2468, 0
        %2504 = vmatpush.bf16.msra.mxu0 0
        %2505 = vmatpush.bf16.msra.mxu0 0
        %2506 = vmatpush.bf16.msra.mxu0 0
        %2507 = vmatpush.bf16.msra.mxu0 0
        %2508 = vmatpush.bf16.msra.mxu0 0
        %2509 = vmatpush.bf16.msra.mxu0 0
        %2510 = vmatpush.bf16.msra.mxu0 0
        %2511 = vmatpush.bf16.msra.mxu0 %v2502
        %2512 = vmatmul.bf16.gmra.mxu0 %v2490
        %v2513 = vpop.f32.mrf.mxu0
        %v2514 = vadd.f32 0.0, %v2513
        %v2515 = vpop.f32.mrf.mxu0
        %v2516 = vadd.f32 0.0, %v2515
        %2517 = vmatmul.bf16.gmra.mxu0 %v2493
        %v2518 = vpop.f32.mrf.mxu0
        %v2519 = vadd.f32 0.0, %v2518
        %v2520 = vpop.f32.mrf.mxu0
        %v2521 = vadd.f32 0.0, %v2520
        %2522 = vmatmul.bf16.gmra.mxu0 %v2496
        %v2523 = vpop.f32.mrf.mxu0
        %v2524 = vadd.f32 0.0, %v2523
        %v2525 = vpop.f32.mrf.mxu0
        %v2526 = vadd.f32 0.0, %v2525
        %2527 = vmatmul.bf16.gmra.mxu0 %v2499
        %v2528 = vpop.f32.mrf.mxu0
        %v2529 = vadd.f32 0.0, %v2528
        %v2530 = vpop.f32.mrf.mxu0
        %v2531 = vadd.f32 0.0, %v2530
        %2532 = vdwg.mxu0
        %v2533 = vadd.f32 %v2438, %v2514
        %v2534 = vadd.f32 %v2439, %v2516
        %v2535 = vadd.f32 %v2440, %v2519
        %v2536 = vadd.f32 %v2441, %v2521
        %v2537 = vadd.f32 %v2442, %v2524
        %v2538 = vadd.f32 %v2443, %v2526
        %v2539 = vadd.f32 %v2444, %v2529
        %v2540 = vadd.f32 %v2445, %v2531
        %v2542 = vshrl.u32 %v2447, 16
        %v2544 = vrot.slane %v2542, 4
        %v2545 = vshll.u32 %v2447, 16
        %v2547 = vrot.slane %v2545, 5
        %v2548 = vor.u32 %v2544, %v2547
        %v2549 = vrot.slane %v2548, 4
        %v2551 = vshll.u32 %v2448, 16
        %v2553 = vrot.slane %v2551, 5
        %v2554 = vsel %vm1005, %v2549, %v2553
        %v2556 = vshrl.u32 %v2449, 16
        %v2558 = vrot.slane %v2556, 4
        %v2559 = vshll.u32 %v2449, 16
        %v2561 = vrot.slane %v2559, 5
        %v2562 = vor.u32 %v2558, %v2561
        %v2563 = vrot.slane %v2562, 4
        %v2565 = vshll.u32 %v2450, 16
        %v2567 = vrot.slane %v2565, 5
        %v2568 = vsel %vm1005, %v2563, %v2567
        %v2570 = vshrl.u32 %v2451, 16
        %v2572 = vrot.slane %v2570, 4
        %v2573 = vshll.u32 %v2451, 16
        %v2575 = vrot.slane %v2573, 5
        %v2576 = vor.u32 %v2572, %v2575
        %v2577 = vrot.slane %v2576, 4
        %v2579 = vshll.u32 %v2452, 16
        %v2581 = vrot.slane %v2579, 5
        %v2582 = vsel %vm1005, %v2577, %v2581
        %v2584 = vshrl.u32 %v2453, 16
        %v2586 = vrot.slane %v2584, 4
        %v2587 = vshll.u32 %v2453, 16
        %v2589 = vrot.slane %v2587, 5
        %v2590 = vor.u32 %v2586, %v2589
        %v2591 = vrot.slane %v2590, 4
        %v2593 = vshll.u32 %v2454, 16
        %v2595 = vrot.slane %v2593, 5
        %v2596 = vsel %vm1005, %v2591, %v2595
        %v2598 = vshrl.u32 %v2455, 16
        %v2600 = vrot.slane %v2598, 4
        %v2601 = vshll.u32 %v2455, 16
        %v2603 = vrot.slane %v2601, 5
        %v2604 = vor.u32 %v2600, %v2603
        %v2605 = vrot.slane %v2604, 4
        %v2607 = vshll.u32 %v2456, 16
        %v2609 = vrot.slane %v2607, 5
        %v2610 = vsel %vm1005, %v2605, %v2609
        %v2612 = vshrl.u32 %v2457, 16
        %v2614 = vrot.slane %v2612, 4
        %v2615 = vshll.u32 %v2457, 16
        %v2617 = vrot.slane %v2615, 5
        %v2618 = vor.u32 %v2614, %v2617
        %v2619 = vrot.slane %v2618, 4
        %v2621 = vshll.u32 %v2458, 16
        %v2623 = vrot.slane %v2621, 5
        %v2624 = vsel %vm1005, %v2619, %v2623
        %v2626 = vshrl.u32 %v2459, 16
        %v2628 = vrot.slane %v2626, 4
        %v2629 = vshll.u32 %v2459, 16
        %v2631 = vrot.slane %v2629, 5
        %v2632 = vor.u32 %v2628, %v2631
        %v2633 = vrot.slane %v2632, 4
        %v2635 = vshll.u32 %v2460, 16
        %v2637 = vrot.slane %v2635, 5
        %v2638 = vsel %vm1005, %v2633, %v2637
        %v2640 = vshrl.u32 %v2461, 16
        %v2642 = vrot.slane %v2640, 4
        %v2643 = vshll.u32 %v2461, 16
        %v2645 = vrot.slane %v2643, 5
        %v2646 = vor.u32 %v2642, %v2645
        %v2647 = vrot.slane %v2646, 4
        %v2649 = vshll.u32 %v2462, 16
        %v2651 = vrot.slane %v2649, 5
        %v2652 = vsel %vm1005, %v2647, %v2651
        %s2653 = scalar_lea.vmem %s3, 38
        %v2654 = vld [vmem:[%s2653] sm:$0x3]
        %v2655 = vunpack.c.l.b16 %v2554
        %v2656 = vunpack.c.l.b16 %v2568
        %v2657 = vunpack.c.l.b16 %v2582
        %v2658 = vunpack.c.l.b16 %v2596
        %v2659 = vunpack.c.l.b16 %v2610
        %v2660 = vunpack.c.l.b16 %v2624
        %v2661 = vunpack.c.l.b16 %v2638
        %v2662 = vunpack.c.l.b16 %v2652
        %v2663 = vpack.c.b16 %v2656, %v2655
        %v2664 = vpack.c.b16 %v2658, %v2657
        %v2665 = vpack.c.b16 %v2660, %v2659
        %v2666 = vpack.c.b16 %v2662, %v2661
        %v2668 = vsel %vm1132, %v2663, 0
        %v2671 = vsel %vm1132, %v2664, 0
        %v2674 = vsel %vm1132, %v2665, 0
        %v2677 = vsel %vm1132, %v2666, 0
        %v2680 = vsel %vm1145, %v2654, 0
        %2682 = vmatpush.bf16.msra.mxu0 0
        %2683 = vmatpush.bf16.msra.mxu0 0
        %2684 = vmatpush.bf16.msra.mxu0 0
        %2685 = vmatpush.bf16.msra.mxu0 0
        %2686 = vmatpush.bf16.msra.mxu0 0
        %2687 = vmatpush.bf16.msra.mxu0 0
        %2688 = vmatpush.bf16.msra.mxu0 0
        %2689 = vmatpush.bf16.msra.mxu0 %v2680
        %2690 = vmatmul.bf16.gmra.mxu0 %v2668
        %v2691 = vpop.f32.mrf.mxu0
        %v2692 = vadd.f32 0.0, %v2691
        %v2693 = vpop.f32.mrf.mxu0
        %v2694 = vadd.f32 0.0, %v2693
        %2695 = vmatmul.bf16.gmra.mxu0 %v2671
        %v2696 = vpop.f32.mrf.mxu0
        %v2697 = vadd.f32 0.0, %v2696
        %v2698 = vpop.f32.mrf.mxu0
        %v2699 = vadd.f32 0.0, %v2698
        %2700 = vmatmul.bf16.gmra.mxu0 %v2674
        %v2701 = vpop.f32.mrf.mxu0
        %v2702 = vadd.f32 0.0, %v2701
        %v2703 = vpop.f32.mrf.mxu0
        %v2704 = vadd.f32 0.0, %v2703
        %2705 = vmatmul.bf16.gmra.mxu0 %v2677
        %v2706 = vpop.f32.mrf.mxu0
        %v2707 = vadd.f32 0.0, %v2706
        %v2708 = vpop.f32.mrf.mxu0
        %v2709 = vadd.f32 0.0, %v2708
        %2710 = vdwg.mxu0
        %v2711 = vadd.f32 %v2533, %v2692
        %v2712 = vadd.f32 %v2534, %v2694
        %v2713 = vadd.f32 %v2535, %v2697
        %v2714 = vadd.f32 %v2536, %v2699
        %v2715 = vadd.f32 %v2537, %v2702
        %v2716 = vadd.f32 %v2538, %v2704
        %v2717 = vadd.f32 %v2539, %v2707
        %v2718 = vadd.f32 %v2540, %v2709
        %v2727 = vrot.slane %v2447, 5
        %v2728 = vrot.slane %v2727, 4
        %v2729 = vrot.slane %v2448, 5
        %v2730 = vsel %vm1252, %v2728, %v2729
        %v2731 = vrot.slane %v2449, 5
        %v2732 = vrot.slane %v2731, 4
        %v2733 = vrot.slane %v2450, 5
        %v2734 = vsel %vm1252, %v2732, %v2733
        %v2735 = vrot.slane %v2451, 5
        %v2736 = vrot.slane %v2735, 4
        %v2737 = vrot.slane %v2452, 5
        %v2738 = vsel %vm1252, %v2736, %v2737
        %v2739 = vrot.slane %v2453, 5
        %v2740 = vrot.slane %v2739, 4
        %v2741 = vrot.slane %v2454, 5
        %v2742 = vsel %vm1252, %v2740, %v2741
        %v2743 = vrot.slane %v2455, 5
        %v2744 = vrot.slane %v2743, 4
        %v2745 = vrot.slane %v2456, 5
        %v2746 = vsel %vm1252, %v2744, %v2745
        %v2747 = vrot.slane %v2457, 5
        %v2748 = vrot.slane %v2747, 4
        %v2749 = vrot.slane %v2458, 5
        %v2750 = vsel %vm1252, %v2748, %v2749
        %v2751 = vrot.slane %v2459, 5
        %v2752 = vrot.slane %v2751, 4
        %v2753 = vrot.slane %v2460, 5
        %v2754 = vsel %vm1252, %v2752, %v2753
        %v2755 = vrot.slane %v2461, 5
        %v2756 = vrot.slane %v2755, 4
        %v2757 = vrot.slane %v2462, 5
        %v2758 = vsel %vm1252, %v2756, %v2757
        %s2759 = scalar_lea.vmem %s3, 40
        %v2760 = vld [vmem:[%s2759] sm:$0x3]
        %v2761 = vunpack.c.l.b16 %v2730
        %v2762 = vunpack.c.l.b16 %v2734
        %v2763 = vunpack.c.l.b16 %v2738
        %v2764 = vunpack.c.l.b16 %v2742
        %v2765 = vunpack.c.l.b16 %v2746
        %v2766 = vunpack.c.l.b16 %v2750
        %v2767 = vunpack.c.l.b16 %v2754
        %v2768 = vunpack.c.l.b16 %v2758
        %v2769 = vpack.c.b16 %v2762, %v2761
        %v2770 = vpack.c.b16 %v2764, %v2763
        %v2771 = vpack.c.b16 %v2766, %v2765
        %v2772 = vpack.c.b16 %v2768, %v2767
        %v2774 = vsel %vm1132, %v2769, 0
        %v2777 = vsel %vm1132, %v2770, 0
        %v2780 = vsel %vm1132, %v2771, 0
        %v2783 = vsel %vm1132, %v2772, 0
        %v2786 = vsel %vm1145, %v2760, 0
        %2788 = vmatpush.bf16.msra.mxu0 0
        %2789 = vmatpush.bf16.msra.mxu0 0
        %2790 = vmatpush.bf16.msra.mxu0 0
        %2791 = vmatpush.bf16.msra.mxu0 0
        %2792 = vmatpush.bf16.msra.mxu0 0
        %2793 = vmatpush.bf16.msra.mxu0 0
        %2794 = vmatpush.bf16.msra.mxu0 0
        %2795 = vmatpush.bf16.msra.mxu0 %v2786
        %2796 = vmatmul.bf16.gmra.mxu0 %v2774
        %v2797 = vpop.f32.mrf.mxu0
        %v2798 = vadd.f32 0.0, %v2797
        %v2799 = vpop.f32.mrf.mxu0
        %v2800 = vadd.f32 0.0, %v2799
        %2801 = vmatmul.bf16.gmra.mxu0 %v2777
        %v2802 = vpop.f32.mrf.mxu0
        %v2803 = vadd.f32 0.0, %v2802
        %v2804 = vpop.f32.mrf.mxu0
        %v2805 = vadd.f32 0.0, %v2804
        %2806 = vmatmul.bf16.gmra.mxu0 %v2780
        %v2807 = vpop.f32.mrf.mxu0
        %v2808 = vadd.f32 0.0, %v2807
        %v2809 = vpop.f32.mrf.mxu0
        %v2810 = vadd.f32 0.0, %v2809
        %2811 = vmatmul.bf16.gmra.mxu0 %v2783
        %v2812 = vpop.f32.mrf.mxu0
        %v2813 = vadd.f32 0.0, %v2812
        %v2814 = vpop.f32.mrf.mxu0
        %v2815 = vadd.f32 0.0, %v2814
        %2816 = vdwg.mxu0
        %v2817 = vadd.f32 %v2711, %v2798
        %v2818 = vadd.f32 %v2712, %v2800
        %v2819 = vadd.f32 %v2713, %v2803
        %v2820 = vadd.f32 %v2714, %v2805
        %v2821 = vadd.f32 %v2715, %v2808
        %v2822 = vadd.f32 %v2716, %v2810
        %v2823 = vadd.f32 %v2717, %v2813
        %v2824 = vadd.f32 %v2718, %v2815
        %s2825 = scalar_lea.vmem %s3, 42
        %v2826 = vld [vmem:[%s2825] sm:$0x3]
        %v2828 = vunpack.c.l.b16 %v2463
        %v2829 = vpack.c.b16 %v2479, %v2478
        %v2830 = vpack.c.b16 %v2481, %v2480
        %v2831 = vpack.c.b16 %v2483, %v2482
        %v2832 = vpack.c.b16 %v2828, %v2484
        %v2834 = vsel %vm1132, %v2829, 0
        %v2837 = vsel %vm1132, %v2830, 0
        %v2840 = vsel %vm1132, %v2831, 0
        %v2843 = vsel %vm1132, %v2832, 0
        %v2846 = vsel %vm1145, %v2826, 0
        %2848 = vmatpush.bf16.msra.mxu0 0
        %2849 = vmatpush.bf16.msra.mxu0 0
        %2850 = vmatpush.bf16.msra.mxu0 0
        %2851 = vmatpush.bf16.msra.mxu0 0
        %2852 = vmatpush.bf16.msra.mxu0 0
        %2853 = vmatpush.bf16.msra.mxu0 0
        %2854 = vmatpush.bf16.msra.mxu0 0
        %2855 = vmatpush.bf16.msra.mxu0 %v2846
        %2856 = vmatmul.bf16.gmra.mxu0 %v2834
        %v2857 = vpop.f32.mrf.mxu0
        %v2858 = vadd.f32 0.0, %v2857
        %v2859 = vpop.f32.mrf.mxu0
        %v2860 = vadd.f32 0.0, %v2859
        %2861 = vmatmul.bf16.gmra.mxu0 %v2837
        %v2862 = vpop.f32.mrf.mxu0
        %v2863 = vadd.f32 0.0, %v2862
        %v2864 = vpop.f32.mrf.mxu0
        %v2865 = vadd.f32 0.0, %v2864
        %2866 = vmatmul.bf16.gmra.mxu0 %v2840
        %v2867 = vpop.f32.mrf.mxu0
        %v2868 = vadd.f32 0.0, %v2867
        %v2869 = vpop.f32.mrf.mxu0
        %v2870 = vadd.f32 0.0, %v2869
        %2871 = vmatmul.bf16.gmra.mxu0 %v2843
        %v2872 = vpop.f32.mrf.mxu0
        %v2873 = vadd.f32 0.0, %v2872
        %v2874 = vpop.f32.mrf.mxu0
        %v2875 = vadd.f32 0.0, %v2874
        %2876 = vdwg.mxu0
        %v2877 = vadd.f32 %v2817, %v2858
        %v2878 = vadd.f32 %v2818, %v2860
        %v2879 = vadd.f32 %v2819, %v2863
        %v2880 = vadd.f32 %v2820, %v2865
        %v2881 = vadd.f32 %v2821, %v2868
        %v2882 = vadd.f32 %v2822, %v2870
        %v2883 = vadd.f32 %v2823, %v2873
        %v2884 = vadd.f32 %v2824, %v2875
        %v2886 = vshrl.u32 %v2463, 16
        %v2888 = vrot.slane %v2886, 4
        %v2889 = vshll.u32 %v2463, 16
        %v2891 = vrot.slane %v2889, 5
        %v2892 = vor.u32 %v2888, %v2891
        %v2893 = vrot.slane %v2892, 4
        %v2895 = vshll.u32 %v2464, 16
        %v2897 = vrot.slane %v2895, 5
        %v2898 = vsel %vm1005, %v2893, %v2897
        %s2899 = scalar_lea.vmem %s3, 44
        %v2900 = vld [vmem:[%s2899] sm:$0x3]
        %v2901 = vunpack.c.l.b16 %v2898
        %v2902 = vpack.c.b16 %v2657, %v2656
        %v2903 = vpack.c.b16 %v2659, %v2658
        %v2904 = vpack.c.b16 %v2661, %v2660
        %v2905 = vpack.c.b16 %v2901, %v2662
        %v2907 = vsel %vm1132, %v2902, 0
        %v2910 = vsel %vm1132, %v2903, 0
        %v2913 = vsel %vm1132, %v2904, 0
        %v2916 = vsel %vm1132, %v2905, 0
        %v2919 = vsel %vm1145, %v2900, 0
        %2921 = vmatpush.bf16.msra.mxu0 0
        %2922 = vmatpush.bf16.msra.mxu0 0
        %2923 = vmatpush.bf16.msra.mxu0 0
        %2924 = vmatpush.bf16.msra.mxu0 0
        %2925 = vmatpush.bf16.msra.mxu0 0
        %2926 = vmatpush.bf16.msra.mxu0 0
        %2927 = vmatpush.bf16.msra.mxu0 0
        %2928 = vmatpush.bf16.msra.mxu0 %v2919
        %2929 = vmatmul.bf16.gmra.mxu0 %v2907
        %v2930 = vpop.f32.mrf.mxu0
        %v2931 = vadd.f32 0.0, %v2930
        %v2932 = vpop.f32.mrf.mxu0
        %v2933 = vadd.f32 0.0, %v2932
        %2934 = vmatmul.bf16.gmra.mxu0 %v2910
        %v2935 = vpop.f32.mrf.mxu0
        %v2936 = vadd.f32 0.0, %v2935
        %v2937 = vpop.f32.mrf.mxu0
        %v2938 = vadd.f32 0.0, %v2937
        %2939 = vmatmul.bf16.gmra.mxu0 %v2913
        %v2940 = vpop.f32.mrf.mxu0
        %v2941 = vadd.f32 0.0, %v2940
        %v2942 = vpop.f32.mrf.mxu0
        %v2943 = vadd.f32 0.0, %v2942
        %2944 = vmatmul.bf16.gmra.mxu0 %v2916
        %v2945 = vpop.f32.mrf.mxu0
        %v2946 = vadd.f32 0.0, %v2945
        %v2947 = vpop.f32.mrf.mxu0
        %v2948 = vadd.f32 0.0, %v2947
        %2949 = vdwg.mxu0
        %v2950 = vadd.f32 %v2877, %v2931
        %v2951 = vadd.f32 %v2878, %v2933
        %v2952 = vadd.f32 %v2879, %v2936
        %v2953 = vadd.f32 %v2880, %v2938
        %v2954 = vadd.f32 %v2881, %v2941
        %v2955 = vadd.f32 %v2882, %v2943
        %v2956 = vadd.f32 %v2883, %v2946
        %v2957 = vadd.f32 %v2884, %v2948
        %v2959 = vrot.slane %v2463, 5
        %v2960 = vrot.slane %v2959, 4
        %v2961 = vrot.slane %v2464, 5
        %v2962 = vsel %vm1252, %v2960, %v2961
        %s2963 = scalar_lea.vmem %s3, 46
        %v2964 = vld [vmem:[%s2963] sm:$0x3]
        %v2965 = vunpack.c.l.b16 %v2962
        %v2966 = vpack.c.b16 %v2763, %v2762
        %v2967 = vpack.c.b16 %v2765, %v2764
        %v2968 = vpack.c.b16 %v2767, %v2766
        %v2969 = vpack.c.b16 %v2965, %v2768
        %v2971 = vsel %vm1132, %v2966, 0
        %v2974 = vsel %vm1132, %v2967, 0
        %v2977 = vsel %vm1132, %v2968, 0
        %v2980 = vsel %vm1132, %v2969, 0
        %v2983 = vsel %vm1145, %v2964, 0
        %2985 = vmatpush.bf16.msra.mxu0 0
        %2986 = vmatpush.bf16.msra.mxu0 0
        %2987 = vmatpush.bf16.msra.mxu0 0
        %2988 = vmatpush.bf16.msra.mxu0 0
        %2989 = vmatpush.bf16.msra.mxu0 0
        %2990 = vmatpush.bf16.msra.mxu0 0
        %2991 = vmatpush.bf16.msra.mxu0 0
        %2992 = vmatpush.bf16.msra.mxu0 %v2983
        %2993 = vmatmul.bf16.gmra.mxu0 %v2971
        %v2994 = vpop.f32.mrf.mxu0
        %v2995 = vadd.f32 0.0, %v2994
        %v2996 = vpop.f32.mrf.mxu0
        %v2997 = vadd.f32 0.0, %v2996
        %2998 = vmatmul.bf16.gmra.mxu0 %v2974
        %v2999 = vpop.f32.mrf.mxu0
        %v3000 = vadd.f32 0.0, %v2999
        %v3001 = vpop.f32.mrf.mxu0
        %v3002 = vadd.f32 0.0, %v3001
        %3003 = vmatmul.bf16.gmra.mxu0 %v2977
        %v3004 = vpop.f32.mrf.mxu0
        %v3005 = vadd.f32 0.0, %v3004
        %v3006 = vpop.f32.mrf.mxu0
        %v3007 = vadd.f32 0.0, %v3006
        %3008 = vmatmul.bf16.gmra.mxu0 %v2980
        %v3009 = vpop.f32.mrf.mxu0
        %v3010 = vadd.f32 0.0, %v3009
        %v3011 = vpop.f32.mrf.mxu0
        %v3012 = vadd.f32 0.0, %v3011
        %3013 = vdwg.mxu0
        %v3014 = vadd.f32 %v2950, %v2995
        %v3015 = vadd.f32 %v2951, %v2997
        %v3016 = vadd.f32 %v2952, %v3000
        %v3017 = vadd.f32 %v2953, %v3002
        %v3018 = vadd.f32 %v2954, %v3005
        %v3019 = vadd.f32 %v2955, %v3007
        %v3020 = vadd.f32 %v2956, %v3010
        %v3021 = vadd.f32 %v2957, %v3012
        %s3022 = scalar_lea.vmem %s3, 48
        %v3023 = vld [vmem:[%s3022] sm:$0x3]
        %v3025 = vunpack.c.l.b16 %v2465
        %v3026 = vpack.c.b16 %v3025, %v2828
        %v3028 = vsel %vm1132, %v3026, 0
        %v3031 = vsel %vm1145, %v3023, 0
        %3033 = vmatpush.bf16.msra.mxu0 0
        %3034 = vmatpush.bf16.msra.mxu0 0
        %3035 = vmatpush.bf16.msra.mxu0 0
        %3036 = vmatpush.bf16.msra.mxu0 0
        %3037 = vmatpush.bf16.msra.mxu0 0
        %3038 = vmatpush.bf16.msra.mxu0 0
        %3039 = vmatpush.bf16.msra.mxu0 0
        %3040 = vmatpush.bf16.msra.mxu0 %v3031
        %3041 = vmatmul.bf16.gmra.mxu0 %v2493
        %v3042 = vpop.f32.mrf.mxu0
        %v3043 = vadd.f32 0.0, %v3042
        %v3044 = vpop.f32.mrf.mxu0
        %v3045 = vadd.f32 0.0, %v3044
        %3046 = vmatmul.bf16.gmra.mxu0 %v2496
        %v3047 = vpop.f32.mrf.mxu0
        %v3048 = vadd.f32 0.0, %v3047
        %v3049 = vpop.f32.mrf.mxu0
        %v3050 = vadd.f32 0.0, %v3049
        %3051 = vmatmul.bf16.gmra.mxu0 %v2499
        %v3052 = vpop.f32.mrf.mxu0
        %v3053 = vadd.f32 0.0, %v3052
        %v3054 = vpop.f32.mrf.mxu0
        %v3055 = vadd.f32 0.0, %v3054
        %3056 = vmatmul.bf16.gmra.mxu0 %v3028
        %v3057 = vpop.f32.mrf.mxu0
        %v3058 = vadd.f32 0.0, %v3057
        %v3059 = vpop.f32.mrf.mxu0
        %v3060 = vadd.f32 0.0, %v3059
        %3061 = vdwg.mxu0
        %v3062 = vadd.f32 %v3014, %v3043
        %v3063 = vadd.f32 %v3015, %v3045
        %v3064 = vadd.f32 %v3016, %v3048
        %v3065 = vadd.f32 %v3017, %v3050
        %v3066 = vadd.f32 %v3018, %v3053
        %v3067 = vadd.f32 %v3019, %v3055
        %v3068 = vadd.f32 %v3020, %v3058
        %v3069 = vadd.f32 %v3021, %v3060
        %v3071 = vshrl.u32 %v2465, 16
        %v3073 = vrot.slane %v3071, 4
        %v3074 = vshll.u32 %v2465, 16
        %v3076 = vrot.slane %v3074, 5
        %v3077 = vor.u32 %v3073, %v3076
        %v3078 = vrot.slane %v3077, 4
        %v3080 = vshll.u32 %v2466, 16
        %v3082 = vrot.slane %v3080, 5
        %v3083 = vsel %vm1005, %v3078, %v3082
        %s3084 = scalar_lea.vmem %s3, 50
        %v3085 = vld [vmem:[%s3084] sm:$0x3]
        %v3086 = vunpack.c.l.b16 %v3083
        %v3087 = vpack.c.b16 %v3086, %v2901
        %v3089 = vsel %vm1132, %v3087, 0
        %v3092 = vsel %vm1145, %v3085, 0
        %3094 = vmatpush.bf16.msra.mxu0 0
        %3095 = vmatpush.bf16.msra.mxu0 0
        %3096 = vmatpush.bf16.msra.mxu0 0
        %3097 = vmatpush.bf16.msra.mxu0 0
        %3098 = vmatpush.bf16.msra.mxu0 0
        %3099 = vmatpush.bf16.msra.mxu0 0
        %3100 = vmatpush.bf16.msra.mxu0 0
        %3101 = vmatpush.bf16.msra.mxu0 %v3092
        %3102 = vmatmul.bf16.gmra.mxu0 %v2671
        %v3103 = vpop.f32.mrf.mxu0
        %v3104 = vadd.f32 0.0, %v3103
        %v3105 = vpop.f32.mrf.mxu0
        %v3106 = vadd.f32 0.0, %v3105
        %3107 = vmatmul.bf16.gmra.mxu0 %v2674
        %v3108 = vpop.f32.mrf.mxu0
        %v3109 = vadd.f32 0.0, %v3108
        %v3110 = vpop.f32.mrf.mxu0
        %v3111 = vadd.f32 0.0, %v3110
        %3112 = vmatmul.bf16.gmra.mxu0 %v2677
        %v3113 = vpop.f32.mrf.mxu0
        %v3114 = vadd.f32 0.0, %v3113
        %v3115 = vpop.f32.mrf.mxu0
        %v3116 = vadd.f32 0.0, %v3115
        %3117 = vmatmul.bf16.gmra.mxu0 %v3089
        %v3118 = vpop.f32.mrf.mxu0
        %v3119 = vadd.f32 0.0, %v3118
        %v3120 = vpop.f32.mrf.mxu0
        %v3121 = vadd.f32 0.0, %v3120
        %3122 = vdwg.mxu0
        %v3123 = vadd.f32 %v3062, %v3104
        %v3124 = vadd.f32 %v3063, %v3106
        %v3125 = vadd.f32 %v3064, %v3109
        %v3126 = vadd.f32 %v3065, %v3111
        %v3127 = vadd.f32 %v3066, %v3114
        %v3128 = vadd.f32 %v3067, %v3116
        %v3129 = vadd.f32 %v3068, %v3119
        %v3130 = vadd.f32 %v3069, %v3121
        %v3132 = vrot.slane %v2465, 5
        %v3133 = vrot.slane %v3132, 4
        %v3134 = vrot.slane %v2466, 5
        %v3135 = vsel %vm1252, %v3133, %v3134
        %s3136 = scalar_lea.vmem %s3, 52
        %v3137 = vld [vmem:[%s3136] sm:$0x3]
        %v3138 = vunpack.c.l.b16 %v3135
        %v3139 = vpack.c.b16 %v3138, %v2965
        %v3141 = vsel %vm1132, %v3139, 0
        %v3144 = vsel %vm1145, %v3137, 0
        %3146 = vmatpush.bf16.msra.mxu0 0
        %3147 = vmatpush.bf16.msra.mxu0 0
        %3148 = vmatpush.bf16.msra.mxu0 0
        %3149 = vmatpush.bf16.msra.mxu0 0
        %3150 = vmatpush.bf16.msra.mxu0 0
        %3151 = vmatpush.bf16.msra.mxu0 0
        %3152 = vmatpush.bf16.msra.mxu0 0
        %3153 = vmatpush.bf16.msra.mxu0 %v3144
        %3154 = vmatmul.bf16.gmra.mxu0 %v2777
        %v3155 = vpop.f32.mrf.mxu0
        %v3156 = vadd.f32 0.0, %v3155
        %v3157 = vpop.f32.mrf.mxu0
        %v3158 = vadd.f32 0.0, %v3157
        %3159 = vmatmul.bf16.gmra.mxu0 %v2780
        %v3160 = vpop.f32.mrf.mxu0
        %v3161 = vadd.f32 0.0, %v3160
        %v3162 = vpop.f32.mrf.mxu0
        %v3163 = vadd.f32 0.0, %v3162
        %3164 = vmatmul.bf16.gmra.mxu0 %v2783
        %v3165 = vpop.f32.mrf.mxu0
        %v3166 = vadd.f32 0.0, %v3165
        %v3167 = vpop.f32.mrf.mxu0
        %v3168 = vadd.f32 0.0, %v3167
        %3169 = vmatmul.bf16.gmra.mxu0 %v3141
        %v3170 = vpop.f32.mrf.mxu0
        %v3171 = vadd.f32 0.0, %v3170
        %v3172 = vpop.f32.mrf.mxu0
        %v3173 = vadd.f32 0.0, %v3172
        %3174 = vdwg.mxu0
        %v3175 = vadd.f32 %v3123, %v3156
        %v3176 = vadd.f32 %v3124, %v3158
        %v3177 = vadd.f32 %v3125, %v3161
        %v3178 = vadd.f32 %v3126, %v3163
        %v3179 = vadd.f32 %v3127, %v3166
        %v3180 = vadd.f32 %v3128, %v3168
        %v3181 = vadd.f32 %v3129, %v3171
        %v3182 = vadd.f32 %v3130, %v3173
        %v3183 = vld [vmem:[%s4] sm:$0x1]
        %v3185 = vperm.slane %v3183, 0
        %v3187 = vadd.f32 %v3175, %v3185
        %v3188 = vadd.f32 %v3176, %v3185
        %v3189 = vadd.f32 %v3177, %v3185
        %v3190 = vadd.f32 %v3178, %v3185
        %v3191 = vadd.f32 %v3179, %v3185
        %v3192 = vadd.f32 %v3180, %v3185
        %v3193 = vadd.f32 %v3181, %v3185
        %v3194 = vadd.f32 %v3182, %v3185
        %v3195 = vmax.f32 %v3187, 0.0
        %v3196 = vmax.f32 %v3188, 0.0
        %v3197 = vmax.f32 %v3189, 0.0
        %v3198 = vmax.f32 %v3190, 0.0
        %v3199 = vmax.f32 %v3191, 0.0
        %v3200 = vmax.f32 %v3192, 0.0
        %v3201 = vmax.f32 %v3193, 0.0
        %v3202 = vmax.f32 %v3194, 0.0
        %v3203 = vpack.c.bf16 %v3196, %v3195
        %v3204 = vpack.c.bf16 %v3198, %v3197
        %v3205 = vpack.c.bf16 %v3200, %v3199
        %v3206 = vpack.c.bf16 %v3202, %v3201
        %v3207 = vld [vmem:[%s5] sm:$0x3]
        %v3208 = vld [vmem:[%s6] sm:$0x1]
        %v3210 = vperm.slane %v3208, 0
        %v3213 = vsel %vm1132, %v3203, 0
        %v3216 = vsel %vm1132, %v3204, 0
        %v3219 = vsel %vm1132, %v3205, 0
        %v3222 = vsel %vm1132, %v3206, 0
        %v3225 = vsel %vm1145, %v3207, 0
        %3227 = vmatpush.bf16.msra.mxu0 0
        %3228 = vmatpush.bf16.msra.mxu0 0
        %3229 = vmatpush.bf16.msra.mxu0 0
        %3230 = vmatpush.bf16.msra.mxu0 0
        %3231 = vmatpush.bf16.msra.mxu0 0
        %3232 = vmatpush.bf16.msra.mxu0 0
        %3233 = vmatpush.bf16.msra.mxu0 0
        %3234 = vmatpush.bf16.msra.mxu0 %v3225
        %3235 = vmatmul.bf16.gmra.mxu0 %v3213
        %v3236 = vpop.f32.mrf.mxu0
        %v3237 = vadd.f32 %v3210, %v3236
        %v3238 = vpop.f32.mrf.mxu0
        %v3239 = vadd.f32 %v3210, %v3238
        %3240 = vmatmul.bf16.gmra.mxu0 %v3216
        %v3241 = vpop.f32.mrf.mxu0
        %v3242 = vadd.f32 %v3210, %v3241
        %v3243 = vpop.f32.mrf.mxu0
        %v3244 = vadd.f32 %v3210, %v3243
        %3245 = vmatmul.bf16.gmra.mxu0 %v3219
        %v3246 = vpop.f32.mrf.mxu0
        %v3247 = vadd.f32 %v3210, %v3246
        %v3248 = vpop.f32.mrf.mxu0
        %v3249 = vadd.f32 %v3210, %v3248
        %3250 = vmatmul.bf16.gmra.mxu0 %v3222
        %v3251 = vpop.f32.mrf.mxu0
        %v3252 = vadd.f32 %v3210, %v3251
        %v3253 = vpop.f32.mrf.mxu0
        %v3254 = vadd.f32 %v3210, %v3253
        %3255 = vdwg.mxu0
        %v3256 = vld [vmem:[%s382] sm:$0xff]
        %v3257 = vld [vmem:[%s382 + $0x8] sm:$0xff]
        %v3258 = vld [vmem:[%s382 + $0x10] sm:$0xff]
        %v3259 = vld [vmem:[%s382 + $0x18] sm:$0xff]
        %v3260 = vld [vmem:[%s382 + $0x20] sm:$0xff]
        %v3261 = vld [vmem:[%s382 + $0x28] sm:$0xff]
        %v3262 = vld [vmem:[%s382 + $0x30] sm:$0xff]
        %v3263 = vld [vmem:[%s382 + $0x38] sm:$0xff]
        %v3264 = vadd.f32 %v3237, %v3256
        %v3265 = vadd.f32 %v3239, %v3257
        %v3266 = vadd.f32 %v3242, %v3258
        %v3267 = vadd.f32 %v3244, %v3259
        %v3268 = vadd.f32 %v3247, %v3260
        %v3269 = vadd.f32 %v3249, %v3261
        %v3270 = vadd.f32 %v3252, %v3262
        %v3271 = vadd.f32 %v3254, %v3263
        %v3272 = vmax.f32 %v3264, 0.0
        %v3273 = vmax.f32 %v3265, 0.0
        %v3274 = vmax.f32 %v3266, 0.0
        %v3275 = vmax.f32 %v3267, 0.0
        %v3276 = vmax.f32 %v3268, 0.0
        %v3277 = vmax.f32 %v3269, 0.0
        %v3278 = vmax.f32 %v3270, 0.0
        %v3279 = vmax.f32 %v3271, 0.0
        %vm3280 = vcmask 130048
        %3281 = vst.msk [vmem:[%s448] sm:$0xff] %vm3280, %v3272
        %3282 = vst.msk [vmem:[%s448 + $0x8] sm:$0xff] %vm3280, %v3273
        %3283 = vst.msk [vmem:[%s448 + $0x10] sm:$0xff] %vm3280, %v3274
        %3284 = vst.msk [vmem:[%s448 + $0x18] sm:$0xff] %vm3280, %v3275
        %3285 = vst.msk [vmem:[%s448 + $0x20] sm:$0xff] %vm3280, %v3276
        %3286 = vst.msk [vmem:[%s448 + $0x28] sm:$0xff] %vm3280, %v3277
        %3287 = vst.msk [vmem:[%s448 + $0x30] sm:$0xff] %vm3280, %v3278
        %3288 = vst.msk [vmem:[%s448 + $0x38] sm:$0xff] %vm3280, %v3279
        %s3289 = sand.u32 %s255, 1
        %s3290 = scalar_lea.sflag [#allocation5], %s3289
        %s3291 = sand.u32 %s255, 1
        %s3292 = smul.addr %s3291, 64
        %s3293 = scalar_lea.vmem [#allocation6], %s3292
        // Predicated region
        $region65: #{bottleneck_forward.3} parent=51 // pred_check
          %p3294 = pneg %p265
        $region66: #{bottleneck_forward.3} parent=51 // pred_check_branch
          %3296 = sbr.rel (%p3294) target = $region68
        $region67: #{bottleneck_forward.3} parent=51 // pred_region
          %3298 = vsyncadd %s3290, 0
          %s3299 = smul.addr %s30, 8
          %s3300 = smul.addr %s29, 64
          %s3301 = sadd.s32 %s3299, %s3300
          %s3302 = smul.addr %s3301, 8
          %s3303 = scalar_lea.hbm %s8, %s3302
          %s3304 = sshll.u32 %s3293, 4
          %s3305 = int_to_ptr.vmem [resolvable:$true] %s3304
          %s3306 = sshll.u32 %s3303, 4
          %s3307 = int_to_ptr.hbm [resolvable:$true] %s3306
          %3312 = dma.vmem_to_hbm [thread:$0]  %s3305, 1024, %s3307, %s3290, 128, 128, 8
        $region68: #{bottleneck_forward.3} parent=51 // pred_fallthru
          _
      $region52: #{bottleneck_forward.3} parent=5 // pred_fallthru
        _
      %p3313 = scmp.le.s32.totalorder 2, %s20
      // Predicated region
      $region69: #{bottleneck_forward.3} parent=5 // pred_check
        %p3314 = pneg %p3313
      $region70: #{bottleneck_forward.3} parent=5 // pred_check_branch
        %3316 = sbr.rel (%p3314) target = $region72
      $region71: #{bottleneck_forward.3} parent=5 // pred_region
        %s3317 = ssub.s32 %s20, 2
        // Predicated region
        $region73: #{bottleneck_forward.3} parent=71 // pred_check
          %p3318 = pneg %p271
        $region74: #{bottleneck_forward.3} parent=71 // pred_check_branch
          %3320 = sbr.rel (%p3318) target = $region76
        $region75: #{bottleneck_forward.3} parent=71 // pred_region
          %s3321 = sand.u32 %s256, 1
          %s3322 = scalar_lea.sflag [#allocation5], %s3321
          %s3323 = sand.u32 %s256, 1
          %s3324 = smul.addr %s3323, 64
          %s3325 = scalar_lea.vmem [#allocation6], %s3324
          %3327 = dma.done %s3322, 1024
        $region76: #{bottleneck_forward.3} parent=71 // pred_fallthru
          _
      $region72: #{bottleneck_forward.3} parent=5 // pred_fallthru
        _
    $region6: #{bottleneck_forward.3} parent=1 // loop_footer
      %s24 = sadd.s32 1, %s20
    $region7: #{bottleneck_forward.3} parent=1 // loop_footer_branch
      %19 = sbr.rel target = $region3
    $region8: #{bottleneck_forward.3} parent=1 // loop_exit
      _
    %3328 = vsyncpa [#allocation4], 1
    %s3329 = scalar_lea.sflag [#allocation4], 1
    %3330 = vsyncpa %s3329, 1
    %3331 = vsyncpa [#allocation5], 1
    %s3332 = scalar_lea.sflag [#allocation5], 1
    %3333 = vsyncpa %s3332, 1

</llo_original>
